<compile_context>
chip_gen: v7x
topology: tpu7x:2x2x1
jax: 0.10.0
libtpu: 0.0.40
codegen_flags: <defaults>
</compile_context>

<pallas_src>
import jax
import jax.numpy as jnp
from jax.experimental import pallas as pl
from jax.experimental.pallas import tpu as pltpu

_BALL_SCALE = 0.08  # keeps synthetic encoder rows comfortably inside the Poincare ball


def _ceil_to(v, m):
    return ((v + m - 1) // m) * m


def _detect_num_tensorcores():
    """Best-effort TensorCore count (v7x = 2, v5e/v6e = 1). Falls back to 1 — safe everywhere."""
    try:
        info = pltpu.get_tpu_info()
        for attr in ("num_cores", "tensorcore_count", "num_tensorcores", "cores_per_chip"):
            v = getattr(info, attr, None)
            if v:
                return int(v)
    except Exception:
        pass
    try:
        return max(1, int(getattr(jax.devices()[0], "num_cores", 1)))
    except Exception:
        return 1


# ----------------------------- fused per-tile math ------------------------------------------------

def _forward_math(x, we, be, wa, ba, gamma, beta):
    """Synthetic encoder + EncoderAdapterLayer (hyperbolic path).

    x arrives in its stored dtype (f32) and is cast to the weight dtype for the MXU; all
    elementwise / transcendental math is f32.  Returns (h_raw, adapted): h_raw is the encoder
    output *before* the _BALL_SCALE factor (the scale is folded into the per-row scalar so the
    adapted-only kernel never pays a full-tile multiply for it).
    """
    # --- synthetic encoder pre-scale: tanh(x @ We + be) ---
    h_raw = jnp.tanh(jnp.dot(x.astype(we.dtype), we, preferred_element_type=jnp.float32) + be)

    # --- EncoderAdapterLayer hyperbolic -> Euclidean (exact PyTorch semantics) ---
    # h = s*h_raw ; norm = ||h|| = s*||h_raw|| ; mask = (norm > 1e-10)
    # euclidean = h * arctanh(clamp(norm, 0.99))/norm * mask = h_raw * (s * factor * mask)
    norm = _BALL_SCALE * jnp.sqrt(jnp.sum(h_raw * h_raw, axis=-1, keepdims=True))
    mask = (norm > 1e-10).astype(jnp.float32)
    norm = norm * mask + (1.0 - mask) * 1e-10
    clamped = jnp.minimum(norm, 0.99)
    # arctanh(v) = 0.5 * log((1+v)/(1-v))   (EUP log)
    atanh = 0.5 * jnp.log((1.0 + clamped) / (1.0 - clamped))
    row_scale = (_BALL_SCALE * mask) * (atanh * pl.reciprocal(norm, approx=False))  # [tile, 1]
    euclidean = h_raw * row_scale

    # --- adapter: Linear(D, D) -> LayerNorm(D, eps=1e-5) -> ReLU ---
    lin = jnp.dot(euclidean.astype(wa.dtype), wa, preferred_element_type=jnp.float32) + ba
    mean = jnp.mean(lin, axis=-1, keepdims=True)
    centered = lin - mean
    var = jnp.mean(centered * centered, axis=-1, keepdims=True)  # biased var == nn.LayerNorm
    normed = centered * jax.lax.rsqrt(var + 1e-5)                # EUP rsqrt instead of sqrt+div
    out = jnp.maximum(normed * gamma + beta, 0.0)
    return h_raw, out


def _kernel_adapted(x_ref, we_ref, be_ref, wa_ref, ba_ref, g_ref, b_ref, adapt_ref):
    _, adapted = _forward_math(x_ref[...], we_ref[...], be_ref[...], wa_ref[...],
                               ba_ref[...], g_ref[...], b_ref[...])
    adapt_ref[...] = adapted.astype(adapt_ref.dtype)


def _kernel_both(x_ref, we_ref, be_ref, wa_ref, ba_ref, g_ref, b_ref, adapt_ref, emb_ref):
    h_raw, adapted = _forward_math(x_ref[...], we_ref[...], be_ref[...], wa_ref[...],
                                   ba_ref[...], g_ref[...], b_ref[...])
    adapt_ref[...] = adapted.astype(adapt_ref.dtype)
    emb_ref[...] = (_BALL_SCALE * h_raw).astype(emb_ref.dtype)


# ----------------------------- wrapper --------------------------------------------------------------

def unified_forward(x, params, *, mode="generate", tile_n=1024,
                    out_dtype=jnp.bfloat16, matmul_dtype=jnp.bfloat16,
                    return_encoder_embeddings=False, num_tensorcores=None,
                    weight_buffer_count=None):
    """Pallas-backed forward of UnifiedCitationNetworkModel. Mirrors the PyTorch `results` dict."""
    N, F = x.shape
    D = params["we"].shape[1]
    if num_tensorcores is None:
        num_tensorcores = _detect_num_tensorcores()

    # Node tile: one big tile when the whole graph fits (single-TC chips), otherwise tile_n rows
    # rounded to 16 sublanes (bf16 packing).  Only on multi-TC chips (v7x) do we cap the tile so
    # the 'parallel' grid keeps >= num_tensorcores steps.  N need not divide the tile: the last
    # grid step is ragged (masked writeback), so no wrapper-side pad / slice passes over HBM.
    SUB = 16
    if N <= tile_n:
        tile = N                                      # block == full array: always legal
    else:
        tile = max(SUB, _ceil_to(min(int(tile_n), N), SUB))
    if num_tensorcores >= 2 and N > SUB:
        tile = min(tile, max(SUB, _ceil_to(-(-N // num_tensorcores), SUB)))
    grid = (pl.cdiv(N, tile),)

    we = params["we"].astype(matmul_dtype)
    wa = params["wa"].astype(matmul_dtype)
    be = params["be"].astype(jnp.float32)
    ba = params["ba"].astype(jnp.float32)
    gamma = params["gamma"].astype(jnp.float32)
    beta = params["beta"].astype(jnp.float32)

    def const_spec(shape):
        # Grid-invariant inputs. On v7x (64 MiB VMEM) with large D/F, pass weight_buffer_count=1
        # to halve the resident weight footprint (no perf cost: block index never changes).
        if weight_buffer_count is None:
            return pl.BlockSpec(shape, lambda i: (0, 0))
        return pl.BlockSpec(shape, lambda i: (0, 0),
                            pipeline_mode=pl.Buffered(weight_buffer_count))

    in_specs = [
        pl.BlockSpec((tile, F), lambda i: (i, 0)),   # x (node tile, native dtype; cast in-kernel)
        const_spec((F, D)),                          # We
        const_spec((1, D)),                          # be
        const_spec((D, D)),                          # Wa
        const_spec((1, D)),                          # ba
        const_spec((1, D)),                          # gamma
        const_spec((1, D)),                          # beta
    ]

    n_out = 2 if return_encoder_embeddings else 1
    x_bytes = jnp.dtype(x.dtype).itemsize
    w_bytes = jnp.dtype(matmul_dtype).itemsize
    o_bytes = jnp.dtype(out_dtype).itemsize
    cost = pl.CostEstimate(
        flops=2 * N * (F * D + D * D),
        transcendentals=N * D + 4 * N,   # tanh per element; log/recip/rsqrt per row
        bytes_accessed=(N * F * x_bytes + (F * D + D * D) * w_bytes
                        + 4 * D * 4 + n_out * N * D * o_bytes),
    )
    compiler_params = pltpu.CompilerParams(
        dimension_semantics=("parallel",),
        vmem_limit_bytes=32 * 1024 * 1024,
    )

    if return_encoder_embeddings:
        kernel = _kernel_both
        out_shape = (jax.ShapeDtypeStruct((N, D), out_dtype),
                     jax.ShapeDtypeStruct((N, D), out_dtype))
        out_specs = (pl.BlockSpec((tile, D), lambda i: (i, 0)),
                     pl.BlockSpec((tile, D), lambda i: (i, 0)))
    else:
        kernel = _kernel_adapted
        out_shape = jax.ShapeDtypeStruct((N, D), out_dtype)
        out_specs = pl.BlockSpec((tile, D), lambda i: (i, 0))

    outs = pl.pallas_call(
        kernel,
        out_shape=out_shape,
        grid_spec=pltpu.PrefetchScalarGridSpec(
            num_scalar_prefetch=0,
            grid=grid,
            in_specs=in_specs,
            out_specs=out_specs,
        ),
        compiler_params=compiler_params,
        cost_estimate=cost,
    )(x, we, be, wa, ba, gamma, beta)

    if return_encoder_embeddings:
        adapted, emb = outs
        results = {"embeddings": adapted, "encoder_embeddings": emb}
    else:
        results = {"embeddings": outs}

    if mode in ("full", "predict"):
        # TODO(synk): AttentionPredictor class not provided in the module source; no edge_scores.
        pass

    if mode in ("full", "generate"):
        # EnhancedCVAEGenerator is an explicit placeholder in the source (returns zeros); mirror it
        # in plain JAX — there is no real compute to lower.
        latent_dim = params["latent_dim"]
        results["generated_features"] = jnp.zeros((N, D), jnp.float32)
        results["mu"] = jnp.zeros((N, latent_dim), jnp.float32)
        results["logvar"] = jnp.zeros((N, latent_dim), jnp.float32)
        results["conditions"] = {}  # graph carries no node_timestamps / node_topics here

    return results


# ----------------------------- pure-JAX reference (same dtype plan) -------------------------------

def _reference_forward(x, params, matmul_dtype=jnp.bfloat16):
    we = params["we"].astype(matmul_dtype)
    wa = params["wa"].astype(matmul_dtype)
    h = jnp.tanh(jnp.dot(x.astype(matmul_dtype), we, preferred_element_type=jnp.float32)
                 + params["be"])
    h = _BALL_SCALE * h
    norm = jnp.sqrt(jnp.sum(h * h, axis=-1, keepdims=True))
    mask = (norm > 1e-10).astype(jnp.float32)
    norm = norm * mask + (1.0 - mask) * 1e-10
    atanh = jnp.arctanh(jnp.minimum(norm, 0.99))
    euclidean = h * (atanh / norm) * mask
    lin = jnp.dot(euclidean.astype(matmul_dtype), wa, preferred_element_type=jnp.float32) \
        + params["ba"]
    mean = jnp.mean(lin, axis=-1, keepdims=True)
    var = jnp.mean((lin - mean) ** 2, axis=-1, keepdims=True)
    out = (lin - mean) / jnp.sqrt(var + 1e-5) * params["gamma"] + params["beta"]
    return jnp.maximum(out, 0.0)


# ----------------------------- deterministic parameter init ---------------------------------------

def init_params(key, feat_dim, embed_dim, latent_dim=32):
    k = jax.random.split(key, 4)
    scale_e = 1.0 / jnp.sqrt(feat_dim)
    scale_a = 1.0 / jnp.sqrt(embed_dim)
    return {
        "we": jax.random.normal(k[0], (feat_dim, embed_dim), jnp.float32) * scale_e,
        "be": jax.random.normal(k[1], (1, embed_dim), jnp.float32) * 0.01,
        "wa": jax.random.normal(k[2], (embed_dim, embed_dim), jnp.float32) * scale_a,
        "ba": jax.random.normal(k[3], (1, embed_dim), jnp.float32) * 0.01,
        "gamma": jnp.ones((1, embed_dim), jnp.float32),   # nn.LayerNorm default init
        "beta": jnp.zeros((1, embed_dim), jnp.float32),
        "latent_dim": latent_dim,
    }


if __name__ == "__main__":
    key = jax.random.PRNGKey(0)
    kx, kp, kx2 = jax.random.split(key, 3)

    F, D = 128, 128  # feature dim, embed_dim
    params = init_params(kp, F, D)

    # --- test 1: default config (bf16 writeback, large single tile) ---
    N = 512
    x = jax.random.normal(kx, (N, F), jnp.float32)
    out = unified_forward(x, params, mode="full")
    jax.block_until_ready(out["embeddings"])
    assert out["embeddings"].shape == (N, D)
    assert out["embeddings"].dtype == jnp.bfloat16
    assert bool(jnp.all(out["embeddings"] >= 0.0))
    ref = _reference_forward(x, params)
    err = float(jnp.max(jnp.abs(out["embeddings"].astype(jnp.float32) - ref)))
    assert err < 1e-1, f"bf16-out mismatch vs reference: {err}"

    # --- test 2: multi-step grid + ragged last tile (N not a tile multiple), f32 writeback ---
    N2 = 1000
    x2 = jax.random.normal(kx2, (N2, F), jnp.float32)
    out2 = unified_forward(x2, params, mode="encode", tile_n=256, out_dtype=jnp.float32)
    jax.block_until_ready(out2["embeddings"])
    assert out2["embeddings"].shape == (N2, D)
    assert bool(jnp.all(out2["embeddings"] >= 0.0))
    ref2 = _reference_forward(x2, params)
    err2 = float(jnp.max(jnp.abs(out2["embeddings"] - ref2)))
    assert err2 < 5e-2, f"f32-out mismatch vs reference: {err2}"

    # --- test 3: two-output variant (encoder embeddings requested) ---
    out3 = unified_forward(x, params, mode="encode", return_encoder_embeddings=True)
    jax.block_until_ready(out3["encoder_embeddings"])
    assert out3["encoder_embeddings"].shape == (N, D)
    assert out3["embeddings"].shape == (N, D)

    print("KERNEL_OK")
</pallas_src>

<mosaic_0001>
module attributes {stable_mosaic.version = 11 : i64} {
  func.func @_kernel_adapted(%arg0: i32, %arg1: memref<512x128xf32, #tpu.memory_space<vmem>>, %arg2: memref<128x128xbf16, #tpu.memory_space<vmem>>, %arg3: memref<1x128xf32, #tpu.memory_space<vmem>>, %arg4: memref<128x128xbf16, #tpu.memory_space<vmem>>, %arg5: memref<1x128xf32, #tpu.memory_space<vmem>>, %arg6: memref<1x128xf32, #tpu.memory_space<vmem>>, %arg7: memref<1x128xf32, #tpu.memory_space<vmem>>, %arg8: memref<512x128xbf16, #tpu.memory_space<vmem>>) attributes {dimension_semantics = [#tpu.dimension_semantics<parallel>], iteration_bounds = array<i64: 1>, scalar_prefetch = 0 : i64, scratch_operands = 0 : i64, tpu.core_type = #tpu.core_type<tc>, window_params = [{transform_indices = @transform_0, window_bounds = array<i64: 512, 128>}, {pipeline_mode = #tpu.pipeline_mode<synchronous>, transform_indices = @transform_1, window_bounds = array<i64: 128, 128>}, {pipeline_mode = #tpu.pipeline_mode<synchronous>, transform_indices = @transform_2, window_bounds = array<i64: 1, 128>}, {pipeline_mode = #tpu.pipeline_mode<synchronous>, transform_indices = @transform_3, window_bounds = array<i64: 128, 128>}, {pipeline_mode = #tpu.pipeline_mode<synchronous>, transform_indices = @transform_4, window_bounds = array<i64: 1, 128>}, {pipeline_mode = #tpu.pipeline_mode<synchronous>, transform_indices = @transform_5, window_bounds = array<i64: 1, 128>}, {pipeline_mode = #tpu.pipeline_mode<synchronous>, transform_indices = @transform_6, window_bounds = array<i64: 1, 128>}, {transform_indices = @transform_7, window_bounds = array<i64: 512, 128>}]} {
    %c0 = arith.constant 0 : index
    %c0_0 = arith.constant 0 : index
    %0 = vector.load %arg1[%c0, %c0_0] : memref<512x128xf32, #tpu.memory_space<vmem>>, vector<512x128xf32>
    %c0_1 = arith.constant 0 : index
    %c0_2 = arith.constant 0 : index
    %1 = vector.load %arg2[%c0_1, %c0_2] : memref<128x128xbf16, #tpu.memory_space<vmem>>, vector<128x128xbf16>
    %c0_3 = arith.constant 0 : index
    %c0_4 = arith.constant 0 : index
    %2 = vector.load %arg3[%c0_3, %c0_4] : memref<1x128xf32, #tpu.memory_space<vmem>>, vector<1x128xf32>
    %c0_5 = arith.constant 0 : index
    %c0_6 = arith.constant 0 : index
    %3 = vector.load %arg4[%c0_5, %c0_6] : memref<128x128xbf16, #tpu.memory_space<vmem>>, vector<128x128xbf16>
    %c0_7 = arith.constant 0 : index
    %c0_8 = arith.constant 0 : index
    %4 = vector.load %arg5[%c0_7, %c0_8] : memref<1x128xf32, #tpu.memory_space<vmem>>, vector<1x128xf32>
    %c0_9 = arith.constant 0 : index
    %c0_10 = arith.constant 0 : index
    %5 = vector.load %arg6[%c0_9, %c0_10] : memref<1x128xf32, #tpu.memory_space<vmem>>, vector<1x128xf32>
    %c0_11 = arith.constant 0 : index
    %c0_12 = arith.constant 0 : index
    %6 = vector.load %arg7[%c0_11, %c0_12] : memref<1x128xf32, #tpu.memory_space<vmem>>, vector<1x128xf32>
    %7 = arith.truncf %0 : vector<512x128xf32> to vector<512x128xbf16>
    %cst = arith.constant dense<0.000000e+00> : vector<512x128xf32>
    %8 = tpu.matmul %7, %1, %cst {dimension_numbers = #tpu.dot_dimension_numbers<[1], [0], [0], [1], [0, 0, 1, 1], [], []>} : vector<512x128xbf16>, vector<128x128xbf16>, vector<512x128xf32> -> vector<512x128xf32>
    %9 = vector.broadcast %2 : vector<1x128xf32> to vector<512x128xf32>
    %10 = arith.addf %8, %9 : vector<512x128xf32>
    %11 = math.tanh %10 : vector<512x128xf32>
    %12 = arith.mulf %11, %11 : vector<512x128xf32>
    %cst_13 = arith.constant dense<0.000000e+00> : vector<512xf32>
    %13 = vector.multi_reduction <add>, %12, %cst_13 [1] : vector<512x128xf32> to vector<512xf32>
    %14 = vector.shape_cast %13 : vector<512xf32> to vector<512x1xf32>
    %15 = math.sqrt %14 : vector<512x1xf32>
    %cst_14 = arith.constant 8.000000e-02 : f32
    %16 = vector.broadcast %cst_14 : f32 to vector<512x1xf32>
    %17 = arith.mulf %16, %15 : vector<512x1xf32>
    %cst_15 = arith.constant 1.000000e-10 : f32
    %18 = vector.broadcast %cst_15 : f32 to vector<512x1xf32>
    %19 = arith.cmpf ogt, %17, %18 : vector<512x1xf32>
    %20 = arith.extui %19 : vector<512x1xi1> to vector<512x1xi32>
    %21 = arith.sitofp %20 : vector<512x1xi32> to vector<512x1xf32>
    %22 = arith.mulf %17, %21 : vector<512x1xf32>
    %cst_16 = arith.constant 1.000000e+00 : f32
    %23 = vector.broadcast %cst_16 : f32 to vector<512x1xf32>
    %24 = arith.subf %23, %21 : vector<512x1xf32>
    %cst_17 = arith.constant 1.000000e-10 : f32
    %25 = vector.broadcast %cst_17 : f32 to vector<512x1xf32>
    %26 = arith.mulf %24, %25 : vector<512x1xf32>
    %27 = arith.addf %22, %26 : vector<512x1xf32>
    %cst_18 = arith.constant 9.900000e-01 : f32
    %28 = vector.broadcast %cst_18 : f32 to vector<512x1xf32>
    %29 = arith.minimumf %27, %28 : vector<512x1xf32>
    %cst_19 = arith.constant 1.000000e+00 : f32
    %30 = vector.broadcast %cst_19 : f32 to vector<512x1xf32>
    %31 = arith.addf %30, %29 : vector<512x1xf32>
    %cst_20 = arith.constant 1.000000e+00 : f32
    %32 = vector.broadcast %cst_20 : f32 to vector<512x1xf32>
    %33 = arith.subf %32, %29 : vector<512x1xf32>
    %34 = arith.divf %31, %33 : vector<512x1xf32>
    %35 = math.log %34 : vector<512x1xf32>
    %cst_21 = arith.constant 5.000000e-01 : f32
    %36 = vector.broadcast %cst_21 : f32 to vector<512x1xf32>
    %37 = arith.mulf %36, %35 : vector<512x1xf32>
    %cst_22 = arith.constant 8.000000e-02 : f32
    %38 = vector.broadcast %cst_22 : f32 to vector<512x1xf32>
    %39 = arith.mulf %38, %21 : vector<512x1xf32>
    %40 = tpu.reciprocal %27 : vector<512x1xf32> -> vector<512x1xf32>
    %41 = arith.mulf %37, %40 : vector<512x1xf32>
    %42 = arith.mulf %39, %41 : vector<512x1xf32>
    %43 = vector.broadcast %42 : vector<512x1xf32> to vector<512x128xf32>
    %44 = arith.mulf %11, %43 : vector<512x128xf32>
    %45 = arith.truncf %44 : vector<512x128xf32> to vector<512x128xbf16>
    %cst_23 = arith.constant dense<0.000000e+00> : vector<512x128xf32>
    %46 = tpu.matmul %45, %3, %cst_23 {dimension_numbers = #tpu.dot_dimension_numbers<[1], [0], [0], [1], [0, 0, 1, 1], [], []>} : vector<512x128xbf16>, vector<128x128xbf16>, vector<512x128xf32> -> vector<512x128xf32>
    %47 = vector.broadcast %4 : vector<1x128xf32> to vector<512x128xf32>
    %48 = arith.addf %46, %47 : vector<512x128xf32>
    %cst_24 = arith.constant dense<0.000000e+00> : vector<512xf32>
    %49 = vector.multi_reduction <add>, %48, %cst_24 [1] : vector<512x128xf32> to vector<512xf32>
    %50 = vector.shape_cast %49 : vector<512xf32> to vector<512x1xf32>
    %cst_25 = arith.constant 1.280000e+02 : f32
    %51 = vector.broadcast %cst_25 : f32 to vector<512x1xf32>
    %52 = arith.divf %50, %51 : vector<512x1xf32>
    %53 = vector.broadcast %52 : vector<512x1xf32> to vector<512x128xf32>
    %54 = arith.subf %48, %53 : vector<512x128xf32>
    %55 = arith.mulf %54, %54 : vector<512x128xf32>
    %cst_26 = arith.constant dense<0.000000e+00> : vector<512xf32>
    %56 = vector.multi_reduction <add>, %55, %cst_26 [1] : vector<512x128xf32> to vector<512xf32>
    %57 = vector.shape_cast %56 : vector<512xf32> to vector<512x1xf32>
    %cst_27 = arith.constant 1.280000e+02 : f32
    %58 = vector.broadcast %cst_27 : f32 to vector<512x1xf32>
    %59 = arith.divf %57, %58 : vector<512x1xf32>
    %cst_28 = arith.constant 9.99999974E-6 : f32
    %60 = vector.broadcast %cst_28 : f32 to vector<512x1xf32>
    %61 = arith.addf %59, %60 : vector<512x1xf32>
    %62 = math.rsqrt %61 : vector<512x1xf32>
    %63 = vector.broadcast %62 : vector<512x1xf32> to vector<512x128xf32>
    %64 = arith.mulf %54, %63 : vector<512x128xf32>
    %65 = vector.broadcast %5 : vector<1x128xf32> to vector<512x128xf32>
    %66 = arith.mulf %64, %65 : vector<512x128xf32>
    %67 = vector.broadcast %6 : vector<1x128xf32> to vector<512x128xf32>
    %68 = arith.addf %66, %67 : vector<512x128xf32>
    %cst_29 = arith.constant 0.000000e+00 : f32
    %69 = vector.broadcast %cst_29 : f32 to vector<512x128xf32>
    %70 = arith.maximumf %68, %69 : vector<512x128xf32>
    %71 = arith.truncf %70 : vector<512x128xf32> to vector<512x128xbf16>
    %c0_30 = arith.constant 0 : index
    %c0_31 = arith.constant 0 : index
    %72 = vector.load %arg8[%c0_30, %c0_31] : memref<512x128xbf16, #tpu.memory_space<vmem>>, vector<512x128xbf16>
    tpu.vector_store %arg8[%c0_30, %c0_31], %71 {strides = array<i32>} : memref<512x128xbf16, #tpu.memory_space<vmem>>, vector<512x128xbf16>,
    return
  }
  func.func @transform_0(%arg0: i32) -> (i32, i32) {
    %c0_i32 = arith.constant 0 : i32
    %c0_i32_0 = arith.constant 0 : i32
    return %arg0, %c0_i32 : i32, i32
  }
  func.func @transform_1(%arg0: i32) -> (i32, i32) {
    %c0_i32 = arith.constant 0 : i32
    %c0_i32_0 = arith.constant 0 : i32
    %c0_i32_1 = arith.constant 0 : i32
    return %c0_i32, %c0_i32_0 : i32, i32
  }
  func.func @transform_2(%arg0: i32) -> (i32, i32) {
    %c0_i32 = arith.constant 0 : i32
    %c0_i32_0 = arith.constant 0 : i32
    %c0_i32_1 = arith.constant 0 : i32
    return %c0_i32, %c0_i32_0 : i32, i32
  }
  func.func @transform_3(%arg0: i32) -> (i32, i32) {
    %c0_i32 = arith.constant 0 : i32
    %c0_i32_0 = arith.constant 0 : i32
    %c0_i32_1 = arith.constant 0 : i32
    return %c0_i32, %c0_i32_0 : i32, i32
  }
  func.func @transform_4(%arg0: i32) -> (i32, i32) {
    %c0_i32 = arith.constant 0 : i32
    %c0_i32_0 = arith.constant 0 : i32
    %c0_i32_1 = arith.constant 0 : i32
    return %c0_i32, %c0_i32_0 : i32, i32
  }
  func.func @transform_5(%arg0: i32) -> (i32, i32) {
    %c0_i32 = arith.constant 0 : i32
    %c0_i32_0 = arith.constant 0 : i32
    %c0_i32_1 = arith.constant 0 : i32
    return %c0_i32, %c0_i32_0 : i32, i32
  }
  func.func @transform_6(%arg0: i32) -> (i32, i32) {
    %c0_i32 = arith.constant 0 : i32
    %c0_i32_0 = arith.constant 0 : i32
    %c0_i32_1 = arith.constant 0 : i32
    return %c0_i32, %c0_i32_0 : i32, i32
  }
  func.func @transform_7(%arg0: i32) -> (i32, i32) {
    %c0_i32 = arith.constant 0 : i32
    %c0_i32_0 = arith.constant 0 : i32
    return %arg0, %c0_i32 : i32, i32
  }
}

</mosaic_0001>

<llo_original>
// kernel: tpu_custom_call.1
$region0: #{tpu_custom_call.1}
  #allocation0 [shape = 'u32[]', space=smem, size = 0x4, offset = 0x4, fixed_abs, tag = 'smem constant byte address 0x4 - core index']
  #allocation1 [shape = 'u32[144,128]{1,0:T(1,128)}', space=vmem, size = 0x12000, scoped, tag = 'internal scratch']
  %s0 = inlined_call_operand.hbm [shape: f32[512,128], index: 0, kind: input, shape index: {}]
  %s1 = inlined_call_operand.hbm [shape: bf16[128,128], index: 1, kind: input, shape index: {}]
  %s2 = inlined_call_operand.vmem [shape: f32[1,128], index: 2, kind: input, shape index: {}]
  %s3 = inlined_call_operand.hbm [shape: bf16[128,128], index: 3, kind: input, shape index: {}]
  %s4 = inlined_call_operand.vmem [shape: f32[1,128], index: 4, kind: input, shape index: {}]
  %s5 = inlined_call_operand.vmem [shape: f32[1,128], index: 5, kind: input, shape index: {}]
  %s6 = inlined_call_operand.vmem [shape: f32[1,128], index: 6, kind: input, shape index: {}]
  %s7 = inlined_call_operand.hbm [shape: bf16[512,128], index: 7, kind: output, shape index: {}]
  %s8 = sld [smem:[#allocation0]]
  $region50: #{tpu_custom_call.1} parent=0
    _
  %s10 = ssub.s32 1, %s8
  %s11 = scalar_select 0, %s10, %s8
  $region1: #{tpu_custom_call.1} parent=0
    #allocation2 [shape = 'u8[262144]{0}', space=vmem, size = 0x40000, scoped, tag = 'input window, operand 0, single buffered']
    #allocation3 [shape = 's32[1]{0}', space=sflag, size = 0x4, scoped, tag = 'scoped memory for tpu_custom_call.1']
    #allocation4 [shape = 's32[1]{0}', space=sflag, size = 0x4, scoped, tag = 'scoped memory for tpu_custom_call.1']
    #allocation5 [shape = 'u8[32768]{0}', space=vmem, size = 0x8000, scoped, tag = 'input window, operand 1, single buffered']
    #allocation6 [shape = 's32[1]{0}', space=sflag, size = 0x4, scoped, tag = 'scoped memory for tpu_custom_call.1']
    #allocation7 [shape = 'u8[32768]{0}', space=vmem, size = 0x8000, scoped, tag = 'input window, operand 3, single buffered']
    #allocation8 [shape = 'u8[131072]{0}', space=vmem, size = 0x20000, scoped, tag = 'output window, operand 0, single buffered']
    %12 = vsyncpa [#allocation3], 0
    %13 = vsyncpa [#allocation6], 0
    %14 = vsyncpa [#allocation4], 0
    // Predicated region
    $region2: #{tpu_custom_call.1} parent=1 // pred_check
      _
    $region3: #{tpu_custom_call.1} parent=1 // pred_check_branch
      %16 = sbr.rel (0) target = $region5
    $region4: #{tpu_custom_call.1} parent=1 // pred_region
      %s18 = ssub.s32 8192, 8192
      %19 = vsyncadd [#allocation3], %s18
      %s20 = sshll.u32 [#allocation2], 4
      %s21 = int_to_ptr.vmem [resolvable:$true] %s20
      %26 = dma.hbm_to_vmem [thread:$0]  %s0, 8192, %s21, [#allocation3], 128, 128, 8
    $region5: #{tpu_custom_call.1} parent=1 // pred_fallthru
      _
    // Predicated region
    $region6: #{tpu_custom_call.1} parent=1 // pred_check
      _
    $region7: #{tpu_custom_call.1} parent=1 // pred_check_branch
      %28 = sbr.rel (0) target = $region9
    $region8: #{tpu_custom_call.1} parent=1 // pred_region
      %s30 = ssub.s32 1024, 1024
      %31 = vsyncadd [#allocation6], %s30
      %s32 = sshll.u32 [#allocation5], 4
      %s33 = int_to_ptr.vmem [resolvable:$true] %s32
      %38 = dma.hbm_to_vmem [thread:$0]  %s1, 1024, %s33, [#allocation6], 64, 64, 4
    $region9: #{tpu_custom_call.1} parent=1 // pred_fallthru
      _
    // Predicated region
    $region10: #{tpu_custom_call.1} parent=1 // pred_check
      _
    $region11: #{tpu_custom_call.1} parent=1 // pred_check_branch
      %40 = sbr.rel (0) target = $region13
    $region12: #{tpu_custom_call.1} parent=1 // pred_region
      _
    $region13: #{tpu_custom_call.1} parent=1 // pred_fallthru
      _
    // Predicated region
    $region14: #{tpu_custom_call.1} parent=1 // pred_check
      _
    $region15: #{tpu_custom_call.1} parent=1 // pred_check_branch
      %42 = sbr.rel (0) target = $region17
    $region16: #{tpu_custom_call.1} parent=1 // pred_region
      %s44 = ssub.s32 1024, 1024
      %45 = vsyncadd [#allocation6], %s44
      %s46 = sshll.u32 [#allocation7], 4
      %s47 = int_to_ptr.vmem [resolvable:$true] %s46
      %52 = dma.hbm_to_vmem [thread:$0]  %s3, 1024, %s47, [#allocation6], 64, 64, 4
    $region17: #{tpu_custom_call.1} parent=1 // pred_fallthru
      _
    // Predicated region
    $region18: #{tpu_custom_call.1} parent=1 // pred_check
      _
    $region19: #{tpu_custom_call.1} parent=1 // pred_check_branch
      %54 = sbr.rel (0) target = $region21
    $region20: #{tpu_custom_call.1} parent=1 // pred_region
      _
    $region21: #{tpu_custom_call.1} parent=1 // pred_fallthru
      _
    // Predicated region
    $region22: #{tpu_custom_call.1} parent=1 // pred_check
      _
    $region23: #{tpu_custom_call.1} parent=1 // pred_check_branch
      %56 = sbr.rel (0) target = $region25
    $region24: #{tpu_custom_call.1} parent=1 // pred_region
      _
    $region25: #{tpu_custom_call.1} parent=1 // pred_fallthru
      _
    // Predicated region
    $region26: #{tpu_custom_call.1} parent=1 // pred_check
      _
    $region27: #{tpu_custom_call.1} parent=1 // pred_check_branch
      %58 = sbr.rel (0) target = $region29
    $region28: #{tpu_custom_call.1} parent=1 // pred_region
      _
    $region29: #{tpu_custom_call.1} parent=1 // pred_fallthru
      _
    // Predicated region
    $region30: #{tpu_custom_call.1} parent=1 // pred_check
      _
    $region31: #{tpu_custom_call.1} parent=1 // pred_check_branch
      %60 = sbr.rel (0) target = $region33
    $region32: #{tpu_custom_call.1} parent=1 // pred_region
      %61 = dma.done [#allocation3], 8192
    $region33: #{tpu_custom_call.1} parent=1 // pred_fallthru
      _
    // Predicated region
    $region34: #{tpu_custom_call.1} parent=1 // pred_check
      _
    $region35: #{tpu_custom_call.1} parent=1 // pred_check_branch
      %63 = sbr.rel (0) target = $region37
    $region36: #{tpu_custom_call.1} parent=1 // pred_region
      %64 = dma.done [#allocation6], 1024
    $region37: #{tpu_custom_call.1} parent=1 // pred_fallthru
      _
    // Predicated region
    $region38: #{tpu_custom_call.1} parent=1 // pred_check
      _
    $region39: #{tpu_custom_call.1} parent=1 // pred_check_branch
      %66 = sbr.rel (0) target = $region41
    $region40: #{tpu_custom_call.1} parent=1 // pred_region
      %67 = dma.done [#allocation6], 1024
    $region41: #{tpu_custom_call.1} parent=1 // pred_fallthru
      _
    %v69 = vld [vmem:[#allocation2] sm:$0xff]
    %v70 = vld [vmem:[#allocation2 + $0x8] sm:$0xff]
    %v71 = vld [vmem:[#allocation2 + $0x10] sm:$0xff]
    %v72 = vld [vmem:[#allocation2 + $0x18] sm:$0xff]
    %v73 = vld [vmem:[#allocation2 + $0x20] sm:$0xff]
    %v74 = vld [vmem:[#allocation2 + $0x28] sm:$0xff]
    %v75 = vld [vmem:[#allocation2 + $0x30] sm:$0xff]
    %v76 = vld [vmem:[#allocation2 + $0x38] sm:$0xff]
    %v77 = vld [vmem:[#allocation2 + $0x40] sm:$0xff]
    %v78 = vld [vmem:[#allocation2 + $0x48] sm:$0xff]
    %v79 = vld [vmem:[#allocation2 + $0x50] sm:$0xff]
    %v80 = vld [vmem:[#allocation2 + $0x58] sm:$0xff]
    %v81 = vld [vmem:[#allocation2 + $0x60] sm:$0xff]
    %v82 = vld [vmem:[#allocation2 + $0x68] sm:$0xff]
    %v83 = vld [vmem:[#allocation2 + $0x70] sm:$0xff]
    %v84 = vld [vmem:[#allocation2 + $0x78] sm:$0xff]
    %v85 = vld [vmem:[#allocation2 + $0x80] sm:$0xff]
    %v86 = vld [vmem:[#allocation2 + $0x88] sm:$0xff]
    %v87 = vld [vmem:[#allocation2 + $0x90] sm:$0xff]
    %v88 = vld [vmem:[#allocation2 + $0x98] sm:$0xff]
    %v89 = vld [vmem:[#allocation2 + $0xa0] sm:$0xff]
    %v90 = vld [vmem:[#allocation2 + $0xa8] sm:$0xff]
    %v91 = vld [vmem:[#allocation2 + $0xb0] sm:$0xff]
    %v92 = vld [vmem:[#allocation2 + $0xb8] sm:$0xff]
    %v93 = vld [vmem:[#allocation2 + $0xc0] sm:$0xff]
    %v94 = vld [vmem:[#allocation2 + $0xc8] sm:$0xff]
    %v95 = vld [vmem:[#allocation2 + $0xd0] sm:$0xff]
    %v96 = vld [vmem:[#allocation2 + $0xd8] sm:$0xff]
    %v97 = vld [vmem:[#allocation2 + $0xe0] sm:$0xff]
    %v98 = vld [vmem:[#allocation2 + $0xe8] sm:$0xff]
    %v99 = vld [vmem:[#allocation2 + $0xf0] sm:$0xff]
    %v100 = vld [vmem:[#allocation2 + $0xf8] sm:$0xff]
    %v101 = vld [vmem:[#allocation2 + $0x100] sm:$0xff]
    %v102 = vld [vmem:[#allocation2 + $0x108] sm:$0xff]
    %v103 = vld [vmem:[#allocation2 + $0x110] sm:$0xff]
    %v104 = vld [vmem:[#allocation2 + $0x118] sm:$0xff]
    %v105 = vld [vmem:[#allocation2 + $0x120] sm:$0xff]
    %v106 = vld [vmem:[#allocation2 + $0x128] sm:$0xff]
    %v107 = vld [vmem:[#allocation2 + $0x130] sm:$0xff]
    %v108 = vld [vmem:[#allocation2 + $0x138] sm:$0xff]
    %v109 = vld [vmem:[#allocation2 + $0x140] sm:$0xff]
    %v110 = vld [vmem:[#allocation2 + $0x148] sm:$0xff]
    %v111 = vld [vmem:[#allocation2 + $0x150] sm:$0xff]
    %v112 = vld [vmem:[#allocation2 + $0x158] sm:$0xff]
    %v113 = vld [vmem:[#allocation2 + $0x160] sm:$0xff]
    %v114 = vld [vmem:[#allocation2 + $0x168] sm:$0xff]
    %v115 = vld [vmem:[#allocation2 + $0x170] sm:$0xff]
    %v116 = vld [vmem:[#allocation2 + $0x178] sm:$0xff]
    %v117 = vld [vmem:[#allocation2 + $0x180] sm:$0xff]
    %v118 = vld [vmem:[#allocation2 + $0x188] sm:$0xff]
    %v119 = vld [vmem:[#allocation2 + $0x190] sm:$0xff]
    %v120 = vld [vmem:[#allocation2 + $0x198] sm:$0xff]
    %v121 = vld [vmem:[#allocation2 + $0x1a0] sm:$0xff]
    %v122 = vld [vmem:[#allocation2 + $0x1a8] sm:$0xff]
    %v123 = vld [vmem:[#allocation2 + $0x1b0] sm:$0xff]
    %v124 = vld [vmem:[#allocation2 + $0x1b8] sm:$0xff]
    %v125 = vld [vmem:[#allocation2 + $0x1c0] sm:$0xff]
    %v126 = vld [vmem:[#allocation2 + $0x1c8] sm:$0xff]
    %v127 = vld [vmem:[#allocation2 + $0x1d0] sm:$0xff]
    %v128 = vld [vmem:[#allocation2 + $0x1d8] sm:$0xff]
    %v129 = vld [vmem:[#allocation2 + $0x1e0] sm:$0xff]
    %v130 = vld [vmem:[#allocation2 + $0x1e8] sm:$0xff]
    %v131 = vld [vmem:[#allocation2 + $0x1f0] sm:$0xff]
    %v132 = vld [vmem:[#allocation2 + $0x1f8] sm:$0xff]
    %v133 = vld [vmem:[#allocation5] sm:$0xf]
    %v134 = vld [vmem:[#allocation5 + $0x4] sm:$0xf]
    %v135 = vld [vmem:[#allocation5 + $0x8] sm:$0xf]
    %v136 = vld [vmem:[#allocation5 + $0xc] sm:$0xf]
    %v137 = vld [vmem:[#allocation5 + $0x10] sm:$0xf]
    %v138 = vld [vmem:[#allocation5 + $0x14] sm:$0xf]
    %v139 = vld [vmem:[#allocation5 + $0x18] sm:$0xf]
    %v140 = vld [vmem:[#allocation5 + $0x1c] sm:$0xf]
    %v141 = vld [vmem:[#allocation5 + $0x20] sm:$0xf]
    %v142 = vld [vmem:[#allocation5 + $0x24] sm:$0xf]
    %v143 = vld [vmem:[#allocation5 + $0x28] sm:$0xf]
    %v144 = vld [vmem:[#allocation5 + $0x2c] sm:$0xf]
    %v145 = vld [vmem:[#allocation5 + $0x30] sm:$0xf]
    %v146 = vld [vmem:[#allocation5 + $0x34] sm:$0xf]
    %v147 = vld [vmem:[#allocation5 + $0x38] sm:$0xf]
    %v148 = vld [vmem:[#allocation5 + $0x3c] sm:$0xf]
    %v149 = vld [vmem:[%s2] sm:$0x1]
    %v150 = vld [vmem:[#allocation7] sm:$0xf]
    %v151 = vld [vmem:[#allocation7 + $0x4] sm:$0xf]
    %v152 = vld [vmem:[#allocation7 + $0x8] sm:$0xf]
    %v153 = vld [vmem:[#allocation7 + $0xc] sm:$0xf]
    %v154 = vld [vmem:[#allocation7 + $0x10] sm:$0xf]
    %v155 = vld [vmem:[#allocation7 + $0x14] sm:$0xf]
    %v156 = vld [vmem:[#allocation7 + $0x18] sm:$0xf]
    %v157 = vld [vmem:[#allocation7 + $0x1c] sm:$0xf]
    %v158 = vld [vmem:[#allocation7 + $0x20] sm:$0xf]
    %v159 = vld [vmem:[#allocation7 + $0x24] sm:$0xf]
    %v160 = vld [vmem:[#allocation7 + $0x28] sm:$0xf]
    %v161 = vld [vmem:[#allocation7 + $0x2c] sm:$0xf]
    %v162 = vld [vmem:[#allocation7 + $0x30] sm:$0xf]
    %v163 = vld [vmem:[#allocation7 + $0x34] sm:$0xf]
    %v164 = vld [vmem:[#allocation7 + $0x38] sm:$0xf]
    %v165 = vld [vmem:[#allocation7 + $0x3c] sm:$0xf]
    %v166 = vld [vmem:[%s4] sm:$0x1]
    %v167 = vld [vmem:[%s5] sm:$0x1]
    %v168 = vld [vmem:[%s6] sm:$0x1]
    %v169 = vpack.c.bf16 %v70, %v69
    %v170 = vpack.c.bf16 %v72, %v71
    %v171 = vpack.c.bf16 %v74, %v73
    %v172 = vpack.c.bf16 %v76, %v75
    %v173 = vpack.c.bf16 %v78, %v77
    %v174 = vpack.c.bf16 %v80, %v79
    %v175 = vpack.c.bf16 %v82, %v81
    %v176 = vpack.c.bf16 %v84, %v83
    %v177 = vpack.c.bf16 %v86, %v85
    %v178 = vpack.c.bf16 %v88, %v87
    %v179 = vpack.c.bf16 %v90, %v89
    %v180 = vpack.c.bf16 %v92, %v91
    %v181 = vpack.c.bf16 %v94, %v93
    %v182 = vpack.c.bf16 %v96, %v95
    %v183 = vpack.c.bf16 %v98, %v97
    %v184 = vpack.c.bf16 %v100, %v99
    %v185 = vpack.c.bf16 %v102, %v101
    %v186 = vpack.c.bf16 %v104, %v103
    %v187 = vpack.c.bf16 %v106, %v105
    %v188 = vpack.c.bf16 %v108, %v107
    %v189 = vpack.c.bf16 %v110, %v109
    %v190 = vpack.c.bf16 %v112, %v111
    %v191 = vpack.c.bf16 %v114, %v113
    %v192 = vpack.c.bf16 %v116, %v115
    %v193 = vpack.c.bf16 %v118, %v117
    %v194 = vpack.c.bf16 %v120, %v119
    %v195 = vpack.c.bf16 %v122, %v121
    %v196 = vpack.c.bf16 %v124, %v123
    %v197 = vpack.c.bf16 %v126, %v125
    %v198 = vpack.c.bf16 %v128, %v127
    %v199 = vpack.c.bf16 %v130, %v129
    %v200 = vpack.c.bf16 %v132, %v131
    %v202 = vlaneseq
    %v203 = vshrl.u32 %v202, 7
    %v204 = vsub.s32 0, %v203
    %v205 = vrot.slane %v149, %v204
    %v223 = vunpack.c.l.b16 %v133
    %v224 = vunpack.c.l.b16 %v134
    %v225 = vunpack.c.l.b16 %v135
    %v226 = vunpack.c.l.b16 %v136
    %v227 = vunpack.c.l.b16 %v137
    %v228 = vunpack.c.l.b16 %v138
    %v229 = vunpack.c.l.b16 %v139
    %v230 = vunpack.c.l.b16 %v140
    %v231 = vunpack.c.l.b16 %v141
    %v232 = vunpack.c.l.b16 %v142
    %v233 = vunpack.c.l.b16 %v143
    %v234 = vunpack.c.l.b16 %v144
    %v235 = vunpack.c.l.b16 %v145
    %v236 = vunpack.c.l.b16 %v146
    %v237 = vunpack.c.l.b16 %v147
    %v238 = vunpack.c.l.b16 %v148
    %v239 = vpack.c.b16 %v224, %v223
    %v240 = vpack.c.b16 %v226, %v225
    %v241 = vpack.c.b16 %v228, %v227
    %v242 = vpack.c.b16 %v230, %v229
    %v243 = vpack.c.b16 %v232, %v231
    %v244 = vpack.c.b16 %v234, %v233
    %v245 = vpack.c.b16 %v236, %v235
    %v246 = vpack.c.b16 %v238, %v237
    %255 = vmatprep.subr.bf16.mxu0 0
    %256 = vmatpush1.bf16.msra.mxu0 %v239
    %257 = vmatprep.subr.bf16.mxu0 0
    %258 = vmatpush1.bf16.msra.mxu0 %v240
    %259 = vmatprep.subr.bf16.mxu0 0
    %260 = vmatpush1.bf16.msra.mxu0 %v241
    %261 = vmatprep.subr.bf16.mxu0 0
    %262 = vmatpush1.bf16.msra.mxu0 %v242
    %263 = vmatprep.subr.bf16.mxu0 0
    %264 = vmatpush1.bf16.msra.mxu0 %v243
    %265 = vmatprep.subr.bf16.mxu0 0
    %266 = vmatpush1.bf16.msra.mxu0 %v244
    %267 = vmatprep.subr.bf16.mxu0 0
    %268 = vmatpush1.bf16.msra.mxu0 %v245
    %269 = vmatprep.subr.bf16.mxu0 0
    %270 = vmatpush1.bf16.msra.mxu0 %v246
    %271 = vmatprep.subr.bf16.mxu0 0
    %272 = vmatpush1.bf16.msra.mxu0 0
    %273 = vmatprep.subr.bf16.mxu0 0
    %274 = vmatpush1.bf16.msra.mxu0 0
    %275 = vmatprep.subr.bf16.mxu0 0
    %276 = vmatpush1.bf16.msra.mxu0 0
    %277 = vmatprep.subr.bf16.mxu0 0
    %278 = vmatpush1.bf16.msra.mxu0 0
    %279 = vmatprep.subr.bf16.mxu0 0
    %280 = vmatpush1.bf16.msra.mxu0 0
    %281 = vmatprep.subr.bf16.mxu0 0
    %282 = vmatpush1.bf16.msra.mxu0 0
    %283 = vmatprep.subr.bf16.mxu0 0
    %284 = vmatpush1.bf16.msra.mxu0 0
    %285 = vmatprep.subr.bf16.mxu0 0
    %286 = vmatpush1.bf16.msra.mxu0 0
    %287 = vmatprep.mubr.bf16.mxu0 0
    %288 = vmatmul.mubr.bf16.gmra.mrb[0].mxu0 %v169
    %v289 = vpop.f32.mrb[0].mxu0
    %v290 = vadd.f32 %v205, %v289
    %v291 = vpop.f32.mrb[0].mxu0
    %v292 = vpop.f32.mrb[0].mxu0
    %v293 = vadd.f32 %v205, %v292
    %v294 = vpop.f32.mrb[0].mxu0
    %295 = vmatprep.mubr.bf16.mxu0 0
    %296 = vmatmul.mubr.bf16.gmra.mrb[0].mxu0 %v170
    %v297 = vpop.f32.mrb[0].mxu0
    %v298 = vadd.f32 %v205, %v297
    %v299 = vpop.f32.mrb[0].mxu0
    %v300 = vpop.f32.mrb[0].mxu0
    %v301 = vadd.f32 %v205, %v300
    %v302 = vpop.f32.mrb[0].mxu0
    %303 = vmatprep.mubr.bf16.mxu0 0
    %304 = vmatmul.mubr.bf16.gmra.mrb[0].mxu0 %v171
    %v305 = vpop.f32.mrb[0].mxu0
    %v306 = vadd.f32 %v205, %v305
    %v307 = vpop.f32.mrb[0].mxu0
    %v308 = vpop.f32.mrb[0].mxu0
    %v309 = vadd.f32 %v205, %v308
    %v310 = vpop.f32.mrb[0].mxu0
    %311 = vmatprep.mubr.bf16.mxu0 0
    %312 = vmatmul.mubr.bf16.gmra.mrb[0].mxu0 %v172
    %v313 = vpop.f32.mrb[0].mxu0
    %v314 = vadd.f32 %v205, %v313
    %v315 = vpop.f32.mrb[0].mxu0
    %v316 = vpop.f32.mrb[0].mxu0
    %v317 = vadd.f32 %v205, %v316
    %v318 = vpop.f32.mrb[0].mxu0
    %319 = vmatprep.mubr.bf16.mxu0 0
    %320 = vmatmul.mubr.bf16.gmra.mrb[0].mxu0 %v173
    %v321 = vpop.f32.mrb[0].mxu0
    %v322 = vadd.f32 %v205, %v321
    %v323 = vpop.f32.mrb[0].mxu0
    %v324 = vpop.f32.mrb[0].mxu0
    %v325 = vadd.f32 %v205, %v324
    %v326 = vpop.f32.mrb[0].mxu0
    %327 = vmatprep.mubr.bf16.mxu0 0
    %328 = vmatmul.mubr.bf16.gmra.mrb[0].mxu0 %v174
    %v329 = vpop.f32.mrb[0].mxu0
    %v330 = vadd.f32 %v205, %v329
    %v331 = vpop.f32.mrb[0].mxu0
    %v332 = vpop.f32.mrb[0].mxu0
    %v333 = vadd.f32 %v205, %v332
    %v334 = vpop.f32.mrb[0].mxu0
    %335 = vmatprep.mubr.bf16.mxu0 0
    %336 = vmatmul.mubr.bf16.gmra.mrb[0].mxu0 %v175
    %v337 = vpop.f32.mrb[0].mxu0
    %v338 = vadd.f32 %v205, %v337
    %v339 = vpop.f32.mrb[0].mxu0
    %v340 = vpop.f32.mrb[0].mxu0
    %v341 = vadd.f32 %v205, %v340
    %v342 = vpop.f32.mrb[0].mxu0
    %343 = vmatprep.mubr.bf16.mxu0 0
    %344 = vmatmul.mubr.bf16.gmra.mrb[0].mxu0 %v176
    %v345 = vpop.f32.mrb[0].mxu0
    %v346 = vadd.f32 %v205, %v345
    %v347 = vpop.f32.mrb[0].mxu0
    %v348 = vpop.f32.mrb[0].mxu0
    %v349 = vadd.f32 %v205, %v348
    %v350 = vpop.f32.mrb[0].mxu0
    %351 = vmatprep.mubr.bf16.mxu0 0
    %352 = vmatmul.mubr.bf16.gmra.mrb[0].mxu0 %v177
    %v353 = vpop.f32.mrb[0].mxu0
    %v354 = vadd.f32 %v205, %v353
    %v355 = vpop.f32.mrb[0].mxu0
    %v356 = vpop.f32.mrb[0].mxu0
    %v357 = vadd.f32 %v205, %v356
    %v358 = vpop.f32.mrb[0].mxu0
    %359 = vmatprep.mubr.bf16.mxu0 0
    %360 = vmatmul.mubr.bf16.gmra.mrb[0].mxu0 %v178
    %v361 = vpop.f32.mrb[0].mxu0
    %v362 = vadd.f32 %v205, %v361
    %v363 = vpop.f32.mrb[0].mxu0
    %v364 = vpop.f32.mrb[0].mxu0
    %v365 = vadd.f32 %v205, %v364
    %v366 = vpop.f32.mrb[0].mxu0
    %367 = vmatprep.mubr.bf16.mxu0 0
    %368 = vmatmul.mubr.bf16.gmra.mrb[0].mxu0 %v179
    %v369 = vpop.f32.mrb[0].mxu0
    %v370 = vadd.f32 %v205, %v369
    %v371 = vpop.f32.mrb[0].mxu0
    %v372 = vpop.f32.mrb[0].mxu0
    %v373 = vadd.f32 %v205, %v372
    %v374 = vpop.f32.mrb[0].mxu0
    %375 = vmatprep.mubr.bf16.mxu0 0
    %376 = vmatmul.mubr.bf16.gmra.mrb[0].mxu0 %v180
    %v377 = vpop.f32.mrb[0].mxu0
    %v378 = vadd.f32 %v205, %v377
    %v379 = vpop.f32.mrb[0].mxu0
    %v380 = vpop.f32.mrb[0].mxu0
    %v381 = vadd.f32 %v205, %v380
    %v382 = vpop.f32.mrb[0].mxu0
    %383 = vmatprep.mubr.bf16.mxu0 0
    %384 = vmatmul.mubr.bf16.gmra.mrb[0].mxu0 %v181
    %v385 = vpop.f32.mrb[0].mxu0
    %v386 = vadd.f32 %v205, %v385
    %v387 = vpop.f32.mrb[0].mxu0
    %v388 = vpop.f32.mrb[0].mxu0
    %v389 = vadd.f32 %v205, %v388
    %v390 = vpop.f32.mrb[0].mxu0
    %391 = vmatprep.mubr.bf16.mxu0 0
    %392 = vmatmul.mubr.bf16.gmra.mrb[0].mxu0 %v182
    %v393 = vpop.f32.mrb[0].mxu0
    %v394 = vadd.f32 %v205, %v393
    %v395 = vpop.f32.mrb[0].mxu0
    %v396 = vpop.f32.mrb[0].mxu0
    %v397 = vadd.f32 %v205, %v396
    %v398 = vpop.f32.mrb[0].mxu0
    %399 = vmatprep.mubr.bf16.mxu0 0
    %400 = vmatmul.mubr.bf16.gmra.mrb[0].mxu0 %v183
    %v401 = vpop.f32.mrb[0].mxu0
    %v402 = vadd.f32 %v205, %v401
    %v403 = vpop.f32.mrb[0].mxu0
    %v404 = vpop.f32.mrb[0].mxu0
    %v405 = vadd.f32 %v205, %v404
    %v406 = vpop.f32.mrb[0].mxu0
    %407 = vmatprep.mubr.bf16.mxu0 0
    %408 = vmatmul.mubr.bf16.gmra.mrb[0].mxu0 %v184
    %v409 = vpop.f32.mrb[0].mxu0
    %v410 = vadd.f32 %v205, %v409
    %v411 = vpop.f32.mrb[0].mxu0
    %v412 = vpop.f32.mrb[0].mxu0
    %v413 = vadd.f32 %v205, %v412
    %v414 = vpop.f32.mrb[0].mxu0
    %415 = vmatprep.mubr.bf16.mxu0 0
    %416 = vmatmul.mubr.bf16.gmra.mrb[0].mxu0 %v185
    %v417 = vpop.f32.mrb[0].mxu0
    %v418 = vadd.f32 %v205, %v417
    %v419 = vpop.f32.mrb[0].mxu0
    %v420 = vpop.f32.mrb[0].mxu0
    %v421 = vadd.f32 %v205, %v420
    %v422 = vpop.f32.mrb[0].mxu0
    %423 = vmatprep.mubr.bf16.mxu0 0
    %424 = vmatmul.mubr.bf16.gmra.mrb[0].mxu0 %v186
    %v425 = vpop.f32.mrb[0].mxu0
    %v426 = vadd.f32 %v205, %v425
    %v427 = vpop.f32.mrb[0].mxu0
    %v428 = vpop.f32.mrb[0].mxu0
    %v429 = vadd.f32 %v205, %v428
    %v430 = vpop.f32.mrb[0].mxu0
    %431 = vmatprep.mubr.bf16.mxu0 0
    %432 = vmatmul.mubr.bf16.gmra.mrb[0].mxu0 %v187
    %v433 = vpop.f32.mrb[0].mxu0
    %v434 = vadd.f32 %v205, %v433
    %v435 = vpop.f32.mrb[0].mxu0
    %v436 = vpop.f32.mrb[0].mxu0
    %v437 = vadd.f32 %v205, %v436
    %v438 = vpop.f32.mrb[0].mxu0
    %439 = vmatprep.mubr.bf16.mxu0 0
    %440 = vmatmul.mubr.bf16.gmra.mrb[0].mxu0 %v188
    %v441 = vpop.f32.mrb[0].mxu0
    %v442 = vadd.f32 %v205, %v441
    %v443 = vpop.f32.mrb[0].mxu0
    %v444 = vpop.f32.mrb[0].mxu0
    %v445 = vadd.f32 %v205, %v444
    %v446 = vpop.f32.mrb[0].mxu0
    %447 = vmatprep.mubr.bf16.mxu0 0
    %448 = vmatmul.mubr.bf16.gmra.mrb[0].mxu0 %v189
    %v449 = vpop.f32.mrb[0].mxu0
    %v450 = vadd.f32 %v205, %v449
    %v451 = vpop.f32.mrb[0].mxu0
    %v452 = vpop.f32.mrb[0].mxu0
    %v453 = vadd.f32 %v205, %v452
    %v454 = vpop.f32.mrb[0].mxu0
    %455 = vmatprep.mubr.bf16.mxu0 0
    %456 = vmatmul.mubr.bf16.gmra.mrb[0].mxu0 %v190
    %v457 = vpop.f32.mrb[0].mxu0
    %v458 = vadd.f32 %v205, %v457
    %v459 = vpop.f32.mrb[0].mxu0
    %v460 = vpop.f32.mrb[0].mxu0
    %v461 = vadd.f32 %v205, %v460
    %v462 = vpop.f32.mrb[0].mxu0
    %463 = vmatprep.mubr.bf16.mxu0 0
    %464 = vmatmul.mubr.bf16.gmra.mrb[0].mxu0 %v191
    %v465 = vpop.f32.mrb[0].mxu0
    %v466 = vadd.f32 %v205, %v465
    %v467 = vpop.f32.mrb[0].mxu0
    %v468 = vpop.f32.mrb[0].mxu0
    %v469 = vadd.f32 %v205, %v468
    %v470 = vpop.f32.mrb[0].mxu0
    %471 = vmatprep.mubr.bf16.mxu0 0
    %472 = vmatmul.mubr.bf16.gmra.mrb[0].mxu0 %v192
    %v473 = vpop.f32.mrb[0].mxu0
    %v474 = vadd.f32 %v205, %v473
    %v475 = vpop.f32.mrb[0].mxu0
    %v476 = vpop.f32.mrb[0].mxu0
    %v477 = vadd.f32 %v205, %v476
    %v478 = vpop.f32.mrb[0].mxu0
    %479 = vmatprep.mubr.bf16.mxu0 0
    %480 = vmatmul.mubr.bf16.gmra.mrb[0].mxu0 %v193
    %v481 = vpop.f32.mrb[0].mxu0
    %v482 = vadd.f32 %v205, %v481
    %v483 = vpop.f32.mrb[0].mxu0
    %v484 = vpop.f32.mrb[0].mxu0
    %v485 = vadd.f32 %v205, %v484
    %v486 = vpop.f32.mrb[0].mxu0
    %487 = vmatprep.mubr.bf16.mxu0 0
    %488 = vmatmul.mubr.bf16.gmra.mrb[0].mxu0 %v194
    %v489 = vpop.f32.mrb[0].mxu0
    %v490 = vadd.f32 %v205, %v489
    %v491 = vpop.f32.mrb[0].mxu0
    %v492 = vpop.f32.mrb[0].mxu0
    %v493 = vadd.f32 %v205, %v492
    %v494 = vpop.f32.mrb[0].mxu0
    %495 = vmatprep.mubr.bf16.mxu0 0
    %496 = vmatmul.mubr.bf16.gmra.mrb[0].mxu0 %v195
    %v497 = vpop.f32.mrb[0].mxu0
    %v498 = vadd.f32 %v205, %v497
    %v499 = vpop.f32.mrb[0].mxu0
    %v500 = vpop.f32.mrb[0].mxu0
    %v501 = vadd.f32 %v205, %v500
    %v502 = vpop.f32.mrb[0].mxu0
    %503 = vmatprep.mubr.bf16.mxu0 0
    %504 = vmatmul.mubr.bf16.gmra.mrb[0].mxu0 %v196
    %v505 = vpop.f32.mrb[0].mxu0
    %v506 = vadd.f32 %v205, %v505
    %v507 = vpop.f32.mrb[0].mxu0
    %v508 = vpop.f32.mrb[0].mxu0
    %v509 = vadd.f32 %v205, %v508
    %v510 = vpop.f32.mrb[0].mxu0
    %511 = vmatprep.mubr.bf16.mxu0 0
    %512 = vmatmul.mubr.bf16.gmra.mrb[0].mxu0 %v197
    %v513 = vpop.f32.mrb[0].mxu0
    %v514 = vadd.f32 %v205, %v513
    %v515 = vpop.f32.mrb[0].mxu0
    %v516 = vpop.f32.mrb[0].mxu0
    %v517 = vadd.f32 %v205, %v516
    %v518 = vpop.f32.mrb[0].mxu0
    %519 = vmatprep.mubr.bf16.mxu0 0
    %520 = vmatmul.mubr.bf16.gmra.mrb[0].mxu0 %v198
    %v521 = vpop.f32.mrb[0].mxu0
    %v522 = vadd.f32 %v205, %v521
    %v523 = vpop.f32.mrb[0].mxu0
    %v524 = vpop.f32.mrb[0].mxu0
    %v525 = vadd.f32 %v205, %v524
    %v526 = vpop.f32.mrb[0].mxu0
    %527 = vmatprep.mubr.bf16.mxu0 0
    %528 = vmatmul.mubr.bf16.gmra.mrb[0].mxu0 %v199
    %v529 = vpop.f32.mrb[0].mxu0
    %v530 = vadd.f32 %v205, %v529
    %v531 = vpop.f32.mrb[0].mxu0
    %v532 = vpop.f32.mrb[0].mxu0
    %v533 = vadd.f32 %v205, %v532
    %v534 = vpop.f32.mrb[0].mxu0
    %535 = vmatprep.mubr.bf16.mxu0 0
    %536 = vmatmul.mubr.bf16.gmra.mrb[0].mxu0 %v200
    %v537 = vpop.f32.mrb[0].mxu0
    %v538 = vadd.f32 %v205, %v537
    %v539 = vpop.f32.mrb[0].mxu0
    %v540 = vpop.f32.mrb[0].mxu0
    %v541 = vadd.f32 %v205, %v540
    %v542 = vpop.f32.mrb[0].mxu0
    %543 = vdwg.mxu0
    %v544 = vtanh.pop %v290
    %v545 = vtanh.pop %v293
    %v546 = vtanh.pop %v298
    %v547 = vtanh.pop %v301
    %v548 = vtanh.pop %v306
    %v549 = vtanh.pop %v309
    %v550 = vtanh.pop %v314
    %v551 = vtanh.pop %v317
    %v552 = vtanh.pop %v322
    %v553 = vtanh.pop %v325
    %v554 = vtanh.pop %v330
    %v555 = vtanh.pop %v333
    %v556 = vtanh.pop %v338
    %v557 = vtanh.pop %v341
    %v558 = vtanh.pop %v346
    %v559 = vtanh.pop %v349
    %v560 = vtanh.pop %v354
    %v561 = vtanh.pop %v357
    %v562 = vtanh.pop %v362
    %v563 = vtanh.pop %v365
    %v564 = vtanh.pop %v370
    %v565 = vtanh.pop %v373
    %v566 = vtanh.pop %v378
    %v567 = vtanh.pop %v381
    %v568 = vtanh.pop %v386
    %v569 = vtanh.pop %v389
    %v570 = vtanh.pop %v394
    %v571 = vtanh.pop %v397
    %v572 = vtanh.pop %v402
    %v573 = vtanh.pop %v405
    %v574 = vtanh.pop %v410
    %v575 = vtanh.pop %v413
    %v576 = vtanh.pop %v418
    %v577 = vtanh.pop %v421
    %v578 = vtanh.pop %v426
    %v579 = vtanh.pop %v429
    %v580 = vtanh.pop %v434
    %v581 = vtanh.pop %v437
    %v582 = vtanh.pop %v442
    %v583 = vtanh.pop %v445
    %v584 = vtanh.pop %v450
    %v585 = vtanh.pop %v453
    %v586 = vtanh.pop %v458
    %v587 = vtanh.pop %v461
    %v588 = vtanh.pop %v466
    %v589 = vtanh.pop %v469
    %v590 = vtanh.pop %v474
    %v591 = vtanh.pop %v477
    %v592 = vtanh.pop %v482
    %v593 = vtanh.pop %v485
    %v594 = vtanh.pop %v490
    %v595 = vtanh.pop %v493
    %v596 = vtanh.pop %v498
    %v597 = vtanh.pop %v501
    %v598 = vtanh.pop %v506
    %v599 = vtanh.pop %v509
    %v600 = vtanh.pop %v514
    %v601 = vtanh.pop %v517
    %v602 = vtanh.pop %v522
    %v603 = vtanh.pop %v525
    %v604 = vtanh.pop %v530
    %v605 = vtanh.pop %v533
    %v606 = vtanh.pop %v538
    %v607 = vtanh.pop %v541
    %v608 = vmul.f32 %v544, %v544
    %v609 = vmul.f32 %v545, %v545
    %v610 = vmul.f32 %v546, %v546
    %v611 = vmul.f32 %v547, %v547
    %v612 = vmul.f32 %v548, %v548
    %v613 = vmul.f32 %v549, %v549
    %v614 = vmul.f32 %v550, %v550
    %v615 = vmul.f32 %v551, %v551
    %v616 = vmul.f32 %v552, %v552
    %v617 = vmul.f32 %v553, %v553
    %v618 = vmul.f32 %v554, %v554
    %v619 = vmul.f32 %v555, %v555
    %v620 = vmul.f32 %v556, %v556
    %v621 = vmul.f32 %v557, %v557
    %v622 = vmul.f32 %v558, %v558
    %v623 = vmul.f32 %v559, %v559
    %v624 = vmul.f32 %v560, %v560
    %v625 = vmul.f32 %v561, %v561
    %v626 = vmul.f32 %v562, %v562
    %v627 = vmul.f32 %v563, %v563
    %v628 = vmul.f32 %v564, %v564
    %v629 = vmul.f32 %v565, %v565
    %v630 = vmul.f32 %v566, %v566
    %v631 = vmul.f32 %v567, %v567
    %v632 = vmul.f32 %v568, %v568
    %v633 = vmul.f32 %v569, %v569
    %v634 = vmul.f32 %v570, %v570
    %v635 = vmul.f32 %v571, %v571
    %v636 = vmul.f32 %v572, %v572
    %v637 = vmul.f32 %v573, %v573
    %v638 = vmul.f32 %v574, %v574
    %v639 = vmul.f32 %v575, %v575
    %v640 = vmul.f32 %v576, %v576
    %v641 = vmul.f32 %v577, %v577
    %v642 = vmul.f32 %v578, %v578
    %v643 = vmul.f32 %v579, %v579
    %v644 = vmul.f32 %v580, %v580
    %v645 = vmul.f32 %v581, %v581
    %v646 = vmul.f32 %v582, %v582
    %v647 = vmul.f32 %v583, %v583
    %v648 = vmul.f32 %v584, %v584
    %v649 = vmul.f32 %v585, %v585
    %v650 = vmul.f32 %v586, %v586
    %v651 = vmul.f32 %v587, %v587
    %v652 = vmul.f32 %v588, %v588
    %v653 = vmul.f32 %v589, %v589
    %v654 = vmul.f32 %v590, %v590
    %v655 = vmul.f32 %v591, %v591
    %v656 = vmul.f32 %v592, %v592
    %v657 = vmul.f32 %v593, %v593
    %v658 = vmul.f32 %v594, %v594
    %v659 = vmul.f32 %v595, %v595
    %v660 = vmul.f32 %v596, %v596
    %v661 = vmul.f32 %v597, %v597
    %v662 = vmul.f32 %v598, %v598
    %v663 = vmul.f32 %v599, %v599
    %v664 = vmul.f32 %v600, %v600
    %v665 = vmul.f32 %v601, %v601
    %v666 = vmul.f32 %v602, %v602
    %v667 = vmul.f32 %v603, %v603
    %v668 = vmul.f32 %v604, %v604
    %v669 = vmul.f32 %v605, %v605
    %v670 = vmul.f32 %v606, %v606
    %v671 = vmul.f32 %v607, %v607
    %672 = vadd.xlane.f32.xlu0 %v608
    %v673 = vpop.xlane.xlu0 %672
    %674 = vadd.xlane.f32.xlu0 %v609
    %v675 = vpop.xlane.xlu0 %674
    %676 = vadd.xlane.f32.xlu0 %v610
    %v677 = vpop.xlane.xlu0 %676
    %678 = vadd.xlane.f32.xlu0 %v611
    %v679 = vpop.xlane.xlu0 %678
    %680 = vadd.xlane.f32.xlu0 %v612
    %v681 = vpop.xlane.xlu0 %680
    %682 = vadd.xlane.f32.xlu0 %v613
    %v683 = vpop.xlane.xlu0 %682
    %684 = vadd.xlane.f32.xlu0 %v614
    %v685 = vpop.xlane.xlu0 %684
    %686 = vadd.xlane.f32.xlu0 %v615
    %v687 = vpop.xlane.xlu0 %686
    %688 = vadd.xlane.f32.xlu0 %v616
    %v689 = vpop.xlane.xlu0 %688
    %690 = vadd.xlane.f32.xlu0 %v617
    %v691 = vpop.xlane.xlu0 %690
    %692 = vadd.xlane.f32.xlu0 %v618
    %v693 = vpop.xlane.xlu0 %692
    %694 = vadd.xlane.f32.xlu0 %v619
    %v695 = vpop.xlane.xlu0 %694
    %696 = vadd.xlane.f32.xlu0 %v620
    %v697 = vpop.xlane.xlu0 %696
    %698 = vadd.xlane.f32.xlu0 %v621
    %v699 = vpop.xlane.xlu0 %698
    %700 = vadd.xlane.f32.xlu0 %v622
    %v701 = vpop.xlane.xlu0 %700
    %702 = vadd.xlane.f32.xlu0 %v623
    %v703 = vpop.xlane.xlu0 %702
    %704 = vadd.xlane.f32.xlu0 %v624
    %v705 = vpop.xlane.xlu0 %704
    %706 = vadd.xlane.f32.xlu0 %v625
    %v707 = vpop.xlane.xlu0 %706
    %708 = vadd.xlane.f32.xlu0 %v626
    %v709 = vpop.xlane.xlu0 %708
    %710 = vadd.xlane.f32.xlu0 %v627
    %v711 = vpop.xlane.xlu0 %710
    %712 = vadd.xlane.f32.xlu0 %v628
    %v713 = vpop.xlane.xlu0 %712
    %714 = vadd.xlane.f32.xlu0 %v629
    %v715 = vpop.xlane.xlu0 %714
    %716 = vadd.xlane.f32.xlu0 %v630
    %v717 = vpop.xlane.xlu0 %716
    %718 = vadd.xlane.f32.xlu0 %v631
    %v719 = vpop.xlane.xlu0 %718
    %720 = vadd.xlane.f32.xlu0 %v632
    %v721 = vpop.xlane.xlu0 %720
    %722 = vadd.xlane.f32.xlu0 %v633
    %v723 = vpop.xlane.xlu0 %722
    %724 = vadd.xlane.f32.xlu0 %v634
    %v725 = vpop.xlane.xlu0 %724
    %726 = vadd.xlane.f32.xlu0 %v635
    %v727 = vpop.xlane.xlu0 %726
    %728 = vadd.xlane.f32.xlu0 %v636
    %v729 = vpop.xlane.xlu0 %728
    %730 = vadd.xlane.f32.xlu0 %v637
    %v731 = vpop.xlane.xlu0 %730
    %732 = vadd.xlane.f32.xlu0 %v638
    %v733 = vpop.xlane.xlu0 %732
    %734 = vadd.xlane.f32.xlu0 %v639
    %v735 = vpop.xlane.xlu0 %734
    %736 = vadd.xlane.f32.xlu0 %v640
    %v737 = vpop.xlane.xlu0 %736
    %738 = vadd.xlane.f32.xlu0 %v641
    %v739 = vpop.xlane.xlu0 %738
    %740 = vadd.xlane.f32.xlu0 %v642
    %v741 = vpop.xlane.xlu0 %740
    %742 = vadd.xlane.f32.xlu0 %v643
    %v743 = vpop.xlane.xlu0 %742
    %744 = vadd.xlane.f32.xlu0 %v644
    %v745 = vpop.xlane.xlu0 %744
    %746 = vadd.xlane.f32.xlu0 %v645
    %v747 = vpop.xlane.xlu0 %746
    %748 = vadd.xlane.f32.xlu0 %v646
    %v749 = vpop.xlane.xlu0 %748
    %750 = vadd.xlane.f32.xlu0 %v647
    %v751 = vpop.xlane.xlu0 %750
    %752 = vadd.xlane.f32.xlu0 %v648
    %v753 = vpop.xlane.xlu0 %752
    %754 = vadd.xlane.f32.xlu0 %v649
    %v755 = vpop.xlane.xlu0 %754
    %756 = vadd.xlane.f32.xlu0 %v650
    %v757 = vpop.xlane.xlu0 %756
    %758 = vadd.xlane.f32.xlu0 %v651
    %v759 = vpop.xlane.xlu0 %758
    %760 = vadd.xlane.f32.xlu0 %v652
    %v761 = vpop.xlane.xlu0 %760
    %762 = vadd.xlane.f32.xlu0 %v653
    %v763 = vpop.xlane.xlu0 %762
    %764 = vadd.xlane.f32.xlu0 %v654
    %v765 = vpop.xlane.xlu0 %764
    %766 = vadd.xlane.f32.xlu0 %v655
    %v767 = vpop.xlane.xlu0 %766
    %768 = vadd.xlane.f32.xlu0 %v656
    %v769 = vpop.xlane.xlu0 %768
    %770 = vadd.xlane.f32.xlu0 %v657
    %v771 = vpop.xlane.xlu0 %770
    %772 = vadd.xlane.f32.xlu0 %v658
    %v773 = vpop.xlane.xlu0 %772
    %774 = vadd.xlane.f32.xlu0 %v659
    %v775 = vpop.xlane.xlu0 %774
    %776 = vadd.xlane.f32.xlu0 %v660
    %v777 = vpop.xlane.xlu0 %776
    %778 = vadd.xlane.f32.xlu0 %v661
    %v779 = vpop.xlane.xlu0 %778
    %780 = vadd.xlane.f32.xlu0 %v662
    %v781 = vpop.xlane.xlu0 %780
    %782 = vadd.xlane.f32.xlu0 %v663
    %v783 = vpop.xlane.xlu0 %782
    %784 = vadd.xlane.f32.xlu0 %v664
    %v785 = vpop.xlane.xlu0 %784
    %786 = vadd.xlane.f32.xlu0 %v665
    %v787 = vpop.xlane.xlu0 %786
    %788 = vadd.xlane.f32.xlu0 %v666
    %v789 = vpop.xlane.xlu0 %788
    %790 = vadd.xlane.f32.xlu0 %v667
    %v791 = vpop.xlane.xlu0 %790
    %792 = vadd.xlane.f32.xlu0 %v668
    %v793 = vpop.xlane.xlu0 %792
    %794 = vadd.xlane.f32.xlu0 %v669
    %v795 = vpop.xlane.xlu0 %794
    %796 = vadd.xlane.f32.xlu0 %v670
    %v797 = vpop.xlane.xlu0 %796
    %798 = vadd.xlane.f32.xlu0 %v671
    %v799 = vpop.xlane.xlu0 %798
    %v800 = vrsqrt.pop %v673
    %v801 = vmul.f32 %v673, %v800
    %vm802 = vcmp.eq.f32.partialorder %v673, inf
    %v803 = vsel %vm802, %v673, %v801
    %vm804 = vcmp.eq.f32.partialorder %v673, 0.0
    %v805 = vand.u32 %v673, 2147483648
    %v806 = vsel %vm804, %v805, %v803
    %v807 = vrsqrt.pop %v675
    %v808 = vmul.f32 %v675, %v807
    %vm809 = vcmp.eq.f32.partialorder %v675, inf
    %v810 = vsel %vm809, %v675, %v808
    %vm811 = vcmp.eq.f32.partialorder %v675, 0.0
    %v812 = vand.u32 %v675, 2147483648
    %v813 = vsel %vm811, %v812, %v810
    %v814 = vrsqrt.pop %v677
    %v815 = vmul.f32 %v677, %v814
    %vm816 = vcmp.eq.f32.partialorder %v677, inf
    %v817 = vsel %vm816, %v677, %v815
    %vm818 = vcmp.eq.f32.partialorder %v677, 0.0
    %v819 = vand.u32 %v677, 2147483648
    %v820 = vsel %vm818, %v819, %v817
    %v821 = vrsqrt.pop %v679
    %v822 = vmul.f32 %v679, %v821
    %vm823 = vcmp.eq.f32.partialorder %v679, inf
    %v824 = vsel %vm823, %v679, %v822
    %vm825 = vcmp.eq.f32.partialorder %v679, 0.0
    %v826 = vand.u32 %v679, 2147483648
    %v827 = vsel %vm825, %v826, %v824
    %v828 = vrsqrt.pop %v681
    %v829 = vmul.f32 %v681, %v828
    %vm830 = vcmp.eq.f32.partialorder %v681, inf
    %v831 = vsel %vm830, %v681, %v829
    %vm832 = vcmp.eq.f32.partialorder %v681, 0.0
    %v833 = vand.u32 %v681, 2147483648
    %v834 = vsel %vm832, %v833, %v831
    %v835 = vrsqrt.pop %v683
    %v836 = vmul.f32 %v683, %v835
    %vm837 = vcmp.eq.f32.partialorder %v683, inf
    %v838 = vsel %vm837, %v683, %v836
    %vm839 = vcmp.eq.f32.partialorder %v683, 0.0
    %v840 = vand.u32 %v683, 2147483648
    %v841 = vsel %vm839, %v840, %v838
    %v842 = vrsqrt.pop %v685
    %v843 = vmul.f32 %v685, %v842
    %vm844 = vcmp.eq.f32.partialorder %v685, inf
    %v845 = vsel %vm844, %v685, %v843
    %vm846 = vcmp.eq.f32.partialorder %v685, 0.0
    %v847 = vand.u32 %v685, 2147483648
    %v848 = vsel %vm846, %v847, %v845
    %v849 = vrsqrt.pop %v687
    %v850 = vmul.f32 %v687, %v849
    %vm851 = vcmp.eq.f32.partialorder %v687, inf
    %v852 = vsel %vm851, %v687, %v850
    %vm853 = vcmp.eq.f32.partialorder %v687, 0.0
    %v854 = vand.u32 %v687, 2147483648
    %v855 = vsel %vm853, %v854, %v852
    %v856 = vrsqrt.pop %v689
    %v857 = vmul.f32 %v689, %v856
    %vm858 = vcmp.eq.f32.partialorder %v689, inf
    %v859 = vsel %vm858, %v689, %v857
    %vm860 = vcmp.eq.f32.partialorder %v689, 0.0
    %v861 = vand.u32 %v689, 2147483648
    %v862 = vsel %vm860, %v861, %v859
    %v863 = vrsqrt.pop %v691
    %v864 = vmul.f32 %v691, %v863
    %vm865 = vcmp.eq.f32.partialorder %v691, inf
    %v866 = vsel %vm865, %v691, %v864
    %vm867 = vcmp.eq.f32.partialorder %v691, 0.0
    %v868 = vand.u32 %v691, 2147483648
    %v869 = vsel %vm867, %v868, %v866
    %v870 = vrsqrt.pop %v693
    %v871 = vmul.f32 %v693, %v870
    %vm872 = vcmp.eq.f32.partialorder %v693, inf
    %v873 = vsel %vm872, %v693, %v871
    %vm874 = vcmp.eq.f32.partialorder %v693, 0.0
    %v875 = vand.u32 %v693, 2147483648
    %v876 = vsel %vm874, %v875, %v873
    %v877 = vrsqrt.pop %v695
    %v878 = vmul.f32 %v695, %v877
    %vm879 = vcmp.eq.f32.partialorder %v695, inf
    %v880 = vsel %vm879, %v695, %v878
    %vm881 = vcmp.eq.f32.partialorder %v695, 0.0
    %v882 = vand.u32 %v695, 2147483648
    %v883 = vsel %vm881, %v882, %v880
    %v884 = vrsqrt.pop %v697
    %v885 = vmul.f32 %v697, %v884
    %vm886 = vcmp.eq.f32.partialorder %v697, inf
    %v887 = vsel %vm886, %v697, %v885
    %vm888 = vcmp.eq.f32.partialorder %v697, 0.0
    %v889 = vand.u32 %v697, 2147483648
    %v890 = vsel %vm888, %v889, %v887
    %v891 = vrsqrt.pop %v699
    %v892 = vmul.f32 %v699, %v891
    %vm893 = vcmp.eq.f32.partialorder %v699, inf
    %v894 = vsel %vm893, %v699, %v892
    %vm895 = vcmp.eq.f32.partialorder %v699, 0.0
    %v896 = vand.u32 %v699, 2147483648
    %v897 = vsel %vm895, %v896, %v894
    %v898 = vrsqrt.pop %v701
    %v899 = vmul.f32 %v701, %v898
    %vm900 = vcmp.eq.f32.partialorder %v701, inf
    %v901 = vsel %vm900, %v701, %v899
    %vm902 = vcmp.eq.f32.partialorder %v701, 0.0
    %v903 = vand.u32 %v701, 2147483648
    %v904 = vsel %vm902, %v903, %v901
    %v905 = vrsqrt.pop %v703
    %v906 = vmul.f32 %v703, %v905
    %vm907 = vcmp.eq.f32.partialorder %v703, inf
    %v908 = vsel %vm907, %v703, %v906
    %vm909 = vcmp.eq.f32.partialorder %v703, 0.0
    %v910 = vand.u32 %v703, 2147483648
    %v911 = vsel %vm909, %v910, %v908
    %v912 = vrsqrt.pop %v705
    %v913 = vmul.f32 %v705, %v912
    %vm914 = vcmp.eq.f32.partialorder %v705, inf
    %v915 = vsel %vm914, %v705, %v913
    %vm916 = vcmp.eq.f32.partialorder %v705, 0.0
    %v917 = vand.u32 %v705, 2147483648
    %v918 = vsel %vm916, %v917, %v915
    %v919 = vrsqrt.pop %v707
    %v920 = vmul.f32 %v707, %v919
    %vm921 = vcmp.eq.f32.partialorder %v707, inf
    %v922 = vsel %vm921, %v707, %v920
    %vm923 = vcmp.eq.f32.partialorder %v707, 0.0
    %v924 = vand.u32 %v707, 2147483648
    %v925 = vsel %vm923, %v924, %v922
    %v926 = vrsqrt.pop %v709
    %v927 = vmul.f32 %v709, %v926
    %vm928 = vcmp.eq.f32.partialorder %v709, inf
    %v929 = vsel %vm928, %v709, %v927
    %vm930 = vcmp.eq.f32.partialorder %v709, 0.0
    %v931 = vand.u32 %v709, 2147483648
    %v932 = vsel %vm930, %v931, %v929
    %v933 = vrsqrt.pop %v711
    %v934 = vmul.f32 %v711, %v933
    %vm935 = vcmp.eq.f32.partialorder %v711, inf
    %v936 = vsel %vm935, %v711, %v934
    %vm937 = vcmp.eq.f32.partialorder %v711, 0.0
    %v938 = vand.u32 %v711, 2147483648
    %v939 = vsel %vm937, %v938, %v936
    %v940 = vrsqrt.pop %v713
    %v941 = vmul.f32 %v713, %v940
    %vm942 = vcmp.eq.f32.partialorder %v713, inf
    %v943 = vsel %vm942, %v713, %v941
    %vm944 = vcmp.eq.f32.partialorder %v713, 0.0
    %v945 = vand.u32 %v713, 2147483648
    %v946 = vsel %vm944, %v945, %v943
    %v947 = vrsqrt.pop %v715
    %v948 = vmul.f32 %v715, %v947
    %vm949 = vcmp.eq.f32.partialorder %v715, inf
    %v950 = vsel %vm949, %v715, %v948
    %vm951 = vcmp.eq.f32.partialorder %v715, 0.0
    %v952 = vand.u32 %v715, 2147483648
    %v953 = vsel %vm951, %v952, %v950
    %v954 = vrsqrt.pop %v717
    %v955 = vmul.f32 %v717, %v954
    %vm956 = vcmp.eq.f32.partialorder %v717, inf
    %v957 = vsel %vm956, %v717, %v955
    %vm958 = vcmp.eq.f32.partialorder %v717, 0.0
    %v959 = vand.u32 %v717, 2147483648
    %v960 = vsel %vm958, %v959, %v957
    %v961 = vrsqrt.pop %v719
    %v962 = vmul.f32 %v719, %v961
    %vm963 = vcmp.eq.f32.partialorder %v719, inf
    %v964 = vsel %vm963, %v719, %v962
    %vm965 = vcmp.eq.f32.partialorder %v719, 0.0
    %v966 = vand.u32 %v719, 2147483648
    %v967 = vsel %vm965, %v966, %v964
    %v968 = vrsqrt.pop %v721
    %v969 = vmul.f32 %v721, %v968
    %vm970 = vcmp.eq.f32.partialorder %v721, inf
    %v971 = vsel %vm970, %v721, %v969
    %vm972 = vcmp.eq.f32.partialorder %v721, 0.0
    %v973 = vand.u32 %v721, 2147483648
    %v974 = vsel %vm972, %v973, %v971
    %v975 = vrsqrt.pop %v723
    %v976 = vmul.f32 %v723, %v975
    %vm977 = vcmp.eq.f32.partialorder %v723, inf
    %v978 = vsel %vm977, %v723, %v976
    %vm979 = vcmp.eq.f32.partialorder %v723, 0.0
    %v980 = vand.u32 %v723, 2147483648
    %v981 = vsel %vm979, %v980, %v978
    %v982 = vrsqrt.pop %v725
    %v983 = vmul.f32 %v725, %v982
    %vm984 = vcmp.eq.f32.partialorder %v725, inf
    %v985 = vsel %vm984, %v725, %v983
    %vm986 = vcmp.eq.f32.partialorder %v725, 0.0
    %v987 = vand.u32 %v725, 2147483648
    %v988 = vsel %vm986, %v987, %v985
    %v989 = vrsqrt.pop %v727
    %v990 = vmul.f32 %v727, %v989
    %vm991 = vcmp.eq.f32.partialorder %v727, inf
    %v992 = vsel %vm991, %v727, %v990
    %vm993 = vcmp.eq.f32.partialorder %v727, 0.0
    %v994 = vand.u32 %v727, 2147483648
    %v995 = vsel %vm993, %v994, %v992
    %v996 = vrsqrt.pop %v729
    %v997 = vmul.f32 %v729, %v996
    %vm998 = vcmp.eq.f32.partialorder %v729, inf
    %v999 = vsel %vm998, %v729, %v997
    %vm1000 = vcmp.eq.f32.partialorder %v729, 0.0
    %v1001 = vand.u32 %v729, 2147483648
    %v1002 = vsel %vm1000, %v1001, %v999
    %v1003 = vrsqrt.pop %v731
    %v1004 = vmul.f32 %v731, %v1003
    %vm1005 = vcmp.eq.f32.partialorder %v731, inf
    %v1006 = vsel %vm1005, %v731, %v1004
    %vm1007 = vcmp.eq.f32.partialorder %v731, 0.0
    %v1008 = vand.u32 %v731, 2147483648
    %v1009 = vsel %vm1007, %v1008, %v1006
    %v1010 = vrsqrt.pop %v733
    %v1011 = vmul.f32 %v733, %v1010
    %vm1012 = vcmp.eq.f32.partialorder %v733, inf
    %v1013 = vsel %vm1012, %v733, %v1011
    %vm1014 = vcmp.eq.f32.partialorder %v733, 0.0
    %v1015 = vand.u32 %v733, 2147483648
    %v1016 = vsel %vm1014, %v1015, %v1013
    %v1017 = vrsqrt.pop %v735
    %v1018 = vmul.f32 %v735, %v1017
    %vm1019 = vcmp.eq.f32.partialorder %v735, inf
    %v1020 = vsel %vm1019, %v735, %v1018
    %vm1021 = vcmp.eq.f32.partialorder %v735, 0.0
    %v1022 = vand.u32 %v735, 2147483648
    %v1023 = vsel %vm1021, %v1022, %v1020
    %v1024 = vrsqrt.pop %v737
    %v1025 = vmul.f32 %v737, %v1024
    %vm1026 = vcmp.eq.f32.partialorder %v737, inf
    %v1027 = vsel %vm1026, %v737, %v1025
    %vm1028 = vcmp.eq.f32.partialorder %v737, 0.0
    %v1029 = vand.u32 %v737, 2147483648
    %v1030 = vsel %vm1028, %v1029, %v1027
    %v1031 = vrsqrt.pop %v739
    %v1032 = vmul.f32 %v739, %v1031
    %vm1033 = vcmp.eq.f32.partialorder %v739, inf
    %v1034 = vsel %vm1033, %v739, %v1032
    %vm1035 = vcmp.eq.f32.partialorder %v739, 0.0
    %v1036 = vand.u32 %v739, 2147483648
    %v1037 = vsel %vm1035, %v1036, %v1034
    %v1038 = vrsqrt.pop %v741
    %v1039 = vmul.f32 %v741, %v1038
    %vm1040 = vcmp.eq.f32.partialorder %v741, inf
    %v1041 = vsel %vm1040, %v741, %v1039
    %vm1042 = vcmp.eq.f32.partialorder %v741, 0.0
    %v1043 = vand.u32 %v741, 2147483648
    %v1044 = vsel %vm1042, %v1043, %v1041
    %v1045 = vrsqrt.pop %v743
    %v1046 = vmul.f32 %v743, %v1045
    %vm1047 = vcmp.eq.f32.partialorder %v743, inf
    %v1048 = vsel %vm1047, %v743, %v1046
    %vm1049 = vcmp.eq.f32.partialorder %v743, 0.0
    %v1050 = vand.u32 %v743, 2147483648
    %v1051 = vsel %vm1049, %v1050, %v1048
    %v1052 = vrsqrt.pop %v745
    %v1053 = vmul.f32 %v745, %v1052
    %vm1054 = vcmp.eq.f32.partialorder %v745, inf
    %v1055 = vsel %vm1054, %v745, %v1053
    %vm1056 = vcmp.eq.f32.partialorder %v745, 0.0
    %v1057 = vand.u32 %v745, 2147483648
    %v1058 = vsel %vm1056, %v1057, %v1055
    %v1059 = vrsqrt.pop %v747
    %v1060 = vmul.f32 %v747, %v1059
    %vm1061 = vcmp.eq.f32.partialorder %v747, inf
    %v1062 = vsel %vm1061, %v747, %v1060
    %vm1063 = vcmp.eq.f32.partialorder %v747, 0.0
    %v1064 = vand.u32 %v747, 2147483648
    %v1065 = vsel %vm1063, %v1064, %v1062
    %v1066 = vrsqrt.pop %v749
    %v1067 = vmul.f32 %v749, %v1066
    %vm1068 = vcmp.eq.f32.partialorder %v749, inf
    %v1069 = vsel %vm1068, %v749, %v1067
    %vm1070 = vcmp.eq.f32.partialorder %v749, 0.0
    %v1071 = vand.u32 %v749, 2147483648
    %v1072 = vsel %vm1070, %v1071, %v1069
    %v1073 = vrsqrt.pop %v751
    %v1074 = vmul.f32 %v751, %v1073
    %vm1075 = vcmp.eq.f32.partialorder %v751, inf
    %v1076 = vsel %vm1075, %v751, %v1074
    %vm1077 = vcmp.eq.f32.partialorder %v751, 0.0
    %v1078 = vand.u32 %v751, 2147483648
    %v1079 = vsel %vm1077, %v1078, %v1076
    %v1080 = vrsqrt.pop %v753
    %v1081 = vmul.f32 %v753, %v1080
    %vm1082 = vcmp.eq.f32.partialorder %v753, inf
    %v1083 = vsel %vm1082, %v753, %v1081
    %vm1084 = vcmp.eq.f32.partialorder %v753, 0.0
    %v1085 = vand.u32 %v753, 2147483648
    %v1086 = vsel %vm1084, %v1085, %v1083
    %v1087 = vrsqrt.pop %v755
    %v1088 = vmul.f32 %v755, %v1087
    %vm1089 = vcmp.eq.f32.partialorder %v755, inf
    %v1090 = vsel %vm1089, %v755, %v1088
    %vm1091 = vcmp.eq.f32.partialorder %v755, 0.0
    %v1092 = vand.u32 %v755, 2147483648
    %v1093 = vsel %vm1091, %v1092, %v1090
    %v1094 = vrsqrt.pop %v757
    %v1095 = vmul.f32 %v757, %v1094
    %vm1096 = vcmp.eq.f32.partialorder %v757, inf
    %v1097 = vsel %vm1096, %v757, %v1095
    %vm1098 = vcmp.eq.f32.partialorder %v757, 0.0
    %v1099 = vand.u32 %v757, 2147483648
    %v1100 = vsel %vm1098, %v1099, %v1097
    %v1101 = vrsqrt.pop %v759
    %v1102 = vmul.f32 %v759, %v1101
    %vm1103 = vcmp.eq.f32.partialorder %v759, inf
    %v1104 = vsel %vm1103, %v759, %v1102
    %vm1105 = vcmp.eq.f32.partialorder %v759, 0.0
    %v1106 = vand.u32 %v759, 2147483648
    %v1107 = vsel %vm1105, %v1106, %v1104
    %v1108 = vrsqrt.pop %v761
    %v1109 = vmul.f32 %v761, %v1108
    %vm1110 = vcmp.eq.f32.partialorder %v761, inf
    %v1111 = vsel %vm1110, %v761, %v1109
    %vm1112 = vcmp.eq.f32.partialorder %v761, 0.0
    %v1113 = vand.u32 %v761, 2147483648
    %v1114 = vsel %vm1112, %v1113, %v1111
    %v1115 = vrsqrt.pop %v763
    %v1116 = vmul.f32 %v763, %v1115
    %vm1117 = vcmp.eq.f32.partialorder %v763, inf
    %v1118 = vsel %vm1117, %v763, %v1116
    %vm1119 = vcmp.eq.f32.partialorder %v763, 0.0
    %v1120 = vand.u32 %v763, 2147483648
    %v1121 = vsel %vm1119, %v1120, %v1118
    %v1122 = vrsqrt.pop %v765
    %v1123 = vmul.f32 %v765, %v1122
    %vm1124 = vcmp.eq.f32.partialorder %v765, inf
    %v1125 = vsel %vm1124, %v765, %v1123
    %vm1126 = vcmp.eq.f32.partialorder %v765, 0.0
    %v1127 = vand.u32 %v765, 2147483648
    %v1128 = vsel %vm1126, %v1127, %v1125
    %v1129 = vrsqrt.pop %v767
    %v1130 = vmul.f32 %v767, %v1129
    %vm1131 = vcmp.eq.f32.partialorder %v767, inf
    %v1132 = vsel %vm1131, %v767, %v1130
    %vm1133 = vcmp.eq.f32.partialorder %v767, 0.0
    %v1134 = vand.u32 %v767, 2147483648
    %v1135 = vsel %vm1133, %v1134, %v1132
    %v1136 = vrsqrt.pop %v769
    %v1137 = vmul.f32 %v769, %v1136
    %vm1138 = vcmp.eq.f32.partialorder %v769, inf
    %v1139 = vsel %vm1138, %v769, %v1137
    %vm1140 = vcmp.eq.f32.partialorder %v769, 0.0
    %v1141 = vand.u32 %v769, 2147483648
    %v1142 = vsel %vm1140, %v1141, %v1139
    %v1143 = vrsqrt.pop %v771
    %v1144 = vmul.f32 %v771, %v1143
    %vm1145 = vcmp.eq.f32.partialorder %v771, inf
    %v1146 = vsel %vm1145, %v771, %v1144
    %vm1147 = vcmp.eq.f32.partialorder %v771, 0.0
    %v1148 = vand.u32 %v771, 2147483648
    %v1149 = vsel %vm1147, %v1148, %v1146
    %v1150 = vrsqrt.pop %v773
    %v1151 = vmul.f32 %v773, %v1150
    %vm1152 = vcmp.eq.f32.partialorder %v773, inf
    %v1153 = vsel %vm1152, %v773, %v1151
    %vm1154 = vcmp.eq.f32.partialorder %v773, 0.0
    %v1155 = vand.u32 %v773, 2147483648
    %v1156 = vsel %vm1154, %v1155, %v1153
    %v1157 = vrsqrt.pop %v775
    %v1158 = vmul.f32 %v775, %v1157
    %vm1159 = vcmp.eq.f32.partialorder %v775, inf
    %v1160 = vsel %vm1159, %v775, %v1158
    %vm1161 = vcmp.eq.f32.partialorder %v775, 0.0
    %v1162 = vand.u32 %v775, 2147483648
    %v1163 = vsel %vm1161, %v1162, %v1160
    %v1164 = vrsqrt.pop %v777
    %v1165 = vmul.f32 %v777, %v1164
    %vm1166 = vcmp.eq.f32.partialorder %v777, inf
    %v1167 = vsel %vm1166, %v777, %v1165
    %vm1168 = vcmp.eq.f32.partialorder %v777, 0.0
    %v1169 = vand.u32 %v777, 2147483648
    %v1170 = vsel %vm1168, %v1169, %v1167
    %v1171 = vrsqrt.pop %v779
    %v1172 = vmul.f32 %v779, %v1171
    %vm1173 = vcmp.eq.f32.partialorder %v779, inf
    %v1174 = vsel %vm1173, %v779, %v1172
    %vm1175 = vcmp.eq.f32.partialorder %v779, 0.0
    %v1176 = vand.u32 %v779, 2147483648
    %v1177 = vsel %vm1175, %v1176, %v1174
    %v1178 = vrsqrt.pop %v781
    %v1179 = vmul.f32 %v781, %v1178
    %vm1180 = vcmp.eq.f32.partialorder %v781, inf
    %v1181 = vsel %vm1180, %v781, %v1179
    %vm1182 = vcmp.eq.f32.partialorder %v781, 0.0
    %v1183 = vand.u32 %v781, 2147483648
    %v1184 = vsel %vm1182, %v1183, %v1181
    %v1185 = vrsqrt.pop %v783
    %v1186 = vmul.f32 %v783, %v1185
    %vm1187 = vcmp.eq.f32.partialorder %v783, inf
    %v1188 = vsel %vm1187, %v783, %v1186
    %vm1189 = vcmp.eq.f32.partialorder %v783, 0.0
    %v1190 = vand.u32 %v783, 2147483648
    %v1191 = vsel %vm1189, %v1190, %v1188
    %v1192 = vrsqrt.pop %v785
    %v1193 = vmul.f32 %v785, %v1192
    %vm1194 = vcmp.eq.f32.partialorder %v785, inf
    %v1195 = vsel %vm1194, %v785, %v1193
    %vm1196 = vcmp.eq.f32.partialorder %v785, 0.0
    %v1197 = vand.u32 %v785, 2147483648
    %v1198 = vsel %vm1196, %v1197, %v1195
    %v1199 = vrsqrt.pop %v787
    %v1200 = vmul.f32 %v787, %v1199
    %vm1201 = vcmp.eq.f32.partialorder %v787, inf
    %v1202 = vsel %vm1201, %v787, %v1200
    %vm1203 = vcmp.eq.f32.partialorder %v787, 0.0
    %v1204 = vand.u32 %v787, 2147483648
    %v1205 = vsel %vm1203, %v1204, %v1202
    %v1206 = vrsqrt.pop %v789
    %v1207 = vmul.f32 %v789, %v1206
    %vm1208 = vcmp.eq.f32.partialorder %v789, inf
    %v1209 = vsel %vm1208, %v789, %v1207
    %vm1210 = vcmp.eq.f32.partialorder %v789, 0.0
    %v1211 = vand.u32 %v789, 2147483648
    %v1212 = vsel %vm1210, %v1211, %v1209
    %v1213 = vrsqrt.pop %v791
    %v1214 = vmul.f32 %v791, %v1213
    %vm1215 = vcmp.eq.f32.partialorder %v791, inf
    %v1216 = vsel %vm1215, %v791, %v1214
    %vm1217 = vcmp.eq.f32.partialorder %v791, 0.0
    %v1218 = vand.u32 %v791, 2147483648
    %v1219 = vsel %vm1217, %v1218, %v1216
    %v1220 = vrsqrt.pop %v793
    %v1221 = vmul.f32 %v793, %v1220
    %vm1222 = vcmp.eq.f32.partialorder %v793, inf
    %v1223 = vsel %vm1222, %v793, %v1221
    %vm1224 = vcmp.eq.f32.partialorder %v793, 0.0
    %v1225 = vand.u32 %v793, 2147483648
    %v1226 = vsel %vm1224, %v1225, %v1223
    %v1227 = vrsqrt.pop %v795
    %v1228 = vmul.f32 %v795, %v1227
    %vm1229 = vcmp.eq.f32.partialorder %v795, inf
    %v1230 = vsel %vm1229, %v795, %v1228
    %vm1231 = vcmp.eq.f32.partialorder %v795, 0.0
    %v1232 = vand.u32 %v795, 2147483648
    %v1233 = vsel %vm1231, %v1232, %v1230
    %v1234 = vrsqrt.pop %v797
    %v1235 = vmul.f32 %v797, %v1234
    %vm1236 = vcmp.eq.f32.partialorder %v797, inf
    %v1237 = vsel %vm1236, %v797, %v1235
    %vm1238 = vcmp.eq.f32.partialorder %v797, 0.0
    %v1239 = vand.u32 %v797, 2147483648
    %v1240 = vsel %vm1238, %v1239, %v1237
    %v1241 = vrsqrt.pop %v799
    %v1242 = vmul.f32 %v799, %v1241
    %vm1243 = vcmp.eq.f32.partialorder %v799, inf
    %v1244 = vsel %vm1243, %v799, %v1242
    %vm1245 = vcmp.eq.f32.partialorder %v799, 0.0
    %v1246 = vand.u32 %v799, 2147483648
    %v1247 = vsel %vm1245, %v1246, %v1244
    %v1248 = vmul.f32 %v806, 0.08
    %v1249 = vmul.f32 %v813, 0.08
    %v1250 = vmul.f32 %v820, 0.08
    %v1251 = vmul.f32 %v827, 0.08
    %v1252 = vmul.f32 %v834, 0.08
    %v1253 = vmul.f32 %v841, 0.08
    %v1254 = vmul.f32 %v848, 0.08
    %v1255 = vmul.f32 %v855, 0.08
    %v1256 = vmul.f32 %v862, 0.08
    %v1257 = vmul.f32 %v869, 0.08
    %v1258 = vmul.f32 %v876, 0.08
    %v1259 = vmul.f32 %v883, 0.08
    %v1260 = vmul.f32 %v890, 0.08
    %v1261 = vmul.f32 %v897, 0.08
    %v1262 = vmul.f32 %v904, 0.08
    %v1263 = vmul.f32 %v911, 0.08
    %v1264 = vmul.f32 %v918, 0.08
    %v1265 = vmul.f32 %v925, 0.08
    %v1266 = vmul.f32 %v932, 0.08
    %v1267 = vmul.f32 %v939, 0.08
    %v1268 = vmul.f32 %v946, 0.08
    %v1269 = vmul.f32 %v953, 0.08
    %v1270 = vmul.f32 %v960, 0.08
    %v1271 = vmul.f32 %v967, 0.08
    %v1272 = vmul.f32 %v974, 0.08
    %v1273 = vmul.f32 %v981, 0.08
    %v1274 = vmul.f32 %v988, 0.08
    %v1275 = vmul.f32 %v995, 0.08
    %v1276 = vmul.f32 %v1002, 0.08
    %v1277 = vmul.f32 %v1009, 0.08
    %v1278 = vmul.f32 %v1016, 0.08
    %v1279 = vmul.f32 %v1023, 0.08
    %v1280 = vmul.f32 %v1030, 0.08
    %v1281 = vmul.f32 %v1037, 0.08
    %v1282 = vmul.f32 %v1044, 0.08
    %v1283 = vmul.f32 %v1051, 0.08
    %v1284 = vmul.f32 %v1058, 0.08
    %v1285 = vmul.f32 %v1065, 0.08
    %v1286 = vmul.f32 %v1072, 0.08
    %v1287 = vmul.f32 %v1079, 0.08
    %v1288 = vmul.f32 %v1086, 0.08
    %v1289 = vmul.f32 %v1093, 0.08
    %v1290 = vmul.f32 %v1100, 0.08
    %v1291 = vmul.f32 %v1107, 0.08
    %v1292 = vmul.f32 %v1114, 0.08
    %v1293 = vmul.f32 %v1121, 0.08
    %v1294 = vmul.f32 %v1128, 0.08
    %v1295 = vmul.f32 %v1135, 0.08
    %v1296 = vmul.f32 %v1142, 0.08
    %v1297 = vmul.f32 %v1149, 0.08
    %v1298 = vmul.f32 %v1156, 0.08
    %v1299 = vmul.f32 %v1163, 0.08
    %v1300 = vmul.f32 %v1170, 0.08
    %v1301 = vmul.f32 %v1177, 0.08
    %v1302 = vmul.f32 %v1184, 0.08
    %v1303 = vmul.f32 %v1191, 0.08
    %v1304 = vmul.f32 %v1198, 0.08
    %v1305 = vmul.f32 %v1205, 0.08
    %v1306 = vmul.f32 %v1212, 0.08
    %v1307 = vmul.f32 %v1219, 0.08
    %v1308 = vmul.f32 %v1226, 0.08
    %v1309 = vmul.f32 %v1233, 0.08
    %v1310 = vmul.f32 %v1240, 0.08
    %v1311 = vmul.f32 %v1247, 0.08
    %vm1312 = vcmp.gt.f32.partialorder %v1248, 1e-10
    %vm1313 = vcmp.gt.f32.partialorder %v1249, 1e-10
    %vm1314 = vcmp.gt.f32.partialorder %v1250, 1e-10
    %vm1315 = vcmp.gt.f32.partialorder %v1251, 1e-10
    %vm1316 = vcmp.gt.f32.partialorder %v1252, 1e-10
    %vm1317 = vcmp.gt.f32.partialorder %v1253, 1e-10
    %vm1318 = vcmp.gt.f32.partialorder %v1254, 1e-10
    %vm1319 = vcmp.gt.f32.partialorder %v1255, 1e-10
    %vm1320 = vcmp.gt.f32.partialorder %v1256, 1e-10
    %vm1321 = vcmp.gt.f32.partialorder %v1257, 1e-10
    %vm1322 = vcmp.gt.f32.partialorder %v1258, 1e-10
    %vm1323 = vcmp.gt.f32.partialorder %v1259, 1e-10
    %vm1324 = vcmp.gt.f32.partialorder %v1260, 1e-10
    %vm1325 = vcmp.gt.f32.partialorder %v1261, 1e-10
    %vm1326 = vcmp.gt.f32.partialorder %v1262, 1e-10
    %vm1327 = vcmp.gt.f32.partialorder %v1263, 1e-10
    %vm1328 = vcmp.gt.f32.partialorder %v1264, 1e-10
    %vm1329 = vcmp.gt.f32.partialorder %v1265, 1e-10
    %vm1330 = vcmp.gt.f32.partialorder %v1266, 1e-10
    %vm1331 = vcmp.gt.f32.partialorder %v1267, 1e-10
    %vm1332 = vcmp.gt.f32.partialorder %v1268, 1e-10
    %vm1333 = vcmp.gt.f32.partialorder %v1269, 1e-10
    %vm1334 = vcmp.gt.f32.partialorder %v1270, 1e-10
    %vm1335 = vcmp.gt.f32.partialorder %v1271, 1e-10
    %vm1336 = vcmp.gt.f32.partialorder %v1272, 1e-10
    %vm1337 = vcmp.gt.f32.partialorder %v1273, 1e-10
    %vm1338 = vcmp.gt.f32.partialorder %v1274, 1e-10
    %vm1339 = vcmp.gt.f32.partialorder %v1275, 1e-10
    %vm1340 = vcmp.gt.f32.partialorder %v1276, 1e-10
    %vm1341 = vcmp.gt.f32.partialorder %v1277, 1e-10
    %vm1342 = vcmp.gt.f32.partialorder %v1278, 1e-10
    %vm1343 = vcmp.gt.f32.partialorder %v1279, 1e-10
    %vm1344 = vcmp.gt.f32.partialorder %v1280, 1e-10
    %vm1345 = vcmp.gt.f32.partialorder %v1281, 1e-10
    %vm1346 = vcmp.gt.f32.partialorder %v1282, 1e-10
    %vm1347 = vcmp.gt.f32.partialorder %v1283, 1e-10
    %vm1348 = vcmp.gt.f32.partialorder %v1284, 1e-10
    %vm1349 = vcmp.gt.f32.partialorder %v1285, 1e-10
    %vm1350 = vcmp.gt.f32.partialorder %v1286, 1e-10
    %vm1351 = vcmp.gt.f32.partialorder %v1287, 1e-10
    %vm1352 = vcmp.gt.f32.partialorder %v1288, 1e-10
    %vm1353 = vcmp.gt.f32.partialorder %v1289, 1e-10
    %vm1354 = vcmp.gt.f32.partialorder %v1290, 1e-10
    %vm1355 = vcmp.gt.f32.partialorder %v1291, 1e-10
    %vm1356 = vcmp.gt.f32.partialorder %v1292, 1e-10
    %vm1357 = vcmp.gt.f32.partialorder %v1293, 1e-10
    %vm1358 = vcmp.gt.f32.partialorder %v1294, 1e-10
    %vm1359 = vcmp.gt.f32.partialorder %v1295, 1e-10
    %vm1360 = vcmp.gt.f32.partialorder %v1296, 1e-10
    %vm1361 = vcmp.gt.f32.partialorder %v1297, 1e-10
    %vm1362 = vcmp.gt.f32.partialorder %v1298, 1e-10
    %vm1363 = vcmp.gt.f32.partialorder %v1299, 1e-10
    %vm1364 = vcmp.gt.f32.partialorder %v1300, 1e-10
    %vm1365 = vcmp.gt.f32.partialorder %v1301, 1e-10
    %vm1366 = vcmp.gt.f32.partialorder %v1302, 1e-10
    %vm1367 = vcmp.gt.f32.partialorder %v1303, 1e-10
    %vm1368 = vcmp.gt.f32.partialorder %v1304, 1e-10
    %vm1369 = vcmp.gt.f32.partialorder %v1305, 1e-10
    %vm1370 = vcmp.gt.f32.partialorder %v1306, 1e-10
    %vm1371 = vcmp.gt.f32.partialorder %v1307, 1e-10
    %vm1372 = vcmp.gt.f32.partialorder %v1308, 1e-10
    %vm1373 = vcmp.gt.f32.partialorder %v1309, 1e-10
    %vm1374 = vcmp.gt.f32.partialorder %v1310, 1e-10
    %vm1375 = vcmp.gt.f32.partialorder %v1311, 1e-10
    %v1376 = vsel %vm1312, 1, 0
    %v1377 = vsel %vm1313, 1, 0
    %v1378 = vsel %vm1314, 1, 0
    %v1379 = vsel %vm1315, 1, 0
    %v1380 = vsel %vm1316, 1, 0
    %v1381 = vsel %vm1317, 1, 0
    %v1382 = vsel %vm1318, 1, 0
    %v1383 = vsel %vm1319, 1, 0
    %v1384 = vsel %vm1320, 1, 0
    %v1385 = vsel %vm1321, 1, 0
    %v1386 = vsel %vm1322, 1, 0
    %v1387 = vsel %vm1323, 1, 0
    %v1388 = vsel %vm1324, 1, 0
    %v1389 = vsel %vm1325, 1, 0
    %v1390 = vsel %vm1326, 1, 0
    %v1391 = vsel %vm1327, 1, 0
    %v1392 = vsel %vm1328, 1, 0
    %v1393 = vsel %vm1329, 1, 0
    %v1394 = vsel %vm1330, 1, 0
    %v1395 = vsel %vm1331, 1, 0
    %v1396 = vsel %vm1332, 1, 0
    %v1397 = vsel %vm1333, 1, 0
    %v1398 = vsel %vm1334, 1, 0
    %v1399 = vsel %vm1335, 1, 0
    %v1400 = vsel %vm1336, 1, 0
    %v1401 = vsel %vm1337, 1, 0
    %v1402 = vsel %vm1338, 1, 0
    %v1403 = vsel %vm1339, 1, 0
    %v1404 = vsel %vm1340, 1, 0
    %v1405 = vsel %vm1341, 1, 0
    %v1406 = vsel %vm1342, 1, 0
    %v1407 = vsel %vm1343, 1, 0
    %v1408 = vsel %vm1344, 1, 0
    %v1409 = vsel %vm1345, 1, 0
    %v1410 = vsel %vm1346, 1, 0
    %v1411 = vsel %vm1347, 1, 0
    %v1412 = vsel %vm1348, 1, 0
    %v1413 = vsel %vm1349, 1, 0
    %v1414 = vsel %vm1350, 1, 0
    %v1415 = vsel %vm1351, 1, 0
    %v1416 = vsel %vm1352, 1, 0
    %v1417 = vsel %vm1353, 1, 0
    %v1418 = vsel %vm1354, 1, 0
    %v1419 = vsel %vm1355, 1, 0
    %v1420 = vsel %vm1356, 1, 0
    %v1421 = vsel %vm1357, 1, 0
    %v1422 = vsel %vm1358, 1, 0
    %v1423 = vsel %vm1359, 1, 0
    %v1424 = vsel %vm1360, 1, 0
    %v1425 = vsel %vm1361, 1, 0
    %v1426 = vsel %vm1362, 1, 0
    %v1427 = vsel %vm1363, 1, 0
    %v1428 = vsel %vm1364, 1, 0
    %v1429 = vsel %vm1365, 1, 0
    %v1430 = vsel %vm1366, 1, 0
    %v1431 = vsel %vm1367, 1, 0
    %v1432 = vsel %vm1368, 1, 0
    %v1433 = vsel %vm1369, 1, 0
    %v1434 = vsel %vm1370, 1, 0
    %v1435 = vsel %vm1371, 1, 0
    %v1436 = vsel %vm1372, 1, 0
    %v1437 = vsel %vm1373, 1, 0
    %v1438 = vsel %vm1374, 1, 0
    %v1439 = vsel %vm1375, 1, 0
    %v1440 = vcvt.s32.f32 %v1376
    %v1441 = vcvt.s32.f32 %v1377
    %v1442 = vcvt.s32.f32 %v1378
    %v1443 = vcvt.s32.f32 %v1379
    %v1444 = vcvt.s32.f32 %v1380
    %v1445 = vcvt.s32.f32 %v1381
    %v1446 = vcvt.s32.f32 %v1382
    %v1447 = vcvt.s32.f32 %v1383
    %v1448 = vcvt.s32.f32 %v1384
    %v1449 = vcvt.s32.f32 %v1385
    %v1450 = vcvt.s32.f32 %v1386
    %v1451 = vcvt.s32.f32 %v1387
    %v1452 = vcvt.s32.f32 %v1388
    %v1453 = vcvt.s32.f32 %v1389
    %v1454 = vcvt.s32.f32 %v1390
    %v1455 = vcvt.s32.f32 %v1391
    %v1456 = vcvt.s32.f32 %v1392
    %v1457 = vcvt.s32.f32 %v1393
    %v1458 = vcvt.s32.f32 %v1394
    %v1459 = vcvt.s32.f32 %v1395
    %v1460 = vcvt.s32.f32 %v1396
    %v1461 = vcvt.s32.f32 %v1397
    %v1462 = vcvt.s32.f32 %v1398
    %v1463 = vcvt.s32.f32 %v1399
    %v1464 = vcvt.s32.f32 %v1400
    %v1465 = vcvt.s32.f32 %v1401
    %v1466 = vcvt.s32.f32 %v1402
    %v1467 = vcvt.s32.f32 %v1403
    %v1468 = vcvt.s32.f32 %v1404
    %v1469 = vcvt.s32.f32 %v1405
    %v1470 = vcvt.s32.f32 %v1406
    %v1471 = vcvt.s32.f32 %v1407
    %v1472 = vcvt.s32.f32 %v1408
    %v1473 = vcvt.s32.f32 %v1409
    %v1474 = vcvt.s32.f32 %v1410
    %v1475 = vcvt.s32.f32 %v1411
    %v1476 = vcvt.s32.f32 %v1412
    %v1477 = vcvt.s32.f32 %v1413
    %v1478 = vcvt.s32.f32 %v1414
    %v1479 = vcvt.s32.f32 %v1415
    %v1480 = vcvt.s32.f32 %v1416
    %v1481 = vcvt.s32.f32 %v1417
    %v1482 = vcvt.s32.f32 %v1418
    %v1483 = vcvt.s32.f32 %v1419
    %v1484 = vcvt.s32.f32 %v1420
    %v1485 = vcvt.s32.f32 %v1421
    %v1486 = vcvt.s32.f32 %v1422
    %v1487 = vcvt.s32.f32 %v1423
    %v1488 = vcvt.s32.f32 %v1424
    %v1489 = vcvt.s32.f32 %v1425
    %v1490 = vcvt.s32.f32 %v1426
    %v1491 = vcvt.s32.f32 %v1427
    %v1492 = vcvt.s32.f32 %v1428
    %v1493 = vcvt.s32.f32 %v1429
    %v1494 = vcvt.s32.f32 %v1430
    %v1495 = vcvt.s32.f32 %v1431
    %v1496 = vcvt.s32.f32 %v1432
    %v1497 = vcvt.s32.f32 %v1433
    %v1498 = vcvt.s32.f32 %v1434
    %v1499 = vcvt.s32.f32 %v1435
    %v1500 = vcvt.s32.f32 %v1436
    %v1501 = vcvt.s32.f32 %v1437
    %v1502 = vcvt.s32.f32 %v1438
    %v1503 = vcvt.s32.f32 %v1439
    %v1504 = vmul.f32 %v1248, %v1440
    %v1505 = vmul.f32 %v1249, %v1441
    %v1506 = vmul.f32 %v1250, %v1442
    %v1507 = vmul.f32 %v1251, %v1443
    %v1508 = vmul.f32 %v1252, %v1444
    %v1509 = vmul.f32 %v1253, %v1445
    %v1510 = vmul.f32 %v1254, %v1446
    %v1511 = vmul.f32 %v1255, %v1447
    %v1512 = vmul.f32 %v1256, %v1448
    %v1513 = vmul.f32 %v1257, %v1449
    %v1514 = vmul.f32 %v1258, %v1450
    %v1515 = vmul.f32 %v1259, %v1451
    %v1516 = vmul.f32 %v1260, %v1452
    %v1517 = vmul.f32 %v1261, %v1453
    %v1518 = vmul.f32 %v1262, %v1454
    %v1519 = vmul.f32 %v1263, %v1455
    %v1520 = vmul.f32 %v1264, %v1456
    %v1521 = vmul.f32 %v1265, %v1457
    %v1522 = vmul.f32 %v1266, %v1458
    %v1523 = vmul.f32 %v1267, %v1459
    %v1524 = vmul.f32 %v1268, %v1460
    %v1525 = vmul.f32 %v1269, %v1461
    %v1526 = vmul.f32 %v1270, %v1462
    %v1527 = vmul.f32 %v1271, %v1463
    %v1528 = vmul.f32 %v1272, %v1464
    %v1529 = vmul.f32 %v1273, %v1465
    %v1530 = vmul.f32 %v1274, %v1466
    %v1531 = vmul.f32 %v1275, %v1467
    %v1532 = vmul.f32 %v1276, %v1468
    %v1533 = vmul.f32 %v1277, %v1469
    %v1534 = vmul.f32 %v1278, %v1470
    %v1535 = vmul.f32 %v1279, %v1471
    %v1536 = vmul.f32 %v1280, %v1472
    %v1537 = vmul.f32 %v1281, %v1473
    %v1538 = vmul.f32 %v1282, %v1474
    %v1539 = vmul.f32 %v1283, %v1475
    %v1540 = vmul.f32 %v1284, %v1476
    %v1541 = vmul.f32 %v1285, %v1477
    %v1542 = vmul.f32 %v1286, %v1478
    %v1543 = vmul.f32 %v1287, %v1479
    %v1544 = vmul.f32 %v1288, %v1480
    %v1545 = vmul.f32 %v1289, %v1481
    %v1546 = vmul.f32 %v1290, %v1482
    %v1547 = vmul.f32 %v1291, %v1483
    %v1548 = vmul.f32 %v1292, %v1484
    %v1549 = vmul.f32 %v1293, %v1485
    %v1550 = vmul.f32 %v1294, %v1486
    %v1551 = vmul.f32 %v1295, %v1487
    %v1552 = vmul.f32 %v1296, %v1488
    %v1553 = vmul.f32 %v1297, %v1489
    %v1554 = vmul.f32 %v1298, %v1490
    %v1555 = vmul.f32 %v1299, %v1491
    %v1556 = vmul.f32 %v1300, %v1492
    %v1557 = vmul.f32 %v1301, %v1493
    %v1558 = vmul.f32 %v1302, %v1494
    %v1559 = vmul.f32 %v1303, %v1495
    %v1560 = vmul.f32 %v1304, %v1496
    %v1561 = vmul.f32 %v1305, %v1497
    %v1562 = vmul.f32 %v1306, %v1498
    %v1563 = vmul.f32 %v1307, %v1499
    %v1564 = vmul.f32 %v1308, %v1500
    %v1565 = vmul.f32 %v1309, %v1501
    %v1566 = vmul.f32 %v1310, %v1502
    %v1567 = vmul.f32 %v1311, %v1503
    %v1568 = vsub.f32 1.0, %v1440
    %v1569 = vsub.f32 1.0, %v1441
    %v1570 = vsub.f32 1.0, %v1442
    %v1571 = vsub.f32 1.0, %v1443
    %v1572 = vsub.f32 1.0, %v1444
    %v1573 = vsub.f32 1.0, %v1445
    %v1574 = vsub.f32 1.0, %v1446
    %v1575 = vsub.f32 1.0, %v1447
    %v1576 = vsub.f32 1.0, %v1448
    %v1577 = vsub.f32 1.0, %v1449
    %v1578 = vsub.f32 1.0, %v1450
    %v1579 = vsub.f32 1.0, %v1451
    %v1580 = vsub.f32 1.0, %v1452
    %v1581 = vsub.f32 1.0, %v1453
    %v1582 = vsub.f32 1.0, %v1454
    %v1583 = vsub.f32 1.0, %v1455
    %v1584 = vsub.f32 1.0, %v1456
    %v1585 = vsub.f32 1.0, %v1457
    %v1586 = vsub.f32 1.0, %v1458
    %v1587 = vsub.f32 1.0, %v1459
    %v1588 = vsub.f32 1.0, %v1460
    %v1589 = vsub.f32 1.0, %v1461
    %v1590 = vsub.f32 1.0, %v1462
    %v1591 = vsub.f32 1.0, %v1463
    %v1592 = vsub.f32 1.0, %v1464
    %v1593 = vsub.f32 1.0, %v1465
    %v1594 = vsub.f32 1.0, %v1466
    %v1595 = vsub.f32 1.0, %v1467
    %v1596 = vsub.f32 1.0, %v1468
    %v1597 = vsub.f32 1.0, %v1469
    %v1598 = vsub.f32 1.0, %v1470
    %v1599 = vsub.f32 1.0, %v1471
    %v1600 = vsub.f32 1.0, %v1472
    %v1601 = vsub.f32 1.0, %v1473
    %v1602 = vsub.f32 1.0, %v1474
    %v1603 = vsub.f32 1.0, %v1475
    %v1604 = vsub.f32 1.0, %v1476
    %v1605 = vsub.f32 1.0, %v1477
    %v1606 = vsub.f32 1.0, %v1478
    %v1607 = vsub.f32 1.0, %v1479
    %v1608 = vsub.f32 1.0, %v1480
    %v1609 = vsub.f32 1.0, %v1481
    %v1610 = vsub.f32 1.0, %v1482
    %v1611 = vsub.f32 1.0, %v1483
    %v1612 = vsub.f32 1.0, %v1484
    %v1613 = vsub.f32 1.0, %v1485
    %v1614 = vsub.f32 1.0, %v1486
    %v1615 = vsub.f32 1.0, %v1487
    %v1616 = vsub.f32 1.0, %v1488
    %v1617 = vsub.f32 1.0, %v1489
    %v1618 = vsub.f32 1.0, %v1490
    %v1619 = vsub.f32 1.0, %v1491
    %v1620 = vsub.f32 1.0, %v1492
    %v1621 = vsub.f32 1.0, %v1493
    %v1622 = vsub.f32 1.0, %v1494
    %v1623 = vsub.f32 1.0, %v1495
    %v1624 = vsub.f32 1.0, %v1496
    %v1625 = vsub.f32 1.0, %v1497
    %v1626 = vsub.f32 1.0, %v1498
    %v1627 = vsub.f32 1.0, %v1499
    %v1628 = vsub.f32 1.0, %v1500
    %v1629 = vsub.f32 1.0, %v1501
    %v1630 = vsub.f32 1.0, %v1502
    %v1631 = vsub.f32 1.0, %v1503
    %v1632 = vmul.f32 %v1568, 1e-10
    %v1633 = vmul.f32 %v1569, 1e-10
    %v1634 = vmul.f32 %v1570, 1e-10
    %v1635 = vmul.f32 %v1571, 1e-10
    %v1636 = vmul.f32 %v1572, 1e-10
    %v1637 = vmul.f32 %v1573, 1e-10
    %v1638 = vmul.f32 %v1574, 1e-10
    %v1639 = vmul.f32 %v1575, 1e-10
    %v1640 = vmul.f32 %v1576, 1e-10
    %v1641 = vmul.f32 %v1577, 1e-10
    %v1642 = vmul.f32 %v1578, 1e-10
    %v1643 = vmul.f32 %v1579, 1e-10
    %v1644 = vmul.f32 %v1580, 1e-10
    %v1645 = vmul.f32 %v1581, 1e-10
    %v1646 = vmul.f32 %v1582, 1e-10
    %v1647 = vmul.f32 %v1583, 1e-10
    %v1648 = vmul.f32 %v1584, 1e-10
    %v1649 = vmul.f32 %v1585, 1e-10
    %v1650 = vmul.f32 %v1586, 1e-10
    %v1651 = vmul.f32 %v1587, 1e-10
    %v1652 = vmul.f32 %v1588, 1e-10
    %v1653 = vmul.f32 %v1589, 1e-10
    %v1654 = vmul.f32 %v1590, 1e-10
    %v1655 = vmul.f32 %v1591, 1e-10
    %v1656 = vmul.f32 %v1592, 1e-10
    %v1657 = vmul.f32 %v1593, 1e-10
    %v1658 = vmul.f32 %v1594, 1e-10
    %v1659 = vmul.f32 %v1595, 1e-10
    %v1660 = vmul.f32 %v1596, 1e-10
    %v1661 = vmul.f32 %v1597, 1e-10
    %v1662 = vmul.f32 %v1598, 1e-10
    %v1663 = vmul.f32 %v1599, 1e-10
    %v1664 = vmul.f32 %v1600, 1e-10
    %v1665 = vmul.f32 %v1601, 1e-10
    %v1666 = vmul.f32 %v1602, 1e-10
    %v1667 = vmul.f32 %v1603, 1e-10
    %v1668 = vmul.f32 %v1604, 1e-10
    %v1669 = vmul.f32 %v1605, 1e-10
    %v1670 = vmul.f32 %v1606, 1e-10
    %v1671 = vmul.f32 %v1607, 1e-10
    %v1672 = vmul.f32 %v1608, 1e-10
    %v1673 = vmul.f32 %v1609, 1e-10
    %v1674 = vmul.f32 %v1610, 1e-10
    %v1675 = vmul.f32 %v1611, 1e-10
    %v1676 = vmul.f32 %v1612, 1e-10
    %v1677 = vmul.f32 %v1613, 1e-10
    %v1678 = vmul.f32 %v1614, 1e-10
    %v1679 = vmul.f32 %v1615, 1e-10
    %v1680 = vmul.f32 %v1616, 1e-10
    %v1681 = vmul.f32 %v1617, 1e-10
    %v1682 = vmul.f32 %v1618, 1e-10
    %v1683 = vmul.f32 %v1619, 1e-10
    %v1684 = vmul.f32 %v1620, 1e-10
    %v1685 = vmul.f32 %v1621, 1e-10
    %v1686 = vmul.f32 %v1622, 1e-10
    %v1687 = vmul.f32 %v1623, 1e-10
    %v1688 = vmul.f32 %v1624, 1e-10
    %v1689 = vmul.f32 %v1625, 1e-10
    %v1690 = vmul.f32 %v1626, 1e-10
    %v1691 = vmul.f32 %v1627, 1e-10
    %v1692 = vmul.f32 %v1628, 1e-10
    %v1693 = vmul.f32 %v1629, 1e-10
    %v1694 = vmul.f32 %v1630, 1e-10
    %v1695 = vmul.f32 %v1631, 1e-10
    %v1696 = vadd.f32 %v1504, %v1632
    %v1697 = vadd.f32 %v1505, %v1633
    %v1698 = vadd.f32 %v1506, %v1634
    %v1699 = vadd.f32 %v1507, %v1635
    %v1700 = vadd.f32 %v1508, %v1636
    %v1701 = vadd.f32 %v1509, %v1637
    %v1702 = vadd.f32 %v1510, %v1638
    %v1703 = vadd.f32 %v1511, %v1639
    %v1704 = vadd.f32 %v1512, %v1640
    %v1705 = vadd.f32 %v1513, %v1641
    %v1706 = vadd.f32 %v1514, %v1642
    %v1707 = vadd.f32 %v1515, %v1643
    %v1708 = vadd.f32 %v1516, %v1644
    %v1709 = vadd.f32 %v1517, %v1645
    %v1710 = vadd.f32 %v1518, %v1646
    %v1711 = vadd.f32 %v1519, %v1647
    %v1712 = vadd.f32 %v1520, %v1648
    %v1713 = vadd.f32 %v1521, %v1649
    %v1714 = vadd.f32 %v1522, %v1650
    %v1715 = vadd.f32 %v1523, %v1651
    %v1716 = vadd.f32 %v1524, %v1652
    %v1717 = vadd.f32 %v1525, %v1653
    %v1718 = vadd.f32 %v1526, %v1654
    %v1719 = vadd.f32 %v1527, %v1655
    %v1720 = vadd.f32 %v1528, %v1656
    %v1721 = vadd.f32 %v1529, %v1657
    %v1722 = vadd.f32 %v1530, %v1658
    %v1723 = vadd.f32 %v1531, %v1659
    %v1724 = vadd.f32 %v1532, %v1660
    %v1725 = vadd.f32 %v1533, %v1661
    %v1726 = vadd.f32 %v1534, %v1662
    %v1727 = vadd.f32 %v1535, %v1663
    %v1728 = vadd.f32 %v1536, %v1664
    %v1729 = vadd.f32 %v1537, %v1665
    %v1730 = vadd.f32 %v1538, %v1666
    %v1731 = vadd.f32 %v1539, %v1667
    %v1732 = vadd.f32 %v1540, %v1668
    %v1733 = vadd.f32 %v1541, %v1669
    %v1734 = vadd.f32 %v1542, %v1670
    %v1735 = vadd.f32 %v1543, %v1671
    %v1736 = vadd.f32 %v1544, %v1672
    %v1737 = vadd.f32 %v1545, %v1673
    %v1738 = vadd.f32 %v1546, %v1674
    %v1739 = vadd.f32 %v1547, %v1675
    %v1740 = vadd.f32 %v1548, %v1676
    %v1741 = vadd.f32 %v1549, %v1677
    %v1742 = vadd.f32 %v1550, %v1678
    %v1743 = vadd.f32 %v1551, %v1679
    %v1744 = vadd.f32 %v1552, %v1680
    %v1745 = vadd.f32 %v1553, %v1681
    %v1746 = vadd.f32 %v1554, %v1682
    %v1747 = vadd.f32 %v1555, %v1683
    %v1748 = vadd.f32 %v1556, %v1684
    %v1749 = vadd.f32 %v1557, %v1685
    %v1750 = vadd.f32 %v1558, %v1686
    %v1751 = vadd.f32 %v1559, %v1687
    %v1752 = vadd.f32 %v1560, %v1688
    %v1753 = vadd.f32 %v1561, %v1689
    %v1754 = vadd.f32 %v1562, %v1690
    %v1755 = vadd.f32 %v1563, %v1691
    %v1756 = vadd.f32 %v1564, %v1692
    %v1757 = vadd.f32 %v1565, %v1693
    %v1758 = vadd.f32 %v1566, %v1694
    %v1759 = vadd.f32 %v1567, %v1695
    %v1760 = vmin.f32 %v1696, 0.99
    %v1761 = vmin.f32 %v1697, 0.99
    %v1762 = vmin.f32 %v1698, 0.99
    %v1763 = vmin.f32 %v1699, 0.99
    %v1764 = vmin.f32 %v1700, 0.99
    %v1765 = vmin.f32 %v1701, 0.99
    %v1766 = vmin.f32 %v1702, 0.99
    %v1767 = vmin.f32 %v1703, 0.99
    %v1768 = vmin.f32 %v1704, 0.99
    %v1769 = vmin.f32 %v1705, 0.99
    %v1770 = vmin.f32 %v1706, 0.99
    %v1771 = vmin.f32 %v1707, 0.99
    %v1772 = vmin.f32 %v1708, 0.99
    %v1773 = vmin.f32 %v1709, 0.99
    %v1774 = vmin.f32 %v1710, 0.99
    %v1775 = vmin.f32 %v1711, 0.99
    %v1776 = vmin.f32 %v1712, 0.99
    %v1777 = vmin.f32 %v1713, 0.99
    %v1778 = vmin.f32 %v1714, 0.99
    %v1779 = vmin.f32 %v1715, 0.99
    %v1780 = vmin.f32 %v1716, 0.99
    %v1781 = vmin.f32 %v1717, 0.99
    %v1782 = vmin.f32 %v1718, 0.99
    %v1783 = vmin.f32 %v1719, 0.99
    %v1784 = vmin.f32 %v1720, 0.99
    %v1785 = vmin.f32 %v1721, 0.99
    %v1786 = vmin.f32 %v1722, 0.99
    %v1787 = vmin.f32 %v1723, 0.99
    %v1788 = vmin.f32 %v1724, 0.99
    %v1789 = vmin.f32 %v1725, 0.99
    %v1790 = vmin.f32 %v1726, 0.99
    %v1791 = vmin.f32 %v1727, 0.99
    %v1792 = vmin.f32 %v1728, 0.99
    %v1793 = vmin.f32 %v1729, 0.99
    %v1794 = vmin.f32 %v1730, 0.99
    %v1795 = vmin.f32 %v1731, 0.99
    %v1796 = vmin.f32 %v1732, 0.99
    %v1797 = vmin.f32 %v1733, 0.99
    %v1798 = vmin.f32 %v1734, 0.99
    %v1799 = vmin.f32 %v1735, 0.99
    %v1800 = vmin.f32 %v1736, 0.99
    %v1801 = vmin.f32 %v1737, 0.99
    %v1802 = vmin.f32 %v1738, 0.99
    %v1803 = vmin.f32 %v1739, 0.99
    %v1804 = vmin.f32 %v1740, 0.99
    %v1805 = vmin.f32 %v1741, 0.99
    %v1806 = vmin.f32 %v1742, 0.99
    %v1807 = vmin.f32 %v1743, 0.99
    %v1808 = vmin.f32 %v1744, 0.99
    %v1809 = vmin.f32 %v1745, 0.99
    %v1810 = vmin.f32 %v1746, 0.99
    %v1811 = vmin.f32 %v1747, 0.99
    %v1812 = vmin.f32 %v1748, 0.99
    %v1813 = vmin.f32 %v1749, 0.99
    %v1814 = vmin.f32 %v1750, 0.99
    %v1815 = vmin.f32 %v1751, 0.99
    %v1816 = vmin.f32 %v1752, 0.99
    %v1817 = vmin.f32 %v1753, 0.99
    %v1818 = vmin.f32 %v1754, 0.99
    %v1819 = vmin.f32 %v1755, 0.99
    %v1820 = vmin.f32 %v1756, 0.99
    %v1821 = vmin.f32 %v1757, 0.99
    %v1822 = vmin.f32 %v1758, 0.99
    %v1823 = vmin.f32 %v1759, 0.99
    %v1824 = vadd.f32 %v1760, 1.0
    %v1825 = vadd.f32 %v1761, 1.0
    %v1826 = vadd.f32 %v1762, 1.0
    %v1827 = vadd.f32 %v1763, 1.0
    %v1828 = vadd.f32 %v1764, 1.0
    %v1829 = vadd.f32 %v1765, 1.0
    %v1830 = vadd.f32 %v1766, 1.0
    %v1831 = vadd.f32 %v1767, 1.0
    %v1832 = vadd.f32 %v1768, 1.0
    %v1833 = vadd.f32 %v1769, 1.0
    %v1834 = vadd.f32 %v1770, 1.0
    %v1835 = vadd.f32 %v1771, 1.0
    %v1836 = vadd.f32 %v1772, 1.0
    %v1837 = vadd.f32 %v1773, 1.0
    %v1838 = vadd.f32 %v1774, 1.0
    %v1839 = vadd.f32 %v1775, 1.0
    %v1840 = vadd.f32 %v1776, 1.0
    %v1841 = vadd.f32 %v1777, 1.0
    %v1842 = vadd.f32 %v1778, 1.0
    %v1843 = vadd.f32 %v1779, 1.0
    %v1844 = vadd.f32 %v1780, 1.0
    %v1845 = vadd.f32 %v1781, 1.0
    %v1846 = vadd.f32 %v1782, 1.0
    %v1847 = vadd.f32 %v1783, 1.0
    %v1848 = vadd.f32 %v1784, 1.0
    %v1849 = vadd.f32 %v1785, 1.0
    %v1850 = vadd.f32 %v1786, 1.0
    %v1851 = vadd.f32 %v1787, 1.0
    %v1852 = vadd.f32 %v1788, 1.0
    %v1853 = vadd.f32 %v1789, 1.0
    %v1854 = vadd.f32 %v1790, 1.0
    %v1855 = vadd.f32 %v1791, 1.0
    %v1856 = vadd.f32 %v1792, 1.0
    %v1857 = vadd.f32 %v1793, 1.0
    %v1858 = vadd.f32 %v1794, 1.0
    %v1859 = vadd.f32 %v1795, 1.0
    %v1860 = vadd.f32 %v1796, 1.0
    %v1861 = vadd.f32 %v1797, 1.0
    %v1862 = vadd.f32 %v1798, 1.0
    %v1863 = vadd.f32 %v1799, 1.0
    %v1864 = vadd.f32 %v1800, 1.0
    %v1865 = vadd.f32 %v1801, 1.0
    %v1866 = vadd.f32 %v1802, 1.0
    %v1867 = vadd.f32 %v1803, 1.0
    %v1868 = vadd.f32 %v1804, 1.0
    %v1869 = vadd.f32 %v1805, 1.0
    %v1870 = vadd.f32 %v1806, 1.0
    %v1871 = vadd.f32 %v1807, 1.0
    %v1872 = vadd.f32 %v1808, 1.0
    %v1873 = vadd.f32 %v1809, 1.0
    %v1874 = vadd.f32 %v1810, 1.0
    %v1875 = vadd.f32 %v1811, 1.0
    %v1876 = vadd.f32 %v1812, 1.0
    %v1877 = vadd.f32 %v1813, 1.0
    %v1878 = vadd.f32 %v1814, 1.0
    %v1879 = vadd.f32 %v1815, 1.0
    %v1880 = vadd.f32 %v1816, 1.0
    %v1881 = vadd.f32 %v1817, 1.0
    %v1882 = vadd.f32 %v1818, 1.0
    %v1883 = vadd.f32 %v1819, 1.0
    %v1884 = vadd.f32 %v1820, 1.0
    %v1885 = vadd.f32 %v1821, 1.0
    %v1886 = vadd.f32 %v1822, 1.0
    %v1887 = vadd.f32 %v1823, 1.0
    %v1888 = vsub.f32 1.0, %v1760
    %v1889 = vsub.f32 1.0, %v1761
    %v1890 = vsub.f32 1.0, %v1762
    %v1891 = vsub.f32 1.0, %v1763
    %v1892 = vsub.f32 1.0, %v1764
    %v1893 = vsub.f32 1.0, %v1765
    %v1894 = vsub.f32 1.0, %v1766
    %v1895 = vsub.f32 1.0, %v1767
    %v1896 = vsub.f32 1.0, %v1768
    %v1897 = vsub.f32 1.0, %v1769
    %v1898 = vsub.f32 1.0, %v1770
    %v1899 = vsub.f32 1.0, %v1771
    %v1900 = vsub.f32 1.0, %v1772
    %v1901 = vsub.f32 1.0, %v1773
    %v1902 = vsub.f32 1.0, %v1774
    %v1903 = vsub.f32 1.0, %v1775
    %v1904 = vsub.f32 1.0, %v1776
    %v1905 = vsub.f32 1.0, %v1777
    %v1906 = vsub.f32 1.0, %v1778
    %v1907 = vsub.f32 1.0, %v1779
    %v1908 = vsub.f32 1.0, %v1780
    %v1909 = vsub.f32 1.0, %v1781
    %v1910 = vsub.f32 1.0, %v1782
    %v1911 = vsub.f32 1.0, %v1783
    %v1912 = vsub.f32 1.0, %v1784
    %v1913 = vsub.f32 1.0, %v1785
    %v1914 = vsub.f32 1.0, %v1786
    %v1915 = vsub.f32 1.0, %v1787
    %v1916 = vsub.f32 1.0, %v1788
    %v1917 = vsub.f32 1.0, %v1789
    %v1918 = vsub.f32 1.0, %v1790
    %v1919 = vsub.f32 1.0, %v1791
    %v1920 = vsub.f32 1.0, %v1792
    %v1921 = vsub.f32 1.0, %v1793
    %v1922 = vsub.f32 1.0, %v1794
    %v1923 = vsub.f32 1.0, %v1795
    %v1924 = vsub.f32 1.0, %v1796
    %v1925 = vsub.f32 1.0, %v1797
    %v1926 = vsub.f32 1.0, %v1798
    %v1927 = vsub.f32 1.0, %v1799
    %v1928 = vsub.f32 1.0, %v1800
    %v1929 = vsub.f32 1.0, %v1801
    %v1930 = vsub.f32 1.0, %v1802
    %v1931 = vsub.f32 1.0, %v1803
    %v1932 = vsub.f32 1.0, %v1804
    %v1933 = vsub.f32 1.0, %v1805
    %v1934 = vsub.f32 1.0, %v1806
    %v1935 = vsub.f32 1.0, %v1807
    %v1936 = vsub.f32 1.0, %v1808
    %v1937 = vsub.f32 1.0, %v1809
    %v1938 = vsub.f32 1.0, %v1810
    %v1939 = vsub.f32 1.0, %v1811
    %v1940 = vsub.f32 1.0, %v1812
    %v1941 = vsub.f32 1.0, %v1813
    %v1942 = vsub.f32 1.0, %v1814
    %v1943 = vsub.f32 1.0, %v1815
    %v1944 = vsub.f32 1.0, %v1816
    %v1945 = vsub.f32 1.0, %v1817
    %v1946 = vsub.f32 1.0, %v1818
    %v1947 = vsub.f32 1.0, %v1819
    %v1948 = vsub.f32 1.0, %v1820
    %v1949 = vsub.f32 1.0, %v1821
    %v1950 = vsub.f32 1.0, %v1822
    %v1951 = vsub.f32 1.0, %v1823
    %v1952 = vrcp.pop %v1888
    %v1953 = vmul.f32 %v1824, %v1952
    %v1954 = vrcp.pop %v1889
    %v1955 = vmul.f32 %v1825, %v1954
    %v1956 = vrcp.pop %v1890
    %v1957 = vmul.f32 %v1826, %v1956
    %v1958 = vrcp.pop %v1891
    %v1959 = vmul.f32 %v1827, %v1958
    %v1960 = vrcp.pop %v1892
    %v1961 = vmul.f32 %v1828, %v1960
    %v1962 = vrcp.pop %v1893
    %v1963 = vmul.f32 %v1829, %v1962
    %v1964 = vrcp.pop %v1894
    %v1965 = vmul.f32 %v1830, %v1964
    %v1966 = vrcp.pop %v1895
    %v1967 = vmul.f32 %v1831, %v1966
    %v1968 = vrcp.pop %v1896
    %v1969 = vmul.f32 %v1832, %v1968
    %v1970 = vrcp.pop %v1897
    %v1971 = vmul.f32 %v1833, %v1970
    %v1972 = vrcp.pop %v1898
    %v1973 = vmul.f32 %v1834, %v1972
    %v1974 = vrcp.pop %v1899
    %v1975 = vmul.f32 %v1835, %v1974
    %v1976 = vrcp.pop %v1900
    %v1977 = vmul.f32 %v1836, %v1976
    %v1978 = vrcp.pop %v1901
    %v1979 = vmul.f32 %v1837, %v1978
    %v1980 = vrcp.pop %v1902
    %v1981 = vmul.f32 %v1838, %v1980
    %v1982 = vrcp.pop %v1903
    %v1983 = vmul.f32 %v1839, %v1982
    %v1984 = vrcp.pop %v1904
    %v1985 = vmul.f32 %v1840, %v1984
    %v1986 = vrcp.pop %v1905
    %v1987 = vmul.f32 %v1841, %v1986
    %v1988 = vrcp.pop %v1906
    %v1989 = vmul.f32 %v1842, %v1988
    %v1990 = vrcp.pop %v1907
    %v1991 = vmul.f32 %v1843, %v1990
    %v1992 = vrcp.pop %v1908
    %v1993 = vmul.f32 %v1844, %v1992
    %v1994 = vrcp.pop %v1909
    %v1995 = vmul.f32 %v1845, %v1994
    %v1996 = vrcp.pop %v1910
    %v1997 = vmul.f32 %v1846, %v1996
    %v1998 = vrcp.pop %v1911
    %v1999 = vmul.f32 %v1847, %v1998
    %v2000 = vrcp.pop %v1912
    %v2001 = vmul.f32 %v1848, %v2000
    %v2002 = vrcp.pop %v1913
    %v2003 = vmul.f32 %v1849, %v2002
    %v2004 = vrcp.pop %v1914
    %v2005 = vmul.f32 %v1850, %v2004
    %v2006 = vrcp.pop %v1915
    %v2007 = vmul.f32 %v1851, %v2006
    %v2008 = vrcp.pop %v1916
    %v2009 = vmul.f32 %v1852, %v2008
    %v2010 = vrcp.pop %v1917
    %v2011 = vmul.f32 %v1853, %v2010
    %v2012 = vrcp.pop %v1918
    %v2013 = vmul.f32 %v1854, %v2012
    %v2014 = vrcp.pop %v1919
    %v2015 = vmul.f32 %v1855, %v2014
    %v2016 = vrcp.pop %v1920
    %v2017 = vmul.f32 %v1856, %v2016
    %v2018 = vrcp.pop %v1921
    %v2019 = vmul.f32 %v1857, %v2018
    %v2020 = vrcp.pop %v1922
    %v2021 = vmul.f32 %v1858, %v2020
    %v2022 = vrcp.pop %v1923
    %v2023 = vmul.f32 %v1859, %v2022
    %v2024 = vrcp.pop %v1924
    %v2025 = vmul.f32 %v1860, %v2024
    %v2026 = vrcp.pop %v1925
    %v2027 = vmul.f32 %v1861, %v2026
    %v2028 = vrcp.pop %v1926
    %v2029 = vmul.f32 %v1862, %v2028
    %v2030 = vrcp.pop %v1927
    %v2031 = vmul.f32 %v1863, %v2030
    %v2032 = vrcp.pop %v1928
    %v2033 = vmul.f32 %v1864, %v2032
    %v2034 = vrcp.pop %v1929
    %v2035 = vmul.f32 %v1865, %v2034
    %v2036 = vrcp.pop %v1930
    %v2037 = vmul.f32 %v1866, %v2036
    %v2038 = vrcp.pop %v1931
    %v2039 = vmul.f32 %v1867, %v2038
    %v2040 = vrcp.pop %v1932
    %v2041 = vmul.f32 %v1868, %v2040
    %v2042 = vrcp.pop %v1933
    %v2043 = vmul.f32 %v1869, %v2042
    %v2044 = vrcp.pop %v1934
    %v2045 = vmul.f32 %v1870, %v2044
    %v2046 = vrcp.pop %v1935
    %v2047 = vmul.f32 %v1871, %v2046
    %v2048 = vrcp.pop %v1936
    %v2049 = vmul.f32 %v1872, %v2048
    %v2050 = vrcp.pop %v1937
    %v2051 = vmul.f32 %v1873, %v2050
    %v2052 = vrcp.pop %v1938
    %v2053 = vmul.f32 %v1874, %v2052
    %v2054 = vrcp.pop %v1939
    %v2055 = vmul.f32 %v1875, %v2054
    %v2056 = vrcp.pop %v1940
    %v2057 = vmul.f32 %v1876, %v2056
    %v2058 = vrcp.pop %v1941
    %v2059 = vmul.f32 %v1877, %v2058
    %v2060 = vrcp.pop %v1942
    %v2061 = vmul.f32 %v1878, %v2060
    %v2062 = vrcp.pop %v1943
    %v2063 = vmul.f32 %v1879, %v2062
    %v2064 = vrcp.pop %v1944
    %v2065 = vmul.f32 %v1880, %v2064
    %v2066 = vrcp.pop %v1945
    %v2067 = vmul.f32 %v1881, %v2066
    %v2068 = vrcp.pop %v1946
    %v2069 = vmul.f32 %v1882, %v2068
    %v2070 = vrcp.pop %v1947
    %v2071 = vmul.f32 %v1883, %v2070
    %v2072 = vrcp.pop %v1948
    %v2073 = vmul.f32 %v1884, %v2072
    %v2074 = vrcp.pop %v1949
    %v2075 = vmul.f32 %v1885, %v2074
    %v2076 = vrcp.pop %v1950
    %v2077 = vmul.f32 %v1886, %v2076
    %v2078 = vrcp.pop %v1951
    %v2079 = vmul.f32 %v1887, %v2078
    %v2080 = vlog2.pop %v1953
    %v2081 = vmul.f32 %v2080, 0.6931472
    %v2082 = vlog2.pop %v1955
    %v2083 = vmul.f32 %v2082, 0.6931472
    %v2084 = vlog2.pop %v1957
    %v2085 = vmul.f32 %v2084, 0.6931472
    %v2086 = vlog2.pop %v1959
    %v2087 = vmul.f32 %v2086, 0.6931472
    %v2088 = vlog2.pop %v1961
    %v2089 = vmul.f32 %v2088, 0.6931472
    %v2090 = vlog2.pop %v1963
    %v2091 = vmul.f32 %v2090, 0.6931472
    %v2092 = vlog2.pop %v1965
    %v2093 = vmul.f32 %v2092, 0.6931472
    %v2094 = vlog2.pop %v1967
    %v2095 = vmul.f32 %v2094, 0.6931472
    %v2096 = vlog2.pop %v1969
    %v2097 = vmul.f32 %v2096, 0.6931472
    %v2098 = vlog2.pop %v1971
    %v2099 = vmul.f32 %v2098, 0.6931472
    %v2100 = vlog2.pop %v1973
    %v2101 = vmul.f32 %v2100, 0.6931472
    %v2102 = vlog2.pop %v1975
    %v2103 = vmul.f32 %v2102, 0.6931472
    %v2104 = vlog2.pop %v1977
    %v2105 = vmul.f32 %v2104, 0.6931472
    %v2106 = vlog2.pop %v1979
    %v2107 = vmul.f32 %v2106, 0.6931472
    %v2108 = vlog2.pop %v1981
    %v2109 = vmul.f32 %v2108, 0.6931472
    %v2110 = vlog2.pop %v1983
    %v2111 = vmul.f32 %v2110, 0.6931472
    %v2112 = vlog2.pop %v1985
    %v2113 = vmul.f32 %v2112, 0.6931472
    %v2114 = vlog2.pop %v1987
    %v2115 = vmul.f32 %v2114, 0.6931472
    %v2116 = vlog2.pop %v1989
    %v2117 = vmul.f32 %v2116, 0.6931472
    %v2118 = vlog2.pop %v1991
    %v2119 = vmul.f32 %v2118, 0.6931472
    %v2120 = vlog2.pop %v1993
    %v2121 = vmul.f32 %v2120, 0.6931472
    %v2122 = vlog2.pop %v1995
    %v2123 = vmul.f32 %v2122, 0.6931472
    %v2124 = vlog2.pop %v1997
    %v2125 = vmul.f32 %v2124, 0.6931472
    %v2126 = vlog2.pop %v1999
    %v2127 = vmul.f32 %v2126, 0.6931472
    %v2128 = vlog2.pop %v2001
    %v2129 = vmul.f32 %v2128, 0.6931472
    %v2130 = vlog2.pop %v2003
    %v2131 = vmul.f32 %v2130, 0.6931472
    %v2132 = vlog2.pop %v2005
    %v2133 = vmul.f32 %v2132, 0.6931472
    %v2134 = vlog2.pop %v2007
    %v2135 = vmul.f32 %v2134, 0.6931472
    %v2136 = vlog2.pop %v2009
    %v2137 = vmul.f32 %v2136, 0.6931472
    %v2138 = vlog2.pop %v2011
    %v2139 = vmul.f32 %v2138, 0.6931472
    %v2140 = vlog2.pop %v2013
    %v2141 = vmul.f32 %v2140, 0.6931472
    %v2142 = vlog2.pop %v2015
    %v2143 = vmul.f32 %v2142, 0.6931472
    %v2144 = vlog2.pop %v2017
    %v2145 = vmul.f32 %v2144, 0.6931472
    %v2146 = vlog2.pop %v2019
    %v2147 = vmul.f32 %v2146, 0.6931472
    %v2148 = vlog2.pop %v2021
    %v2149 = vmul.f32 %v2148, 0.6931472
    %v2150 = vlog2.pop %v2023
    %v2151 = vmul.f32 %v2150, 0.6931472
    %v2152 = vlog2.pop %v2025
    %v2153 = vmul.f32 %v2152, 0.6931472
    %v2154 = vlog2.pop %v2027
    %v2155 = vmul.f32 %v2154, 0.6931472
    %v2156 = vlog2.pop %v2029
    %v2157 = vmul.f32 %v2156, 0.6931472
    %v2158 = vlog2.pop %v2031
    %v2159 = vmul.f32 %v2158, 0.6931472
    %v2160 = vlog2.pop %v2033
    %v2161 = vmul.f32 %v2160, 0.6931472
    %v2162 = vlog2.pop %v2035
    %v2163 = vmul.f32 %v2162, 0.6931472
    %v2164 = vlog2.pop %v2037
    %v2165 = vmul.f32 %v2164, 0.6931472
    %v2166 = vlog2.pop %v2039
    %v2167 = vmul.f32 %v2166, 0.6931472
    %v2168 = vlog2.pop %v2041
    %v2169 = vmul.f32 %v2168, 0.6931472
    %v2170 = vlog2.pop %v2043
    %v2171 = vmul.f32 %v2170, 0.6931472
    %v2172 = vlog2.pop %v2045
    %v2173 = vmul.f32 %v2172, 0.6931472
    %v2174 = vlog2.pop %v2047
    %v2175 = vmul.f32 %v2174, 0.6931472
    %v2176 = vlog2.pop %v2049
    %v2177 = vmul.f32 %v2176, 0.6931472
    %v2178 = vlog2.pop %v2051
    %v2179 = vmul.f32 %v2178, 0.6931472
    %v2180 = vlog2.pop %v2053
    %v2181 = vmul.f32 %v2180, 0.6931472
    %v2182 = vlog2.pop %v2055
    %v2183 = vmul.f32 %v2182, 0.6931472
    %v2184 = vlog2.pop %v2057
    %v2185 = vmul.f32 %v2184, 0.6931472
    %v2186 = vlog2.pop %v2059
    %v2187 = vmul.f32 %v2186, 0.6931472
    %v2188 = vlog2.pop %v2061
    %v2189 = vmul.f32 %v2188, 0.6931472
    %v2190 = vlog2.pop %v2063
    %v2191 = vmul.f32 %v2190, 0.6931472
    %v2192 = vlog2.pop %v2065
    %v2193 = vmul.f32 %v2192, 0.6931472
    %v2194 = vlog2.pop %v2067
    %v2195 = vmul.f32 %v2194, 0.6931472
    %v2196 = vlog2.pop %v2069
    %v2197 = vmul.f32 %v2196, 0.6931472
    %v2198 = vlog2.pop %v2071
    %v2199 = vmul.f32 %v2198, 0.6931472
    %v2200 = vlog2.pop %v2073
    %v2201 = vmul.f32 %v2200, 0.6931472
    %v2202 = vlog2.pop %v2075
    %v2203 = vmul.f32 %v2202, 0.6931472
    %v2204 = vlog2.pop %v2077
    %v2205 = vmul.f32 %v2204, 0.6931472
    %v2206 = vlog2.pop %v2079
    %v2207 = vmul.f32 %v2206, 0.6931472
    %v2208 = vmul.f32 %v2081, 0.5
    %v2209 = vmul.f32 %v2083, 0.5
    %v2210 = vmul.f32 %v2085, 0.5
    %v2211 = vmul.f32 %v2087, 0.5
    %v2212 = vmul.f32 %v2089, 0.5
    %v2213 = vmul.f32 %v2091, 0.5
    %v2214 = vmul.f32 %v2093, 0.5
    %v2215 = vmul.f32 %v2095, 0.5
    %v2216 = vmul.f32 %v2097, 0.5
    %v2217 = vmul.f32 %v2099, 0.5
    %v2218 = vmul.f32 %v2101, 0.5
    %v2219 = vmul.f32 %v2103, 0.5
    %v2220 = vmul.f32 %v2105, 0.5
    %v2221 = vmul.f32 %v2107, 0.5
    %v2222 = vmul.f32 %v2109, 0.5
    %v2223 = vmul.f32 %v2111, 0.5
    %v2224 = vmul.f32 %v2113, 0.5
    %v2225 = vmul.f32 %v2115, 0.5
    %v2226 = vmul.f32 %v2117, 0.5
    %v2227 = vmul.f32 %v2119, 0.5
    %v2228 = vmul.f32 %v2121, 0.5
    %v2229 = vmul.f32 %v2123, 0.5
    %v2230 = vmul.f32 %v2125, 0.5
    %v2231 = vmul.f32 %v2127, 0.5
    %v2232 = vmul.f32 %v2129, 0.5
    %v2233 = vmul.f32 %v2131, 0.5
    %v2234 = vmul.f32 %v2133, 0.5
    %v2235 = vmul.f32 %v2135, 0.5
    %v2236 = vmul.f32 %v2137, 0.5
    %v2237 = vmul.f32 %v2139, 0.5
    %v2238 = vmul.f32 %v2141, 0.5
    %v2239 = vmul.f32 %v2143, 0.5
    %v2240 = vmul.f32 %v2145, 0.5
    %v2241 = vmul.f32 %v2147, 0.5
    %v2242 = vmul.f32 %v2149, 0.5
    %v2243 = vmul.f32 %v2151, 0.5
    %v2244 = vmul.f32 %v2153, 0.5
    %v2245 = vmul.f32 %v2155, 0.5
    %v2246 = vmul.f32 %v2157, 0.5
    %v2247 = vmul.f32 %v2159, 0.5
    %v2248 = vmul.f32 %v2161, 0.5
    %v2249 = vmul.f32 %v2163, 0.5
    %v2250 = vmul.f32 %v2165, 0.5
    %v2251 = vmul.f32 %v2167, 0.5
    %v2252 = vmul.f32 %v2169, 0.5
    %v2253 = vmul.f32 %v2171, 0.5
    %v2254 = vmul.f32 %v2173, 0.5
    %v2255 = vmul.f32 %v2175, 0.5
    %v2256 = vmul.f32 %v2177, 0.5
    %v2257 = vmul.f32 %v2179, 0.5
    %v2258 = vmul.f32 %v2181, 0.5
    %v2259 = vmul.f32 %v2183, 0.5
    %v2260 = vmul.f32 %v2185, 0.5
    %v2261 = vmul.f32 %v2187, 0.5
    %v2262 = vmul.f32 %v2189, 0.5
    %v2263 = vmul.f32 %v2191, 0.5
    %v2264 = vmul.f32 %v2193, 0.5
    %v2265 = vmul.f32 %v2195, 0.5
    %v2266 = vmul.f32 %v2197, 0.5
    %v2267 = vmul.f32 %v2199, 0.5
    %v2268 = vmul.f32 %v2201, 0.5
    %v2269 = vmul.f32 %v2203, 0.5
    %v2270 = vmul.f32 %v2205, 0.5
    %v2271 = vmul.f32 %v2207, 0.5
    %v2272 = vmul.f32 %v1440, 0.08
    %v2273 = vmul.f32 %v1441, 0.08
    %v2274 = vmul.f32 %v1442, 0.08
    %v2275 = vmul.f32 %v1443, 0.08
    %v2276 = vmul.f32 %v1444, 0.08
    %v2277 = vmul.f32 %v1445, 0.08
    %v2278 = vmul.f32 %v1446, 0.08
    %v2279 = vmul.f32 %v1447, 0.08
    %v2280 = vmul.f32 %v1448, 0.08
    %v2281 = vmul.f32 %v1449, 0.08
    %v2282 = vmul.f32 %v1450, 0.08
    %v2283 = vmul.f32 %v1451, 0.08
    %v2284 = vmul.f32 %v1452, 0.08
    %v2285 = vmul.f32 %v1453, 0.08
    %v2286 = vmul.f32 %v1454, 0.08
    %v2287 = vmul.f32 %v1455, 0.08
    %v2288 = vmul.f32 %v1456, 0.08
    %v2289 = vmul.f32 %v1457, 0.08
    %v2290 = vmul.f32 %v1458, 0.08
    %v2291 = vmul.f32 %v1459, 0.08
    %v2292 = vmul.f32 %v1460, 0.08
    %v2293 = vmul.f32 %v1461, 0.08
    %v2294 = vmul.f32 %v1462, 0.08
    %v2295 = vmul.f32 %v1463, 0.08
    %v2296 = vmul.f32 %v1464, 0.08
    %v2297 = vmul.f32 %v1465, 0.08
    %v2298 = vmul.f32 %v1466, 0.08
    %v2299 = vmul.f32 %v1467, 0.08
    %v2300 = vmul.f32 %v1468, 0.08
    %v2301 = vmul.f32 %v1469, 0.08
    %v2302 = vmul.f32 %v1470, 0.08
    %v2303 = vmul.f32 %v1471, 0.08
    %v2304 = vmul.f32 %v1472, 0.08
    %v2305 = vmul.f32 %v1473, 0.08
    %v2306 = vmul.f32 %v1474, 0.08
    %v2307 = vmul.f32 %v1475, 0.08
    %v2308 = vmul.f32 %v1476, 0.08
    %v2309 = vmul.f32 %v1477, 0.08
    %v2310 = vmul.f32 %v1478, 0.08
    %v2311 = vmul.f32 %v1479, 0.08
    %v2312 = vmul.f32 %v1480, 0.08
    %v2313 = vmul.f32 %v1481, 0.08
    %v2314 = vmul.f32 %v1482, 0.08
    %v2315 = vmul.f32 %v1483, 0.08
    %v2316 = vmul.f32 %v1484, 0.08
    %v2317 = vmul.f32 %v1485, 0.08
    %v2318 = vmul.f32 %v1486, 0.08
    %v2319 = vmul.f32 %v1487, 0.08
    %v2320 = vmul.f32 %v1488, 0.08
    %v2321 = vmul.f32 %v1489, 0.08
    %v2322 = vmul.f32 %v1490, 0.08
    %v2323 = vmul.f32 %v1491, 0.08
    %v2324 = vmul.f32 %v1492, 0.08
    %v2325 = vmul.f32 %v1493, 0.08
    %v2326 = vmul.f32 %v1494, 0.08
    %v2327 = vmul.f32 %v1495, 0.08
    %v2328 = vmul.f32 %v1496, 0.08
    %v2329 = vmul.f32 %v1497, 0.08
    %v2330 = vmul.f32 %v1498, 0.08
    %v2331 = vmul.f32 %v1499, 0.08
    %v2332 = vmul.f32 %v1500, 0.08
    %v2333 = vmul.f32 %v1501, 0.08
    %v2334 = vmul.f32 %v1502, 0.08
    %v2335 = vmul.f32 %v1503, 0.08
    %v2336 = vrcp.pop %v1696
    %v2337 = vrcp.pop %v1697
    %v2338 = vrcp.pop %v1698
    %v2339 = vrcp.pop %v1699
    %v2340 = vrcp.pop %v1700
    %v2341 = vrcp.pop %v1701
    %v2342 = vrcp.pop %v1702
    %v2343 = vrcp.pop %v1703
    %v2344 = vrcp.pop %v1704
    %v2345 = vrcp.pop %v1705
    %v2346 = vrcp.pop %v1706
    %v2347 = vrcp.pop %v1707
    %v2348 = vrcp.pop %v1708
    %v2349 = vrcp.pop %v1709
    %v2350 = vrcp.pop %v1710
    %v2351 = vrcp.pop %v1711
    %v2352 = vrcp.pop %v1712
    %v2353 = vrcp.pop %v1713
    %v2354 = vrcp.pop %v1714
    %v2355 = vrcp.pop %v1715
    %v2356 = vrcp.pop %v1716
    %v2357 = vrcp.pop %v1717
    %v2358 = vrcp.pop %v1718
    %v2359 = vrcp.pop %v1719
    %v2360 = vrcp.pop %v1720
    %v2361 = vrcp.pop %v1721
    %v2362 = vrcp.pop %v1722
    %v2363 = vrcp.pop %v1723
    %v2364 = vrcp.pop %v1724
    %v2365 = vrcp.pop %v1725
    %v2366 = vrcp.pop %v1726
    %v2367 = vrcp.pop %v1727
    %v2368 = vrcp.pop %v1728
    %v2369 = vrcp.pop %v1729
    %v2370 = vrcp.pop %v1730
    %v2371 = vrcp.pop %v1731
    %v2372 = vrcp.pop %v1732
    %v2373 = vrcp.pop %v1733
    %v2374 = vrcp.pop %v1734
    %v2375 = vrcp.pop %v1735
    %v2376 = vrcp.pop %v1736
    %v2377 = vrcp.pop %v1737
    %v2378 = vrcp.pop %v1738
    %v2379 = vrcp.pop %v1739
    %v2380 = vrcp.pop %v1740
    %v2381 = vrcp.pop %v1741
    %v2382 = vrcp.pop %v1742
    %v2383 = vrcp.pop %v1743
    %v2384 = vrcp.pop %v1744
    %v2385 = vrcp.pop %v1745
    %v2386 = vrcp.pop %v1746
    %v2387 = vrcp.pop %v1747
    %v2388 = vrcp.pop %v1748
    %v2389 = vrcp.pop %v1749
    %v2390 = vrcp.pop %v1750
    %v2391 = vrcp.pop %v1751
    %v2392 = vrcp.pop %v1752
    %v2393 = vrcp.pop %v1753
    %v2394 = vrcp.pop %v1754
    %v2395 = vrcp.pop %v1755
    %v2396 = vrcp.pop %v1756
    %v2397 = vrcp.pop %v1757
    %v2398 = vrcp.pop %v1758
    %v2399 = vrcp.pop %v1759
    %v2400 = vmul.f32 %v2208, %v2336
    %v2401 = vmul.f32 %v2209, %v2337
    %v2402 = vmul.f32 %v2210, %v2338
    %v2403 = vmul.f32 %v2211, %v2339
    %v2404 = vmul.f32 %v2212, %v2340
    %v2405 = vmul.f32 %v2213, %v2341
    %v2406 = vmul.f32 %v2214, %v2342
    %v2407 = vmul.f32 %v2215, %v2343
    %v2408 = vmul.f32 %v2216, %v2344
    %v2409 = vmul.f32 %v2217, %v2345
    %v2410 = vmul.f32 %v2218, %v2346
    %v2411 = vmul.f32 %v2219, %v2347
    %v2412 = vmul.f32 %v2220, %v2348
    %v2413 = vmul.f32 %v2221, %v2349
    %v2414 = vmul.f32 %v2222, %v2350
    %v2415 = vmul.f32 %v2223, %v2351
    %v2416 = vmul.f32 %v2224, %v2352
    %v2417 = vmul.f32 %v2225, %v2353
    %v2418 = vmul.f32 %v2226, %v2354
    %v2419 = vmul.f32 %v2227, %v2355
    %v2420 = vmul.f32 %v2228, %v2356
    %v2421 = vmul.f32 %v2229, %v2357
    %v2422 = vmul.f32 %v2230, %v2358
    %v2423 = vmul.f32 %v2231, %v2359
    %v2424 = vmul.f32 %v2232, %v2360
    %v2425 = vmul.f32 %v2233, %v2361
    %v2426 = vmul.f32 %v2234, %v2362
    %v2427 = vmul.f32 %v2235, %v2363
    %v2428 = vmul.f32 %v2236, %v2364
    %v2429 = vmul.f32 %v2237, %v2365
    %v2430 = vmul.f32 %v2238, %v2366
    %v2431 = vmul.f32 %v2239, %v2367
    %v2432 = vmul.f32 %v2240, %v2368
    %v2433 = vmul.f32 %v2241, %v2369
    %v2434 = vmul.f32 %v2242, %v2370
    %v2435 = vmul.f32 %v2243, %v2371
    %v2436 = vmul.f32 %v2244, %v2372
    %v2437 = vmul.f32 %v2245, %v2373
    %v2438 = vmul.f32 %v2246, %v2374
    %v2439 = vmul.f32 %v2247, %v2375
    %v2440 = vmul.f32 %v2248, %v2376
    %v2441 = vmul.f32 %v2249, %v2377
    %v2442 = vmul.f32 %v2250, %v2378
    %v2443 = vmul.f32 %v2251, %v2379
    %v2444 = vmul.f32 %v2252, %v2380
    %v2445 = vmul.f32 %v2253, %v2381
    %v2446 = vmul.f32 %v2254, %v2382
    %v2447 = vmul.f32 %v2255, %v2383
    %v2448 = vmul.f32 %v2256, %v2384
    %v2449 = vmul.f32 %v2257, %v2385
    %v2450 = vmul.f32 %v2258, %v2386
    %v2451 = vmul.f32 %v2259, %v2387
    %v2452 = vmul.f32 %v2260, %v2388
    %v2453 = vmul.f32 %v2261, %v2389
    %v2454 = vmul.f32 %v2262, %v2390
    %v2455 = vmul.f32 %v2263, %v2391
    %v2456 = vmul.f32 %v2264, %v2392
    %v2457 = vmul.f32 %v2265, %v2393
    %v2458 = vmul.f32 %v2266, %v2394
    %v2459 = vmul.f32 %v2267, %v2395
    %v2460 = vmul.f32 %v2268, %v2396
    %v2461 = vmul.f32 %v2269, %v2397
    %v2462 = vmul.f32 %v2270, %v2398
    %v2463 = vmul.f32 %v2271, %v2399
    %v2464 = vmul.f32 %v2272, %v2400
    %v2465 = vmul.f32 %v2273, %v2401
    %v2466 = vmul.f32 %v2274, %v2402
    %v2467 = vmul.f32 %v2275, %v2403
    %v2468 = vmul.f32 %v2276, %v2404
    %v2469 = vmul.f32 %v2277, %v2405
    %v2470 = vmul.f32 %v2278, %v2406
    %v2471 = vmul.f32 %v2279, %v2407
    %v2472 = vmul.f32 %v2280, %v2408
    %v2473 = vmul.f32 %v2281, %v2409
    %v2474 = vmul.f32 %v2282, %v2410
    %v2475 = vmul.f32 %v2283, %v2411
    %v2476 = vmul.f32 %v2284, %v2412
    %v2477 = vmul.f32 %v2285, %v2413
    %v2478 = vmul.f32 %v2286, %v2414
    %v2479 = vmul.f32 %v2287, %v2415
    %v2480 = vmul.f32 %v2288, %v2416
    %v2481 = vmul.f32 %v2289, %v2417
    %v2482 = vmul.f32 %v2290, %v2418
    %v2483 = vmul.f32 %v2291, %v2419
    %v2484 = vmul.f32 %v2292, %v2420
    %v2485 = vmul.f32 %v2293, %v2421
    %v2486 = vmul.f32 %v2294, %v2422
    %v2487 = vmul.f32 %v2295, %v2423
    %v2488 = vmul.f32 %v2296, %v2424
    %v2489 = vmul.f32 %v2297, %v2425
    %v2490 = vmul.f32 %v2298, %v2426
    %v2491 = vmul.f32 %v2299, %v2427
    %v2492 = vmul.f32 %v2300, %v2428
    %v2493 = vmul.f32 %v2301, %v2429
    %v2494 = vmul.f32 %v2302, %v2430
    %v2495 = vmul.f32 %v2303, %v2431
    %v2496 = vmul.f32 %v2304, %v2432
    %v2497 = vmul.f32 %v2305, %v2433
    %v2498 = vmul.f32 %v2306, %v2434
    %v2499 = vmul.f32 %v2307, %v2435
    %v2500 = vmul.f32 %v2308, %v2436
    %v2501 = vmul.f32 %v2309, %v2437
    %v2502 = vmul.f32 %v2310, %v2438
    %v2503 = vmul.f32 %v2311, %v2439
    %v2504 = vmul.f32 %v2312, %v2440
    %v2505 = vmul.f32 %v2313, %v2441
    %v2506 = vmul.f32 %v2314, %v2442
    %v2507 = vmul.f32 %v2315, %v2443
    %v2508 = vmul.f32 %v2316, %v2444
    %v2509 = vmul.f32 %v2317, %v2445
    %v2510 = vmul.f32 %v2318, %v2446
    %v2511 = vmul.f32 %v2319, %v2447
    %v2512 = vmul.f32 %v2320, %v2448
    %v2513 = vmul.f32 %v2321, %v2449
    %v2514 = vmul.f32 %v2322, %v2450
    %v2515 = vmul.f32 %v2323, %v2451
    %v2516 = vmul.f32 %v2324, %v2452
    %v2517 = vmul.f32 %v2325, %v2453
    %v2518 = vmul.f32 %v2326, %v2454
    %v2519 = vmul.f32 %v2327, %v2455
    %v2520 = vmul.f32 %v2328, %v2456
    %v2521 = vmul.f32 %v2329, %v2457
    %v2522 = vmul.f32 %v2330, %v2458
    %v2523 = vmul.f32 %v2331, %v2459
    %v2524 = vmul.f32 %v2332, %v2460
    %v2525 = vmul.f32 %v2333, %v2461
    %v2526 = vmul.f32 %v2334, %v2462
    %v2527 = vmul.f32 %v2335, %v2463
    %v2528 = vmul.f32 %v544, %v2464
    %v2529 = vmul.f32 %v545, %v2465
    %v2530 = vmul.f32 %v546, %v2466
    %v2531 = vmul.f32 %v547, %v2467
    %v2532 = vmul.f32 %v548, %v2468
    %v2533 = vmul.f32 %v549, %v2469
    %v2534 = vmul.f32 %v550, %v2470
    %v2535 = vmul.f32 %v551, %v2471
    %v2536 = vmul.f32 %v552, %v2472
    %v2537 = vmul.f32 %v553, %v2473
    %v2538 = vmul.f32 %v554, %v2474
    %v2539 = vmul.f32 %v555, %v2475
    %v2540 = vmul.f32 %v556, %v2476
    %v2541 = vmul.f32 %v557, %v2477
    %v2542 = vmul.f32 %v558, %v2478
    %v2543 = vmul.f32 %v559, %v2479
    %v2544 = vmul.f32 %v560, %v2480
    %v2545 = vmul.f32 %v561, %v2481
    %v2546 = vmul.f32 %v562, %v2482
    %v2547 = vmul.f32 %v563, %v2483
    %v2548 = vmul.f32 %v564, %v2484
    %v2549 = vmul.f32 %v565, %v2485
    %v2550 = vmul.f32 %v566, %v2486
    %v2551 = vmul.f32 %v567, %v2487
    %v2552 = vmul.f32 %v568, %v2488
    %v2553 = vmul.f32 %v569, %v2489
    %v2554 = vmul.f32 %v570, %v2490
    %v2555 = vmul.f32 %v571, %v2491
    %v2556 = vmul.f32 %v572, %v2492
    %v2557 = vmul.f32 %v573, %v2493
    %v2558 = vmul.f32 %v574, %v2494
    %v2559 = vmul.f32 %v575, %v2495
    %v2560 = vmul.f32 %v576, %v2496
    %v2561 = vmul.f32 %v577, %v2497
    %v2562 = vmul.f32 %v578, %v2498
    %v2563 = vmul.f32 %v579, %v2499
    %v2564 = vmul.f32 %v580, %v2500
    %v2565 = vmul.f32 %v581, %v2501
    %v2566 = vmul.f32 %v582, %v2502
    %v2567 = vmul.f32 %v583, %v2503
    %v2568 = vmul.f32 %v584, %v2504
    %v2569 = vmul.f32 %v585, %v2505
    %v2570 = vmul.f32 %v586, %v2506
    %v2571 = vmul.f32 %v587, %v2507
    %v2572 = vmul.f32 %v588, %v2508
    %v2573 = vmul.f32 %v589, %v2509
    %v2574 = vmul.f32 %v590, %v2510
    %v2575 = vmul.f32 %v591, %v2511
    %v2576 = vmul.f32 %v592, %v2512
    %v2577 = vmul.f32 %v593, %v2513
    %v2578 = vmul.f32 %v594, %v2514
    %v2579 = vmul.f32 %v595, %v2515
    %v2580 = vmul.f32 %v596, %v2516
    %v2581 = vmul.f32 %v597, %v2517
    %v2582 = vmul.f32 %v598, %v2518
    %v2583 = vmul.f32 %v599, %v2519
    %v2584 = vmul.f32 %v600, %v2520
    %v2585 = vmul.f32 %v601, %v2521
    %v2586 = vmul.f32 %v602, %v2522
    %v2587 = vmul.f32 %v603, %v2523
    %v2588 = vmul.f32 %v604, %v2524
    %v2589 = vmul.f32 %v605, %v2525
    %v2590 = vmul.f32 %v606, %v2526
    %v2591 = vmul.f32 %v607, %v2527
    %v2592 = vpack.c.bf16 %v2529, %v2528
    %v2593 = vpack.c.bf16 %v2531, %v2530
    %v2594 = vpack.c.bf16 %v2533, %v2532
    %v2595 = vpack.c.bf16 %v2535, %v2534
    %v2596 = vpack.c.bf16 %v2537, %v2536
    %v2597 = vpack.c.bf16 %v2539, %v2538
    %v2598 = vpack.c.bf16 %v2541, %v2540
    %v2599 = vpack.c.bf16 %v2543, %v2542
    %v2600 = vpack.c.bf16 %v2545, %v2544
    %v2601 = vpack.c.bf16 %v2547, %v2546
    %v2602 = vpack.c.bf16 %v2549, %v2548
    %v2603 = vpack.c.bf16 %v2551, %v2550
    %v2604 = vpack.c.bf16 %v2553, %v2552
    %v2605 = vpack.c.bf16 %v2555, %v2554
    %v2606 = vpack.c.bf16 %v2557, %v2556
    %v2607 = vpack.c.bf16 %v2559, %v2558
    %v2608 = vpack.c.bf16 %v2561, %v2560
    %v2609 = vpack.c.bf16 %v2563, %v2562
    %v2610 = vpack.c.bf16 %v2565, %v2564
    %v2611 = vpack.c.bf16 %v2567, %v2566
    %v2612 = vpack.c.bf16 %v2569, %v2568
    %v2613 = vpack.c.bf16 %v2571, %v2570
    %v2614 = vpack.c.bf16 %v2573, %v2572
    %v2615 = vpack.c.bf16 %v2575, %v2574
    %v2616 = vpack.c.bf16 %v2577, %v2576
    %v2617 = vpack.c.bf16 %v2579, %v2578
    %v2618 = vpack.c.bf16 %v2581, %v2580
    %v2619 = vpack.c.bf16 %v2583, %v2582
    %v2620 = vpack.c.bf16 %v2585, %v2584
    %v2621 = vpack.c.bf16 %v2587, %v2586
    %v2622 = vpack.c.bf16 %v2589, %v2588
    %v2623 = vpack.c.bf16 %v2591, %v2590
    %v2625 = vlaneseq
    %v2626 = vshrl.u32 %v2625, 7
    %v2627 = vsub.s32 0, %v2626
    %v2628 = vrot.slane %v166, %v2627
    %v2646 = vunpack.c.l.b16 %v150
    %v2647 = vunpack.c.l.b16 %v151
    %v2648 = vunpack.c.l.b16 %v152
    %v2649 = vunpack.c.l.b16 %v153
    %v2650 = vunpack.c.l.b16 %v154
    %v2651 = vunpack.c.l.b16 %v155
    %v2652 = vunpack.c.l.b16 %v156
    %v2653 = vunpack.c.l.b16 %v157
    %v2654 = vunpack.c.l.b16 %v158
    %v2655 = vunpack.c.l.b16 %v159
    %v2656 = vunpack.c.l.b16 %v160
    %v2657 = vunpack.c.l.b16 %v161
    %v2658 = vunpack.c.l.b16 %v162
    %v2659 = vunpack.c.l.b16 %v163
    %v2660 = vunpack.c.l.b16 %v164
    %v2661 = vunpack.c.l.b16 %v165
    %v2662 = vpack.c.b16 %v2647, %v2646
    %v2663 = vpack.c.b16 %v2649, %v2648
    %v2664 = vpack.c.b16 %v2651, %v2650
    %v2665 = vpack.c.b16 %v2653, %v2652
    %v2666 = vpack.c.b16 %v2655, %v2654
    %v2667 = vpack.c.b16 %v2657, %v2656
    %v2668 = vpack.c.b16 %v2659, %v2658
    %v2669 = vpack.c.b16 %v2661, %v2660
    %2678 = vmatprep.subr.bf16.mxu0 0
    %2679 = vmatpush1.bf16.msra.mxu0 %v2662
    %2680 = vmatprep.subr.bf16.mxu0 0
    %2681 = vmatpush1.bf16.msra.mxu0 %v2663
    %2682 = vmatprep.subr.bf16.mxu0 0
    %2683 = vmatpush1.bf16.msra.mxu0 %v2664
    %2684 = vmatprep.subr.bf16.mxu0 0
    %2685 = vmatpush1.bf16.msra.mxu0 %v2665
    %2686 = vmatprep.subr.bf16.mxu0 0
    %2687 = vmatpush1.bf16.msra.mxu0 %v2666
    %2688 = vmatprep.subr.bf16.mxu0 0
    %2689 = vmatpush1.bf16.msra.mxu0 %v2667
    %2690 = vmatprep.subr.bf16.mxu0 0
    %2691 = vmatpush1.bf16.msra.mxu0 %v2668
    %2692 = vmatprep.subr.bf16.mxu0 0
    %2693 = vmatpush1.bf16.msra.mxu0 %v2669
    %2694 = vmatprep.subr.bf16.mxu0 0
    %2695 = vmatpush1.bf16.msra.mxu0 0
    %2696 = vmatprep.subr.bf16.mxu0 0
    %2697 = vmatpush1.bf16.msra.mxu0 0
    %2698 = vmatprep.subr.bf16.mxu0 0
    %2699 = vmatpush1.bf16.msra.mxu0 0
    %2700 = vmatprep.subr.bf16.mxu0 0
    %2701 = vmatpush1.bf16.msra.mxu0 0
    %2702 = vmatprep.subr.bf16.mxu0 0
    %2703 = vmatpush1.bf16.msra.mxu0 0
    %2704 = vmatprep.subr.bf16.mxu0 0
    %2705 = vmatpush1.bf16.msra.mxu0 0
    %2706 = vmatprep.subr.bf16.mxu0 0
    %2707 = vmatpush1.bf16.msra.mxu0 0
    %2708 = vmatprep.subr.bf16.mxu0 0
    %2709 = vmatpush1.bf16.msra.mxu0 0
    %2710 = vmatprep.mubr.bf16.mxu0 0
    %2711 = vmatmul.mubr.bf16.gmra.mrb[0].mxu0 %v2592
    %v2712 = vpop.f32.mrb[0].mxu0
    %v2713 = vadd.f32 %v2628, %v2712
    %v2714 = vpop.f32.mrb[0].mxu0
    %v2715 = vpop.f32.mrb[0].mxu0
    %v2716 = vadd.f32 %v2628, %v2715
    %v2717 = vpop.f32.mrb[0].mxu0
    %2718 = vmatprep.mubr.bf16.mxu0 0
    %2719 = vmatmul.mubr.bf16.gmra.mrb[0].mxu0 %v2593
    %v2720 = vpop.f32.mrb[0].mxu0
    %v2721 = vadd.f32 %v2628, %v2720
    %v2722 = vpop.f32.mrb[0].mxu0
    %v2723 = vpop.f32.mrb[0].mxu0
    %v2724 = vadd.f32 %v2628, %v2723
    %v2725 = vpop.f32.mrb[0].mxu0
    %2726 = vmatprep.mubr.bf16.mxu0 0
    %2727 = vmatmul.mubr.bf16.gmra.mrb[0].mxu0 %v2594
    %v2728 = vpop.f32.mrb[0].mxu0
    %v2729 = vadd.f32 %v2628, %v2728
    %v2730 = vpop.f32.mrb[0].mxu0
    %v2731 = vpop.f32.mrb[0].mxu0
    %v2732 = vadd.f32 %v2628, %v2731
    %v2733 = vpop.f32.mrb[0].mxu0
    %2734 = vmatprep.mubr.bf16.mxu0 0
    %2735 = vmatmul.mubr.bf16.gmra.mrb[0].mxu0 %v2595
    %v2736 = vpop.f32.mrb[0].mxu0
    %v2737 = vadd.f32 %v2628, %v2736
    %v2738 = vpop.f32.mrb[0].mxu0
    %v2739 = vpop.f32.mrb[0].mxu0
    %v2740 = vadd.f32 %v2628, %v2739
    %v2741 = vpop.f32.mrb[0].mxu0
    %2742 = vmatprep.mubr.bf16.mxu0 0
    %2743 = vmatmul.mubr.bf16.gmra.mrb[0].mxu0 %v2596
    %v2744 = vpop.f32.mrb[0].mxu0
    %v2745 = vadd.f32 %v2628, %v2744
    %v2746 = vpop.f32.mrb[0].mxu0
    %v2747 = vpop.f32.mrb[0].mxu0
    %v2748 = vadd.f32 %v2628, %v2747
    %v2749 = vpop.f32.mrb[0].mxu0
    %2750 = vmatprep.mubr.bf16.mxu0 0
    %2751 = vmatmul.mubr.bf16.gmra.mrb[0].mxu0 %v2597
    %v2752 = vpop.f32.mrb[0].mxu0
    %v2753 = vadd.f32 %v2628, %v2752
    %v2754 = vpop.f32.mrb[0].mxu0
    %v2755 = vpop.f32.mrb[0].mxu0
    %v2756 = vadd.f32 %v2628, %v2755
    %v2757 = vpop.f32.mrb[0].mxu0
    %2758 = vmatprep.mubr.bf16.mxu0 0
    %2759 = vmatmul.mubr.bf16.gmra.mrb[0].mxu0 %v2598
    %v2760 = vpop.f32.mrb[0].mxu0
    %v2761 = vadd.f32 %v2628, %v2760
    %v2762 = vpop.f32.mrb[0].mxu0
    %v2763 = vpop.f32.mrb[0].mxu0
    %v2764 = vadd.f32 %v2628, %v2763
    %v2765 = vpop.f32.mrb[0].mxu0
    %2766 = vmatprep.mubr.bf16.mxu0 0
    %2767 = vmatmul.mubr.bf16.gmra.mrb[0].mxu0 %v2599
    %v2768 = vpop.f32.mrb[0].mxu0
    %v2769 = vadd.f32 %v2628, %v2768
    %v2770 = vpop.f32.mrb[0].mxu0
    %v2771 = vpop.f32.mrb[0].mxu0
    %v2772 = vadd.f32 %v2628, %v2771
    %v2773 = vpop.f32.mrb[0].mxu0
    %2774 = vmatprep.mubr.bf16.mxu0 0
    %2775 = vmatmul.mubr.bf16.gmra.mrb[0].mxu0 %v2600
    %v2776 = vpop.f32.mrb[0].mxu0
    %v2777 = vadd.f32 %v2628, %v2776
    %v2778 = vpop.f32.mrb[0].mxu0
    %v2779 = vpop.f32.mrb[0].mxu0
    %v2780 = vadd.f32 %v2628, %v2779
    %v2781 = vpop.f32.mrb[0].mxu0
    %2782 = vmatprep.mubr.bf16.mxu0 0
    %2783 = vmatmul.mubr.bf16.gmra.mrb[0].mxu0 %v2601
    %v2784 = vpop.f32.mrb[0].mxu0
    %v2785 = vadd.f32 %v2628, %v2784
    %v2786 = vpop.f32.mrb[0].mxu0
    %v2787 = vpop.f32.mrb[0].mxu0
    %v2788 = vadd.f32 %v2628, %v2787
    %v2789 = vpop.f32.mrb[0].mxu0
    %2790 = vmatprep.mubr.bf16.mxu0 0
    %2791 = vmatmul.mubr.bf16.gmra.mrb[0].mxu0 %v2602
    %v2792 = vpop.f32.mrb[0].mxu0
    %v2793 = vadd.f32 %v2628, %v2792
    %v2794 = vpop.f32.mrb[0].mxu0
    %v2795 = vpop.f32.mrb[0].mxu0
    %v2796 = vadd.f32 %v2628, %v2795
    %v2797 = vpop.f32.mrb[0].mxu0
    %2798 = vmatprep.mubr.bf16.mxu0 0
    %2799 = vmatmul.mubr.bf16.gmra.mrb[0].mxu0 %v2603
    %v2800 = vpop.f32.mrb[0].mxu0
    %v2801 = vadd.f32 %v2628, %v2800
    %v2802 = vpop.f32.mrb[0].mxu0
    %v2803 = vpop.f32.mrb[0].mxu0
    %v2804 = vadd.f32 %v2628, %v2803
    %v2805 = vpop.f32.mrb[0].mxu0
    %2806 = vmatprep.mubr.bf16.mxu0 0
    %2807 = vmatmul.mubr.bf16.gmra.mrb[0].mxu0 %v2604
    %v2808 = vpop.f32.mrb[0].mxu0
    %v2809 = vadd.f32 %v2628, %v2808
    %v2810 = vpop.f32.mrb[0].mxu0
    %v2811 = vpop.f32.mrb[0].mxu0
    %v2812 = vadd.f32 %v2628, %v2811
    %v2813 = vpop.f32.mrb[0].mxu0
    %2814 = vmatprep.mubr.bf16.mxu0 0
    %2815 = vmatmul.mubr.bf16.gmra.mrb[0].mxu0 %v2605
    %v2816 = vpop.f32.mrb[0].mxu0
    %v2817 = vadd.f32 %v2628, %v2816
    %v2818 = vpop.f32.mrb[0].mxu0
    %v2819 = vpop.f32.mrb[0].mxu0
    %v2820 = vadd.f32 %v2628, %v2819
    %v2821 = vpop.f32.mrb[0].mxu0
    %2822 = vmatprep.mubr.bf16.mxu0 0
    %2823 = vmatmul.mubr.bf16.gmra.mrb[0].mxu0 %v2606
    %v2824 = vpop.f32.mrb[0].mxu0
    %v2825 = vadd.f32 %v2628, %v2824
    %v2826 = vpop.f32.mrb[0].mxu0
    %v2827 = vpop.f32.mrb[0].mxu0
    %v2828 = vadd.f32 %v2628, %v2827
    %v2829 = vpop.f32.mrb[0].mxu0
    %2830 = vmatprep.mubr.bf16.mxu0 0
    %2831 = vmatmul.mubr.bf16.gmra.mrb[0].mxu0 %v2607
    %v2832 = vpop.f32.mrb[0].mxu0
    %v2833 = vadd.f32 %v2628, %v2832
    %v2834 = vpop.f32.mrb[0].mxu0
    %v2835 = vpop.f32.mrb[0].mxu0
    %v2836 = vadd.f32 %v2628, %v2835
    %v2837 = vpop.f32.mrb[0].mxu0
    %2838 = vmatprep.mubr.bf16.mxu0 0
    %2839 = vmatmul.mubr.bf16.gmra.mrb[0].mxu0 %v2608
    %v2840 = vpop.f32.mrb[0].mxu0
    %v2841 = vadd.f32 %v2628, %v2840
    %v2842 = vpop.f32.mrb[0].mxu0
    %v2843 = vpop.f32.mrb[0].mxu0
    %v2844 = vadd.f32 %v2628, %v2843
    %v2845 = vpop.f32.mrb[0].mxu0
    %2846 = vmatprep.mubr.bf16.mxu0 0
    %2847 = vmatmul.mubr.bf16.gmra.mrb[0].mxu0 %v2609
    %v2848 = vpop.f32.mrb[0].mxu0
    %v2849 = vadd.f32 %v2628, %v2848
    %v2850 = vpop.f32.mrb[0].mxu0
    %v2851 = vpop.f32.mrb[0].mxu0
    %v2852 = vadd.f32 %v2628, %v2851
    %v2853 = vpop.f32.mrb[0].mxu0
    %2854 = vmatprep.mubr.bf16.mxu0 0
    %2855 = vmatmul.mubr.bf16.gmra.mrb[0].mxu0 %v2610
    %v2856 = vpop.f32.mrb[0].mxu0
    %v2857 = vadd.f32 %v2628, %v2856
    %v2858 = vpop.f32.mrb[0].mxu0
    %v2859 = vpop.f32.mrb[0].mxu0
    %v2860 = vadd.f32 %v2628, %v2859
    %v2861 = vpop.f32.mrb[0].mxu0
    %2862 = vmatprep.mubr.bf16.mxu0 0
    %2863 = vmatmul.mubr.bf16.gmra.mrb[0].mxu0 %v2611
    %v2864 = vpop.f32.mrb[0].mxu0
    %v2865 = vadd.f32 %v2628, %v2864
    %v2866 = vpop.f32.mrb[0].mxu0
    %v2867 = vpop.f32.mrb[0].mxu0
    %v2868 = vadd.f32 %v2628, %v2867
    %v2869 = vpop.f32.mrb[0].mxu0
    %2870 = vmatprep.mubr.bf16.mxu0 0
    %2871 = vmatmul.mubr.bf16.gmra.mrb[0].mxu0 %v2612
    %v2872 = vpop.f32.mrb[0].mxu0
    %v2873 = vadd.f32 %v2628, %v2872
    %v2874 = vpop.f32.mrb[0].mxu0
    %v2875 = vpop.f32.mrb[0].mxu0
    %v2876 = vadd.f32 %v2628, %v2875
    %v2877 = vpop.f32.mrb[0].mxu0
    %2878 = vmatprep.mubr.bf16.mxu0 0
    %2879 = vmatmul.mubr.bf16.gmra.mrb[0].mxu0 %v2613
    %v2880 = vpop.f32.mrb[0].mxu0
    %v2881 = vadd.f32 %v2628, %v2880
    %v2882 = vpop.f32.mrb[0].mxu0
    %v2883 = vpop.f32.mrb[0].mxu0
    %v2884 = vadd.f32 %v2628, %v2883
    %v2885 = vpop.f32.mrb[0].mxu0
    %2886 = vmatprep.mubr.bf16.mxu0 0
    %2887 = vmatmul.mubr.bf16.gmra.mrb[0].mxu0 %v2614
    %v2888 = vpop.f32.mrb[0].mxu0
    %v2889 = vadd.f32 %v2628, %v2888
    %v2890 = vpop.f32.mrb[0].mxu0
    %v2891 = vpop.f32.mrb[0].mxu0
    %v2892 = vadd.f32 %v2628, %v2891
    %v2893 = vpop.f32.mrb[0].mxu0
    %2894 = vmatprep.mubr.bf16.mxu0 0
    %2895 = vmatmul.mubr.bf16.gmra.mrb[0].mxu0 %v2615
    %v2896 = vpop.f32.mrb[0].mxu0
    %v2897 = vadd.f32 %v2628, %v2896
    %v2898 = vpop.f32.mrb[0].mxu0
    %v2899 = vpop.f32.mrb[0].mxu0
    %v2900 = vadd.f32 %v2628, %v2899
    %v2901 = vpop.f32.mrb[0].mxu0
    %2902 = vmatprep.mubr.bf16.mxu0 0
    %2903 = vmatmul.mubr.bf16.gmra.mrb[0].mxu0 %v2616
    %v2904 = vpop.f32.mrb[0].mxu0
    %v2905 = vadd.f32 %v2628, %v2904
    %v2906 = vpop.f32.mrb[0].mxu0
    %v2907 = vpop.f32.mrb[0].mxu0
    %v2908 = vadd.f32 %v2628, %v2907
    %v2909 = vpop.f32.mrb[0].mxu0
    %2910 = vmatprep.mubr.bf16.mxu0 0
    %2911 = vmatmul.mubr.bf16.gmra.mrb[0].mxu0 %v2617
    %v2912 = vpop.f32.mrb[0].mxu0
    %v2913 = vadd.f32 %v2628, %v2912
    %v2914 = vpop.f32.mrb[0].mxu0
    %v2915 = vpop.f32.mrb[0].mxu0
    %v2916 = vadd.f32 %v2628, %v2915
    %v2917 = vpop.f32.mrb[0].mxu0
    %2918 = vmatprep.mubr.bf16.mxu0 0
    %2919 = vmatmul.mubr.bf16.gmra.mrb[0].mxu0 %v2618
    %v2920 = vpop.f32.mrb[0].mxu0
    %v2921 = vadd.f32 %v2628, %v2920
    %v2922 = vpop.f32.mrb[0].mxu0
    %v2923 = vpop.f32.mrb[0].mxu0
    %v2924 = vadd.f32 %v2628, %v2923
    %v2925 = vpop.f32.mrb[0].mxu0
    %2926 = vmatprep.mubr.bf16.mxu0 0
    %2927 = vmatmul.mubr.bf16.gmra.mrb[0].mxu0 %v2619
    %v2928 = vpop.f32.mrb[0].mxu0
    %v2929 = vadd.f32 %v2628, %v2928
    %v2930 = vpop.f32.mrb[0].mxu0
    %v2931 = vpop.f32.mrb[0].mxu0
    %v2932 = vadd.f32 %v2628, %v2931
    %v2933 = vpop.f32.mrb[0].mxu0
    %2934 = vmatprep.mubr.bf16.mxu0 0
    %2935 = vmatmul.mubr.bf16.gmra.mrb[0].mxu0 %v2620
    %v2936 = vpop.f32.mrb[0].mxu0
    %v2937 = vadd.f32 %v2628, %v2936
    %v2938 = vpop.f32.mrb[0].mxu0
    %v2939 = vpop.f32.mrb[0].mxu0
    %v2940 = vadd.f32 %v2628, %v2939
    %v2941 = vpop.f32.mrb[0].mxu0
    %2942 = vmatprep.mubr.bf16.mxu0 0
    %2943 = vmatmul.mubr.bf16.gmra.mrb[0].mxu0 %v2621
    %v2944 = vpop.f32.mrb[0].mxu0
    %v2945 = vadd.f32 %v2628, %v2944
    %v2946 = vpop.f32.mrb[0].mxu0
    %v2947 = vpop.f32.mrb[0].mxu0
    %v2948 = vadd.f32 %v2628, %v2947
    %v2949 = vpop.f32.mrb[0].mxu0
    %2950 = vmatprep.mubr.bf16.mxu0 0
    %2951 = vmatmul.mubr.bf16.gmra.mrb[0].mxu0 %v2622
    %v2952 = vpop.f32.mrb[0].mxu0
    %v2953 = vadd.f32 %v2628, %v2952
    %v2954 = vpop.f32.mrb[0].mxu0
    %v2955 = vpop.f32.mrb[0].mxu0
    %v2956 = vadd.f32 %v2628, %v2955
    %v2957 = vpop.f32.mrb[0].mxu0
    %2958 = vmatprep.mubr.bf16.mxu0 0
    %2959 = vmatmul.mubr.bf16.gmra.mrb[0].mxu0 %v2623
    %v2960 = vpop.f32.mrb[0].mxu0
    %v2961 = vadd.f32 %v2628, %v2960
    %v2962 = vpop.f32.mrb[0].mxu0
    %v2963 = vpop.f32.mrb[0].mxu0
    %v2964 = vadd.f32 %v2628, %v2963
    %v2965 = vpop.f32.mrb[0].mxu0
    %2966 = vdwg.mxu0
    %2967 = vadd.xlane.f32.xlu0 %v2713
    %v2968 = vpop.xlane.xlu0 %2967
    %2969 = vadd.xlane.f32.xlu0 %v2716
    %v2970 = vpop.xlane.xlu0 %2969
    %2971 = vadd.xlane.f32.xlu0 %v2721
    %v2972 = vpop.xlane.xlu0 %2971
    %2973 = vadd.xlane.f32.xlu0 %v2724
    %v2974 = vpop.xlane.xlu0 %2973
    %2975 = vadd.xlane.f32.xlu0 %v2729
    %v2976 = vpop.xlane.xlu0 %2975
    %2977 = vadd.xlane.f32.xlu0 %v2732
    %v2978 = vpop.xlane.xlu0 %2977
    %2979 = vadd.xlane.f32.xlu0 %v2737
    %v2980 = vpop.xlane.xlu0 %2979
    %2981 = vadd.xlane.f32.xlu0 %v2740
    %v2982 = vpop.xlane.xlu0 %2981
    %2983 = vadd.xlane.f32.xlu0 %v2745
    %v2984 = vpop.xlane.xlu0 %2983
    %2985 = vadd.xlane.f32.xlu0 %v2748
    %v2986 = vpop.xlane.xlu0 %2985
    %2987 = vadd.xlane.f32.xlu0 %v2753
    %v2988 = vpop.xlane.xlu0 %2987
    %2989 = vadd.xlane.f32.xlu0 %v2756
    %v2990 = vpop.xlane.xlu0 %2989
    %2991 = vadd.xlane.f32.xlu0 %v2761
    %v2992 = vpop.xlane.xlu0 %2991
    %2993 = vadd.xlane.f32.xlu0 %v2764
    %v2994 = vpop.xlane.xlu0 %2993
    %2995 = vadd.xlane.f32.xlu0 %v2769
    %v2996 = vpop.xlane.xlu0 %2995
    %2997 = vadd.xlane.f32.xlu0 %v2772
    %v2998 = vpop.xlane.xlu0 %2997
    %2999 = vadd.xlane.f32.xlu0 %v2777
    %v3000 = vpop.xlane.xlu0 %2999
    %3001 = vadd.xlane.f32.xlu0 %v2780
    %v3002 = vpop.xlane.xlu0 %3001
    %3003 = vadd.xlane.f32.xlu0 %v2785
    %v3004 = vpop.xlane.xlu0 %3003
    %3005 = vadd.xlane.f32.xlu0 %v2788
    %v3006 = vpop.xlane.xlu0 %3005
    %3007 = vadd.xlane.f32.xlu0 %v2793
    %v3008 = vpop.xlane.xlu0 %3007
    %3009 = vadd.xlane.f32.xlu0 %v2796
    %v3010 = vpop.xlane.xlu0 %3009
    %3011 = vadd.xlane.f32.xlu0 %v2801
    %v3012 = vpop.xlane.xlu0 %3011
    %3013 = vadd.xlane.f32.xlu0 %v2804
    %v3014 = vpop.xlane.xlu0 %3013
    %3015 = vadd.xlane.f32.xlu0 %v2809
    %v3016 = vpop.xlane.xlu0 %3015
    %3017 = vadd.xlane.f32.xlu0 %v2812
    %v3018 = vpop.xlane.xlu0 %3017
    %3019 = vadd.xlane.f32.xlu0 %v2817
    %v3020 = vpop.xlane.xlu0 %3019
    %3021 = vadd.xlane.f32.xlu0 %v2820
    %v3022 = vpop.xlane.xlu0 %3021
    %3023 = vadd.xlane.f32.xlu0 %v2825
    %v3024 = vpop.xlane.xlu0 %3023
    %3025 = vadd.xlane.f32.xlu0 %v2828
    %v3026 = vpop.xlane.xlu0 %3025
    %3027 = vadd.xlane.f32.xlu0 %v2833
    %v3028 = vpop.xlane.xlu0 %3027
    %3029 = vadd.xlane.f32.xlu0 %v2836
    %v3030 = vpop.xlane.xlu0 %3029
    %3031 = vadd.xlane.f32.xlu0 %v2841
    %v3032 = vpop.xlane.xlu0 %3031
    %3033 = vadd.xlane.f32.xlu0 %v2844
    %v3034 = vpop.xlane.xlu0 %3033
    %3035 = vadd.xlane.f32.xlu0 %v2849
    %v3036 = vpop.xlane.xlu0 %3035
    %3037 = vadd.xlane.f32.xlu0 %v2852
    %v3038 = vpop.xlane.xlu0 %3037
    %3039 = vadd.xlane.f32.xlu0 %v2857
    %v3040 = vpop.xlane.xlu0 %3039
    %3041 = vadd.xlane.f32.xlu0 %v2860
    %v3042 = vpop.xlane.xlu0 %3041
    %3043 = vadd.xlane.f32.xlu0 %v2865
    %v3044 = vpop.xlane.xlu0 %3043
    %3045 = vadd.xlane.f32.xlu0 %v2868
    %v3046 = vpop.xlane.xlu0 %3045
    %3047 = vadd.xlane.f32.xlu0 %v2873
    %v3048 = vpop.xlane.xlu0 %3047
    %3049 = vadd.xlane.f32.xlu0 %v2876
    %v3050 = vpop.xlane.xlu0 %3049
    %3051 = vadd.xlane.f32.xlu0 %v2881
    %v3052 = vpop.xlane.xlu0 %3051
    %3053 = vadd.xlane.f32.xlu0 %v2884
    %v3054 = vpop.xlane.xlu0 %3053
    %3055 = vadd.xlane.f32.xlu0 %v2889
    %v3056 = vpop.xlane.xlu0 %3055
    %3057 = vadd.xlane.f32.xlu0 %v2892
    %v3058 = vpop.xlane.xlu0 %3057
    %3059 = vadd.xlane.f32.xlu0 %v2897
    %v3060 = vpop.xlane.xlu0 %3059
    %3061 = vadd.xlane.f32.xlu0 %v2900
    %v3062 = vpop.xlane.xlu0 %3061
    %3063 = vadd.xlane.f32.xlu0 %v2905
    %v3064 = vpop.xlane.xlu0 %3063
    %3065 = vadd.xlane.f32.xlu0 %v2908
    %v3066 = vpop.xlane.xlu0 %3065
    %3067 = vadd.xlane.f32.xlu0 %v2913
    %v3068 = vpop.xlane.xlu0 %3067
    %3069 = vadd.xlane.f32.xlu0 %v2916
    %v3070 = vpop.xlane.xlu0 %3069
    %3071 = vadd.xlane.f32.xlu0 %v2921
    %v3072 = vpop.xlane.xlu0 %3071
    %3073 = vadd.xlane.f32.xlu0 %v2924
    %v3074 = vpop.xlane.xlu0 %3073
    %3075 = vadd.xlane.f32.xlu0 %v2929
    %v3076 = vpop.xlane.xlu0 %3075
    %3077 = vadd.xlane.f32.xlu0 %v2932
    %v3078 = vpop.xlane.xlu0 %3077
    %3079 = vadd.xlane.f32.xlu0 %v2937
    %v3080 = vpop.xlane.xlu0 %3079
    %3081 = vadd.xlane.f32.xlu0 %v2940
    %v3082 = vpop.xlane.xlu0 %3081
    %3083 = vadd.xlane.f32.xlu0 %v2945
    %v3084 = vpop.xlane.xlu0 %3083
    %3085 = vadd.xlane.f32.xlu0 %v2948
    %v3086 = vpop.xlane.xlu0 %3085
    %3087 = vadd.xlane.f32.xlu0 %v2953
    %v3088 = vpop.xlane.xlu0 %3087
    %3089 = vadd.xlane.f32.xlu0 %v2956
    %v3090 = vpop.xlane.xlu0 %3089
    %3091 = vadd.xlane.f32.xlu0 %v2961
    %v3092 = vpop.xlane.xlu0 %3091
    %3093 = vadd.xlane.f32.xlu0 %v2964
    %v3094 = vpop.xlane.xlu0 %3093
    %v3095 = vrcp.pop 128.0
    %v3096 = vmul.f32 %v2968, %v3095
    %v3097 = vmul.f32 %v2970, %v3095
    %v3098 = vmul.f32 %v2972, %v3095
    %v3099 = vmul.f32 %v2974, %v3095
    %v3100 = vmul.f32 %v2976, %v3095
    %v3101 = vmul.f32 %v2978, %v3095
    %v3102 = vmul.f32 %v2980, %v3095
    %v3103 = vmul.f32 %v2982, %v3095
    %v3104 = vmul.f32 %v2984, %v3095
    %v3105 = vmul.f32 %v2986, %v3095
    %v3106 = vmul.f32 %v2988, %v3095
    %v3107 = vmul.f32 %v2990, %v3095
    %v3108 = vmul.f32 %v2992, %v3095
    %v3109 = vmul.f32 %v2994, %v3095
    %v3110 = vmul.f32 %v2996, %v3095
    %v3111 = vmul.f32 %v2998, %v3095
    %v3112 = vmul.f32 %v3000, %v3095
    %v3113 = vmul.f32 %v3002, %v3095
    %v3114 = vmul.f32 %v3004, %v3095
    %v3115 = vmul.f32 %v3006, %v3095
    %v3116 = vmul.f32 %v3008, %v3095
    %v3117 = vmul.f32 %v3010, %v3095
    %v3118 = vmul.f32 %v3012, %v3095
    %v3119 = vmul.f32 %v3014, %v3095
    %v3120 = vmul.f32 %v3016, %v3095
    %v3121 = vmul.f32 %v3018, %v3095
    %v3122 = vmul.f32 %v3020, %v3095
    %v3123 = vmul.f32 %v3022, %v3095
    %v3124 = vmul.f32 %v3024, %v3095
    %v3125 = vmul.f32 %v3026, %v3095
    %v3126 = vmul.f32 %v3028, %v3095
    %v3127 = vmul.f32 %v3030, %v3095
    %v3128 = vmul.f32 %v3032, %v3095
    %v3129 = vmul.f32 %v3034, %v3095
    %v3130 = vmul.f32 %v3036, %v3095
    %v3131 = vmul.f32 %v3038, %v3095
    %v3132 = vmul.f32 %v3040, %v3095
    %v3133 = vmul.f32 %v3042, %v3095
    %v3134 = vmul.f32 %v3044, %v3095
    %v3135 = vmul.f32 %v3046, %v3095
    %v3136 = vmul.f32 %v3048, %v3095
    %v3137 = vmul.f32 %v3050, %v3095
    %v3138 = vmul.f32 %v3052, %v3095
    %v3139 = vmul.f32 %v3054, %v3095
    %v3140 = vmul.f32 %v3056, %v3095
    %v3141 = vmul.f32 %v3058, %v3095
    %v3142 = vmul.f32 %v3060, %v3095
    %v3143 = vmul.f32 %v3062, %v3095
    %v3144 = vmul.f32 %v3064, %v3095
    %v3145 = vmul.f32 %v3066, %v3095
    %v3146 = vmul.f32 %v3068, %v3095
    %v3147 = vmul.f32 %v3070, %v3095
    %v3148 = vmul.f32 %v3072, %v3095
    %v3149 = vmul.f32 %v3074, %v3095
    %v3150 = vmul.f32 %v3076, %v3095
    %v3151 = vmul.f32 %v3078, %v3095
    %v3152 = vmul.f32 %v3080, %v3095
    %v3153 = vmul.f32 %v3082, %v3095
    %v3154 = vmul.f32 %v3084, %v3095
    %v3155 = vmul.f32 %v3086, %v3095
    %v3156 = vmul.f32 %v3088, %v3095
    %v3157 = vmul.f32 %v3090, %v3095
    %v3158 = vmul.f32 %v3092, %v3095
    %v3159 = vmul.f32 %v3094, %v3095
    %v3160 = vsub.f32 %v2713, %v3096
    %v3161 = vsub.f32 %v2716, %v3097
    %v3162 = vsub.f32 %v2721, %v3098
    %v3163 = vsub.f32 %v2724, %v3099
    %v3164 = vsub.f32 %v2729, %v3100
    %v3165 = vsub.f32 %v2732, %v3101
    %v3166 = vsub.f32 %v2737, %v3102
    %v3167 = vsub.f32 %v2740, %v3103
    %v3168 = vsub.f32 %v2745, %v3104
    %v3169 = vsub.f32 %v2748, %v3105
    %v3170 = vsub.f32 %v2753, %v3106
    %v3171 = vsub.f32 %v2756, %v3107
    %v3172 = vsub.f32 %v2761, %v3108
    %v3173 = vsub.f32 %v2764, %v3109
    %v3174 = vsub.f32 %v2769, %v3110
    %v3175 = vsub.f32 %v2772, %v3111
    %v3176 = vsub.f32 %v2777, %v3112
    %v3177 = vsub.f32 %v2780, %v3113
    %v3178 = vsub.f32 %v2785, %v3114
    %v3179 = vsub.f32 %v2788, %v3115
    %v3180 = vsub.f32 %v2793, %v3116
    %v3181 = vsub.f32 %v2796, %v3117
    %v3182 = vsub.f32 %v2801, %v3118
    %v3183 = vsub.f32 %v2804, %v3119
    %v3184 = vsub.f32 %v2809, %v3120
    %v3185 = vsub.f32 %v2812, %v3121
    %v3186 = vsub.f32 %v2817, %v3122
    %v3187 = vsub.f32 %v2820, %v3123
    %v3188 = vsub.f32 %v2825, %v3124
    %v3189 = vsub.f32 %v2828, %v3125
    %v3190 = vsub.f32 %v2833, %v3126
    %v3191 = vsub.f32 %v2836, %v3127
    %v3192 = vsub.f32 %v2841, %v3128
    %v3193 = vsub.f32 %v2844, %v3129
    %v3194 = vsub.f32 %v2849, %v3130
    %v3195 = vsub.f32 %v2852, %v3131
    %v3196 = vsub.f32 %v2857, %v3132
    %v3197 = vsub.f32 %v2860, %v3133
    %v3198 = vsub.f32 %v2865, %v3134
    %v3199 = vsub.f32 %v2868, %v3135
    %v3200 = vsub.f32 %v2873, %v3136
    %v3201 = vsub.f32 %v2876, %v3137
    %v3202 = vsub.f32 %v2881, %v3138
    %v3203 = vsub.f32 %v2884, %v3139
    %v3204 = vsub.f32 %v2889, %v3140
    %v3205 = vsub.f32 %v2892, %v3141
    %v3206 = vsub.f32 %v2897, %v3142
    %v3207 = vsub.f32 %v2900, %v3143
    %v3208 = vsub.f32 %v2905, %v3144
    %v3209 = vsub.f32 %v2908, %v3145
    %v3210 = vsub.f32 %v2913, %v3146
    %v3211 = vsub.f32 %v2916, %v3147
    %v3212 = vsub.f32 %v2921, %v3148
    %v3213 = vsub.f32 %v2924, %v3149
    %v3214 = vsub.f32 %v2929, %v3150
    %v3215 = vsub.f32 %v2932, %v3151
    %v3216 = vsub.f32 %v2937, %v3152
    %v3217 = vsub.f32 %v2940, %v3153
    %v3218 = vsub.f32 %v2945, %v3154
    %v3219 = vsub.f32 %v2948, %v3155
    %v3220 = vsub.f32 %v2953, %v3156
    %v3221 = vsub.f32 %v2956, %v3157
    %v3222 = vsub.f32 %v2961, %v3158
    %v3223 = vsub.f32 %v2964, %v3159
    %v3224 = vmul.f32 %v3160, %v3160
    %v3225 = vmul.f32 %v3161, %v3161
    %v3226 = vmul.f32 %v3162, %v3162
    %v3227 = vmul.f32 %v3163, %v3163
    %v3228 = vmul.f32 %v3164, %v3164
    %v3229 = vmul.f32 %v3165, %v3165
    %v3230 = vmul.f32 %v3166, %v3166
    %v3231 = vmul.f32 %v3167, %v3167
    %v3232 = vmul.f32 %v3168, %v3168
    %v3233 = vmul.f32 %v3169, %v3169
    %v3234 = vmul.f32 %v3170, %v3170
    %v3235 = vmul.f32 %v3171, %v3171
    %v3236 = vmul.f32 %v3172, %v3172
    %v3237 = vmul.f32 %v3173, %v3173
    %v3238 = vmul.f32 %v3174, %v3174
    %v3239 = vmul.f32 %v3175, %v3175
    %v3240 = vmul.f32 %v3176, %v3176
    %v3241 = vmul.f32 %v3177, %v3177
    %v3242 = vmul.f32 %v3178, %v3178
    %v3243 = vmul.f32 %v3179, %v3179
    %v3244 = vmul.f32 %v3180, %v3180
    %v3245 = vmul.f32 %v3181, %v3181
    %v3246 = vmul.f32 %v3182, %v3182
    %v3247 = vmul.f32 %v3183, %v3183
    %v3248 = vmul.f32 %v3184, %v3184
    %v3249 = vmul.f32 %v3185, %v3185
    %v3250 = vmul.f32 %v3186, %v3186
    %v3251 = vmul.f32 %v3187, %v3187
    %v3252 = vmul.f32 %v3188, %v3188
    %v3253 = vmul.f32 %v3189, %v3189
    %v3254 = vmul.f32 %v3190, %v3190
    %v3255 = vmul.f32 %v3191, %v3191
    %v3256 = vmul.f32 %v3192, %v3192
    %v3257 = vmul.f32 %v3193, %v3193
    %v3258 = vmul.f32 %v3194, %v3194
    %v3259 = vmul.f32 %v3195, %v3195
    %v3260 = vmul.f32 %v3196, %v3196
    %v3261 = vmul.f32 %v3197, %v3197
    %v3262 = vmul.f32 %v3198, %v3198
    %v3263 = vmul.f32 %v3199, %v3199
    %v3264 = vmul.f32 %v3200, %v3200
    %v3265 = vmul.f32 %v3201, %v3201
    %v3266 = vmul.f32 %v3202, %v3202
    %v3267 = vmul.f32 %v3203, %v3203
    %v3268 = vmul.f32 %v3204, %v3204
    %v3269 = vmul.f32 %v3205, %v3205
    %v3270 = vmul.f32 %v3206, %v3206
    %v3271 = vmul.f32 %v3207, %v3207
    %v3272 = vmul.f32 %v3208, %v3208
    %v3273 = vmul.f32 %v3209, %v3209
    %v3274 = vmul.f32 %v3210, %v3210
    %v3275 = vmul.f32 %v3211, %v3211
    %v3276 = vmul.f32 %v3212, %v3212
    %v3277 = vmul.f32 %v3213, %v3213
    %v3278 = vmul.f32 %v3214, %v3214
    %v3279 = vmul.f32 %v3215, %v3215
    %v3280 = vmul.f32 %v3216, %v3216
    %v3281 = vmul.f32 %v3217, %v3217
    %v3282 = vmul.f32 %v3218, %v3218
    %v3283 = vmul.f32 %v3219, %v3219
    %v3284 = vmul.f32 %v3220, %v3220
    %v3285 = vmul.f32 %v3221, %v3221
    %v3286 = vmul.f32 %v3222, %v3222
    %v3287 = vmul.f32 %v3223, %v3223
    %3288 = vadd.xlane.f32.xlu0 %v3224
    %v3289 = vpop.xlane.xlu0 %3288
    %3290 = vadd.xlane.f32.xlu0 %v3225
    %v3291 = vpop.xlane.xlu0 %3290
    %3292 = vadd.xlane.f32.xlu0 %v3226
    %v3293 = vpop.xlane.xlu0 %3292
    %3294 = vadd.xlane.f32.xlu0 %v3227
    %v3295 = vpop.xlane.xlu0 %3294
    %3296 = vadd.xlane.f32.xlu0 %v3228
    %v3297 = vpop.xlane.xlu0 %3296
    %3298 = vadd.xlane.f32.xlu0 %v3229
    %v3299 = vpop.xlane.xlu0 %3298
    %3300 = vadd.xlane.f32.xlu0 %v3230
    %v3301 = vpop.xlane.xlu0 %3300
    %3302 = vadd.xlane.f32.xlu0 %v3231
    %v3303 = vpop.xlane.xlu0 %3302
    %3304 = vadd.xlane.f32.xlu0 %v3232
    %v3305 = vpop.xlane.xlu0 %3304
    %3306 = vadd.xlane.f32.xlu0 %v3233
    %v3307 = vpop.xlane.xlu0 %3306
    %3308 = vadd.xlane.f32.xlu0 %v3234
    %v3309 = vpop.xlane.xlu0 %3308
    %3310 = vadd.xlane.f32.xlu0 %v3235
    %v3311 = vpop.xlane.xlu0 %3310
    %3312 = vadd.xlane.f32.xlu0 %v3236
    %v3313 = vpop.xlane.xlu0 %3312
    %3314 = vadd.xlane.f32.xlu0 %v3237
    %v3315 = vpop.xlane.xlu0 %3314
    %3316 = vadd.xlane.f32.xlu0 %v3238
    %v3317 = vpop.xlane.xlu0 %3316
    %3318 = vadd.xlane.f32.xlu0 %v3239
    %v3319 = vpop.xlane.xlu0 %3318
    %3320 = vadd.xlane.f32.xlu0 %v3240
    %v3321 = vpop.xlane.xlu0 %3320
    %3322 = vadd.xlane.f32.xlu0 %v3241
    %v3323 = vpop.xlane.xlu0 %3322
    %3324 = vadd.xlane.f32.xlu0 %v3242
    %v3325 = vpop.xlane.xlu0 %3324
    %3326 = vadd.xlane.f32.xlu0 %v3243
    %v3327 = vpop.xlane.xlu0 %3326
    %3328 = vadd.xlane.f32.xlu0 %v3244
    %v3329 = vpop.xlane.xlu0 %3328
    %3330 = vadd.xlane.f32.xlu0 %v3245
    %v3331 = vpop.xlane.xlu0 %3330
    %3332 = vadd.xlane.f32.xlu0 %v3246
    %v3333 = vpop.xlane.xlu0 %3332
    %3334 = vadd.xlane.f32.xlu0 %v3247
    %v3335 = vpop.xlane.xlu0 %3334
    %3336 = vadd.xlane.f32.xlu0 %v3248
    %v3337 = vpop.xlane.xlu0 %3336
    %3338 = vadd.xlane.f32.xlu0 %v3249
    %v3339 = vpop.xlane.xlu0 %3338
    %3340 = vadd.xlane.f32.xlu0 %v3250
    %v3341 = vpop.xlane.xlu0 %3340
    %3342 = vadd.xlane.f32.xlu0 %v3251
    %v3343 = vpop.xlane.xlu0 %3342
    %3344 = vadd.xlane.f32.xlu0 %v3252
    %v3345 = vpop.xlane.xlu0 %3344
    %3346 = vadd.xlane.f32.xlu0 %v3253
    %v3347 = vpop.xlane.xlu0 %3346
    %3348 = vadd.xlane.f32.xlu0 %v3254
    %v3349 = vpop.xlane.xlu0 %3348
    %3350 = vadd.xlane.f32.xlu0 %v3255
    %v3351 = vpop.xlane.xlu0 %3350
    %3352 = vadd.xlane.f32.xlu0 %v3256
    %v3353 = vpop.xlane.xlu0 %3352
    %3354 = vadd.xlane.f32.xlu0 %v3257
    %v3355 = vpop.xlane.xlu0 %3354
    %3356 = vadd.xlane.f32.xlu0 %v3258
    %v3357 = vpop.xlane.xlu0 %3356
    %3358 = vadd.xlane.f32.xlu0 %v3259
    %v3359 = vpop.xlane.xlu0 %3358
    %3360 = vadd.xlane.f32.xlu0 %v3260
    %v3361 = vpop.xlane.xlu0 %3360
    %3362 = vadd.xlane.f32.xlu0 %v3261
    %v3363 = vpop.xlane.xlu0 %3362
    %3364 = vadd.xlane.f32.xlu0 %v3262
    %v3365 = vpop.xlane.xlu0 %3364
    %3366 = vadd.xlane.f32.xlu0 %v3263
    %v3367 = vpop.xlane.xlu0 %3366
    %3368 = vadd.xlane.f32.xlu0 %v3264
    %v3369 = vpop.xlane.xlu0 %3368
    %3370 = vadd.xlane.f32.xlu0 %v3265
    %v3371 = vpop.xlane.xlu0 %3370
    %3372 = vadd.xlane.f32.xlu0 %v3266
    %v3373 = vpop.xlane.xlu0 %3372
    %3374 = vadd.xlane.f32.xlu0 %v3267
    %v3375 = vpop.xlane.xlu0 %3374
    %3376 = vadd.xlane.f32.xlu0 %v3268
    %v3377 = vpop.xlane.xlu0 %3376
    %3378 = vadd.xlane.f32.xlu0 %v3269
    %v3379 = vpop.xlane.xlu0 %3378
    %3380 = vadd.xlane.f32.xlu0 %v3270
    %v3381 = vpop.xlane.xlu0 %3380
    %3382 = vadd.xlane.f32.xlu0 %v3271
    %v3383 = vpop.xlane.xlu0 %3382
    %3384 = vadd.xlane.f32.xlu0 %v3272
    %v3385 = vpop.xlane.xlu0 %3384
    %3386 = vadd.xlane.f32.xlu0 %v3273
    %v3387 = vpop.xlane.xlu0 %3386
    %3388 = vadd.xlane.f32.xlu0 %v3274
    %v3389 = vpop.xlane.xlu0 %3388
    %3390 = vadd.xlane.f32.xlu0 %v3275
    %v3391 = vpop.xlane.xlu0 %3390
    %3392 = vadd.xlane.f32.xlu0 %v3276
    %v3393 = vpop.xlane.xlu0 %3392
    %3394 = vadd.xlane.f32.xlu0 %v3277
    %v3395 = vpop.xlane.xlu0 %3394
    %3396 = vadd.xlane.f32.xlu0 %v3278
    %v3397 = vpop.xlane.xlu0 %3396
    %3398 = vadd.xlane.f32.xlu0 %v3279
    %v3399 = vpop.xlane.xlu0 %3398
    %3400 = vadd.xlane.f32.xlu0 %v3280
    %v3401 = vpop.xlane.xlu0 %3400
    %3402 = vadd.xlane.f32.xlu0 %v3281
    %v3403 = vpop.xlane.xlu0 %3402
    %3404 = vadd.xlane.f32.xlu0 %v3282
    %v3405 = vpop.xlane.xlu0 %3404
    %3406 = vadd.xlane.f32.xlu0 %v3283
    %v3407 = vpop.xlane.xlu0 %3406
    %3408 = vadd.xlane.f32.xlu0 %v3284
    %v3409 = vpop.xlane.xlu0 %3408
    %3410 = vadd.xlane.f32.xlu0 %v3285
    %v3411 = vpop.xlane.xlu0 %3410
    %3412 = vadd.xlane.f32.xlu0 %v3286
    %v3413 = vpop.xlane.xlu0 %3412
    %3414 = vadd.xlane.f32.xlu0 %v3287
    %v3415 = vpop.xlane.xlu0 %3414
    %v3416 = vmul.f32 %v3289, %v3095
    %v3417 = vmul.f32 %v3291, %v3095
    %v3418 = vmul.f32 %v3293, %v3095
    %v3419 = vmul.f32 %v3295, %v3095
    %v3420 = vmul.f32 %v3297, %v3095
    %v3421 = vmul.f32 %v3299, %v3095
    %v3422 = vmul.f32 %v3301, %v3095
    %v3423 = vmul.f32 %v3303, %v3095
    %v3424 = vmul.f32 %v3305, %v3095
    %v3425 = vmul.f32 %v3307, %v3095
    %v3426 = vmul.f32 %v3309, %v3095
    %v3427 = vmul.f32 %v3311, %v3095
    %v3428 = vmul.f32 %v3313, %v3095
    %v3429 = vmul.f32 %v3315, %v3095
    %v3430 = vmul.f32 %v3317, %v3095
    %v3431 = vmul.f32 %v3319, %v3095
    %v3432 = vmul.f32 %v3321, %v3095
    %v3433 = vmul.f32 %v3323, %v3095
    %v3434 = vmul.f32 %v3325, %v3095
    %v3435 = vmul.f32 %v3327, %v3095
    %v3436 = vmul.f32 %v3329, %v3095
    %v3437 = vmul.f32 %v3331, %v3095
    %v3438 = vmul.f32 %v3333, %v3095
    %v3439 = vmul.f32 %v3335, %v3095
    %v3440 = vmul.f32 %v3337, %v3095
    %v3441 = vmul.f32 %v3339, %v3095
    %v3442 = vmul.f32 %v3341, %v3095
    %v3443 = vmul.f32 %v3343, %v3095
    %v3444 = vmul.f32 %v3345, %v3095
    %v3445 = vmul.f32 %v3347, %v3095
    %v3446 = vmul.f32 %v3349, %v3095
    %v3447 = vmul.f32 %v3351, %v3095
    %v3448 = vmul.f32 %v3353, %v3095
    %v3449 = vmul.f32 %v3355, %v3095
    %v3450 = vmul.f32 %v3357, %v3095
    %v3451 = vmul.f32 %v3359, %v3095
    %v3452 = vmul.f32 %v3361, %v3095
    %v3453 = vmul.f32 %v3363, %v3095
    %v3454 = vmul.f32 %v3365, %v3095
    %v3455 = vmul.f32 %v3367, %v3095
    %v3456 = vmul.f32 %v3369, %v3095
    %v3457 = vmul.f32 %v3371, %v3095
    %v3458 = vmul.f32 %v3373, %v3095
    %v3459 = vmul.f32 %v3375, %v3095
    %v3460 = vmul.f32 %v3377, %v3095
    %v3461 = vmul.f32 %v3379, %v3095
    %v3462 = vmul.f32 %v3381, %v3095
    %v3463 = vmul.f32 %v3383, %v3095
    %v3464 = vmul.f32 %v3385, %v3095
    %v3465 = vmul.f32 %v3387, %v3095
    %v3466 = vmul.f32 %v3389, %v3095
    %v3467 = vmul.f32 %v3391, %v3095
    %v3468 = vmul.f32 %v3393, %v3095
    %v3469 = vmul.f32 %v3395, %v3095
    %v3470 = vmul.f32 %v3397, %v3095
    %v3471 = vmul.f32 %v3399, %v3095
    %v3472 = vmul.f32 %v3401, %v3095
    %v3473 = vmul.f32 %v3403, %v3095
    %v3474 = vmul.f32 %v3405, %v3095
    %v3475 = vmul.f32 %v3407, %v3095
    %v3476 = vmul.f32 %v3409, %v3095
    %v3477 = vmul.f32 %v3411, %v3095
    %v3478 = vmul.f32 %v3413, %v3095
    %v3479 = vmul.f32 %v3415, %v3095
    %v3480 = vadd.f32 %v3416, 1e-05
    %v3481 = vadd.f32 %v3417, 1e-05
    %v3482 = vadd.f32 %v3418, 1e-05
    %v3483 = vadd.f32 %v3419, 1e-05
    %v3484 = vadd.f32 %v3420, 1e-05
    %v3485 = vadd.f32 %v3421, 1e-05
    %v3486 = vadd.f32 %v3422, 1e-05
    %v3487 = vadd.f32 %v3423, 1e-05
    %v3488 = vadd.f32 %v3424, 1e-05
    %v3489 = vadd.f32 %v3425, 1e-05
    %v3490 = vadd.f32 %v3426, 1e-05
    %v3491 = vadd.f32 %v3427, 1e-05
    %v3492 = vadd.f32 %v3428, 1e-05
    %v3493 = vadd.f32 %v3429, 1e-05
    %v3494 = vadd.f32 %v3430, 1e-05
    %v3495 = vadd.f32 %v3431, 1e-05
    %v3496 = vadd.f32 %v3432, 1e-05
    %v3497 = vadd.f32 %v3433, 1e-05
    %v3498 = vadd.f32 %v3434, 1e-05
    %v3499 = vadd.f32 %v3435, 1e-05
    %v3500 = vadd.f32 %v3436, 1e-05
    %v3501 = vadd.f32 %v3437, 1e-05
    %v3502 = vadd.f32 %v3438, 1e-05
    %v3503 = vadd.f32 %v3439, 1e-05
    %v3504 = vadd.f32 %v3440, 1e-05
    %v3505 = vadd.f32 %v3441, 1e-05
    %v3506 = vadd.f32 %v3442, 1e-05
    %v3507 = vadd.f32 %v3443, 1e-05
    %v3508 = vadd.f32 %v3444, 1e-05
    %v3509 = vadd.f32 %v3445, 1e-05
    %v3510 = vadd.f32 %v3446, 1e-05
    %v3511 = vadd.f32 %v3447, 1e-05
    %v3512 = vadd.f32 %v3448, 1e-05
    %v3513 = vadd.f32 %v3449, 1e-05
    %v3514 = vadd.f32 %v3450, 1e-05
    %v3515 = vadd.f32 %v3451, 1e-05
    %v3516 = vadd.f32 %v3452, 1e-05
    %v3517 = vadd.f32 %v3453, 1e-05
    %v3518 = vadd.f32 %v3454, 1e-05
    %v3519 = vadd.f32 %v3455, 1e-05
    %v3520 = vadd.f32 %v3456, 1e-05
    %v3521 = vadd.f32 %v3457, 1e-05
    %v3522 = vadd.f32 %v3458, 1e-05
    %v3523 = vadd.f32 %v3459, 1e-05
    %v3524 = vadd.f32 %v3460, 1e-05
    %v3525 = vadd.f32 %v3461, 1e-05
    %v3526 = vadd.f32 %v3462, 1e-05
    %v3527 = vadd.f32 %v3463, 1e-05
    %v3528 = vadd.f32 %v3464, 1e-05
    %v3529 = vadd.f32 %v3465, 1e-05
    %v3530 = vadd.f32 %v3466, 1e-05
    %v3531 = vadd.f32 %v3467, 1e-05
    %v3532 = vadd.f32 %v3468, 1e-05
    %v3533 = vadd.f32 %v3469, 1e-05
    %v3534 = vadd.f32 %v3470, 1e-05
    %v3535 = vadd.f32 %v3471, 1e-05
    %v3536 = vadd.f32 %v3472, 1e-05
    %v3537 = vadd.f32 %v3473, 1e-05
    %v3538 = vadd.f32 %v3474, 1e-05
    %v3539 = vadd.f32 %v3475, 1e-05
    %v3540 = vadd.f32 %v3476, 1e-05
    %v3541 = vadd.f32 %v3477, 1e-05
    %v3542 = vadd.f32 %v3478, 1e-05
    %v3543 = vadd.f32 %v3479, 1e-05
    %v3544 = vrsqrt.pop %v3480
    %v3545 = vrsqrt.pop %v3481
    %v3546 = vrsqrt.pop %v3482
    %v3547 = vrsqrt.pop %v3483
    %v3548 = vrsqrt.pop %v3484
    %v3549 = vrsqrt.pop %v3485
    %v3550 = vrsqrt.pop %v3486
    %v3551 = vrsqrt.pop %v3487
    %v3552 = vrsqrt.pop %v3488
    %v3553 = vrsqrt.pop %v3489
    %v3554 = vrsqrt.pop %v3490
    %v3555 = vrsqrt.pop %v3491
    %v3556 = vrsqrt.pop %v3492
    %v3557 = vrsqrt.pop %v3493
    %v3558 = vrsqrt.pop %v3494
    %v3559 = vrsqrt.pop %v3495
    %v3560 = vrsqrt.pop %v3496
    %v3561 = vrsqrt.pop %v3497
    %v3562 = vrsqrt.pop %v3498
    %v3563 = vrsqrt.pop %v3499
    %v3564 = vrsqrt.pop %v3500
    %v3565 = vrsqrt.pop %v3501
    %v3566 = vrsqrt.pop %v3502
    %v3567 = vrsqrt.pop %v3503
    %v3568 = vrsqrt.pop %v3504
    %v3569 = vrsqrt.pop %v3505
    %v3570 = vrsqrt.pop %v3506
    %v3571 = vrsqrt.pop %v3507
    %v3572 = vrsqrt.pop %v3508
    %v3573 = vrsqrt.pop %v3509
    %v3574 = vrsqrt.pop %v3510
    %v3575 = vrsqrt.pop %v3511
    %v3576 = vrsqrt.pop %v3512
    %v3577 = vrsqrt.pop %v3513
    %v3578 = vrsqrt.pop %v3514
    %v3579 = vrsqrt.pop %v3515
    %v3580 = vrsqrt.pop %v3516
    %v3581 = vrsqrt.pop %v3517
    %v3582 = vrsqrt.pop %v3518
    %v3583 = vrsqrt.pop %v3519
    %v3584 = vrsqrt.pop %v3520
    %v3585 = vrsqrt.pop %v3521
    %v3586 = vrsqrt.pop %v3522
    %v3587 = vrsqrt.pop %v3523
    %v3588 = vrsqrt.pop %v3524
    %v3589 = vrsqrt.pop %v3525
    %v3590 = vrsqrt.pop %v3526
    %v3591 = vrsqrt.pop %v3527
    %v3592 = vrsqrt.pop %v3528
    %v3593 = vrsqrt.pop %v3529
    %v3594 = vrsqrt.pop %v3530
    %v3595 = vrsqrt.pop %v3531
    %v3596 = vrsqrt.pop %v3532
    %v3597 = vrsqrt.pop %v3533
    %v3598 = vrsqrt.pop %v3534
    %v3599 = vrsqrt.pop %v3535
    %v3600 = vrsqrt.pop %v3536
    %v3601 = vrsqrt.pop %v3537
    %v3602 = vrsqrt.pop %v3538
    %v3603 = vrsqrt.pop %v3539
    %v3604 = vrsqrt.pop %v3540
    %v3605 = vrsqrt.pop %v3541
    %v3606 = vrsqrt.pop %v3542
    %v3607 = vrsqrt.pop %v3543
    %v3608 = vmul.f32 %v3160, %v3544
    %v3609 = vmul.f32 %v3161, %v3545
    %v3610 = vmul.f32 %v3162, %v3546
    %v3611 = vmul.f32 %v3163, %v3547
    %v3612 = vmul.f32 %v3164, %v3548
    %v3613 = vmul.f32 %v3165, %v3549
    %v3614 = vmul.f32 %v3166, %v3550
    %v3615 = vmul.f32 %v3167, %v3551
    %v3616 = vmul.f32 %v3168, %v3552
    %v3617 = vmul.f32 %v3169, %v3553
    %v3618 = vmul.f32 %v3170, %v3554
    %v3619 = vmul.f32 %v3171, %v3555
    %v3620 = vmul.f32 %v3172, %v3556
    %v3621 = vmul.f32 %v3173, %v3557
    %v3622 = vmul.f32 %v3174, %v3558
    %v3623 = vmul.f32 %v3175, %v3559
    %v3624 = vmul.f32 %v3176, %v3560
    %v3625 = vmul.f32 %v3177, %v3561
    %v3626 = vmul.f32 %v3178, %v3562
    %v3627 = vmul.f32 %v3179, %v3563
    %v3628 = vmul.f32 %v3180, %v3564
    %v3629 = vmul.f32 %v3181, %v3565
    %v3630 = vmul.f32 %v3182, %v3566
    %v3631 = vmul.f32 %v3183, %v3567
    %v3632 = vmul.f32 %v3184, %v3568
    %v3633 = vmul.f32 %v3185, %v3569
    %v3634 = vmul.f32 %v3186, %v3570
    %v3635 = vmul.f32 %v3187, %v3571
    %v3636 = vmul.f32 %v3188, %v3572
    %v3637 = vmul.f32 %v3189, %v3573
    %v3638 = vmul.f32 %v3190, %v3574
    %v3639 = vmul.f32 %v3191, %v3575
    %v3640 = vmul.f32 %v3192, %v3576
    %v3641 = vmul.f32 %v3193, %v3577
    %v3642 = vmul.f32 %v3194, %v3578
    %v3643 = vmul.f32 %v3195, %v3579
    %v3644 = vmul.f32 %v3196, %v3580
    %v3645 = vmul.f32 %v3197, %v3581
    %v3646 = vmul.f32 %v3198, %v3582
    %v3647 = vmul.f32 %v3199, %v3583
    %v3648 = vmul.f32 %v3200, %v3584
    %v3649 = vmul.f32 %v3201, %v3585
    %v3650 = vmul.f32 %v3202, %v3586
    %v3651 = vmul.f32 %v3203, %v3587
    %v3652 = vmul.f32 %v3204, %v3588
    %v3653 = vmul.f32 %v3205, %v3589
    %v3654 = vmul.f32 %v3206, %v3590
    %v3655 = vmul.f32 %v3207, %v3591
    %v3656 = vmul.f32 %v3208, %v3592
    %v3657 = vmul.f32 %v3209, %v3593
    %v3658 = vmul.f32 %v3210, %v3594
    %v3659 = vmul.f32 %v3211, %v3595
    %v3660 = vmul.f32 %v3212, %v3596
    %v3661 = vmul.f32 %v3213, %v3597
    %v3662 = vmul.f32 %v3214, %v3598
    %v3663 = vmul.f32 %v3215, %v3599
    %v3664 = vmul.f32 %v3216, %v3600
    %v3665 = vmul.f32 %v3217, %v3601
    %v3666 = vmul.f32 %v3218, %v3602
    %v3667 = vmul.f32 %v3219, %v3603
    %v3668 = vmul.f32 %v3220, %v3604
    %v3669 = vmul.f32 %v3221, %v3605
    %v3670 = vmul.f32 %v3222, %v3606
    %v3671 = vmul.f32 %v3223, %v3607
    %v3673 = vlaneseq
    %v3674 = vshrl.u32 %v3673, 7
    %v3675 = vsub.s32 0, %v3674
    %v3676 = vrot.slane %v167, %v3675
    %v3678 = vmul.f32 %v3608, %v3676
    %v3679 = vmul.f32 %v3609, %v3676
    %v3680 = vmul.f32 %v3610, %v3676
    %v3681 = vmul.f32 %v3611, %v3676
    %v3682 = vmul.f32 %v3612, %v3676
    %v3683 = vmul.f32 %v3613, %v3676
    %v3684 = vmul.f32 %v3614, %v3676
    %v3685 = vmul.f32 %v3615, %v3676
    %v3686 = vmul.f32 %v3616, %v3676
    %v3687 = vmul.f32 %v3617, %v3676
    %v3688 = vmul.f32 %v3618, %v3676
    %v3689 = vmul.f32 %v3619, %v3676
    %v3690 = vmul.f32 %v3620, %v3676
    %v3691 = vmul.f32 %v3621, %v3676
    %v3692 = vmul.f32 %v3622, %v3676
    %v3693 = vmul.f32 %v3623, %v3676
    %v3694 = vmul.f32 %v3624, %v3676
    %v3695 = vmul.f32 %v3625, %v3676
    %v3696 = vmul.f32 %v3626, %v3676
    %v3697 = vmul.f32 %v3627, %v3676
    %v3698 = vmul.f32 %v3628, %v3676
    %v3699 = vmul.f32 %v3629, %v3676
    %v3700 = vmul.f32 %v3630, %v3676
    %v3701 = vmul.f32 %v3631, %v3676
    %v3702 = vmul.f32 %v3632, %v3676
    %v3703 = vmul.f32 %v3633, %v3676
    %v3704 = vmul.f32 %v3634, %v3676
    %v3705 = vmul.f32 %v3635, %v3676
    %v3706 = vmul.f32 %v3636, %v3676
    %v3707 = vmul.f32 %v3637, %v3676
    %v3708 = vmul.f32 %v3638, %v3676
    %v3709 = vmul.f32 %v3639, %v3676
    %v3710 = vmul.f32 %v3640, %v3676
    %v3711 = vmul.f32 %v3641, %v3676
    %v3712 = vmul.f32 %v3642, %v3676
    %v3713 = vmul.f32 %v3643, %v3676
    %v3714 = vmul.f32 %v3644, %v3676
    %v3715 = vmul.f32 %v3645, %v3676
    %v3716 = vmul.f32 %v3646, %v3676
    %v3717 = vmul.f32 %v3647, %v3676
    %v3718 = vmul.f32 %v3648, %v3676
    %v3719 = vmul.f32 %v3649, %v3676
    %v3720 = vmul.f32 %v3650, %v3676
    %v3721 = vmul.f32 %v3651, %v3676
    %v3722 = vmul.f32 %v3652, %v3676
    %v3723 = vmul.f32 %v3653, %v3676
    %v3724 = vmul.f32 %v3654, %v3676
    %v3725 = vmul.f32 %v3655, %v3676
    %v3726 = vmul.f32 %v3656, %v3676
    %v3727 = vmul.f32 %v3657, %v3676
    %v3728 = vmul.f32 %v3658, %v3676
    %v3729 = vmul.f32 %v3659, %v3676
    %v3730 = vmul.f32 %v3660, %v3676
    %v3731 = vmul.f32 %v3661, %v3676
    %v3732 = vmul.f32 %v3662, %v3676
    %v3733 = vmul.f32 %v3663, %v3676
    %v3734 = vmul.f32 %v3664, %v3676
    %v3735 = vmul.f32 %v3665, %v3676
    %v3736 = vmul.f32 %v3666, %v3676
    %v3737 = vmul.f32 %v3667, %v3676
    %v3738 = vmul.f32 %v3668, %v3676
    %v3739 = vmul.f32 %v3669, %v3676
    %v3740 = vmul.f32 %v3670, %v3676
    %v3741 = vmul.f32 %v3671, %v3676
    %v3743 = vlaneseq
    %v3744 = vshrl.u32 %v3743, 7
    %v3745 = vsub.s32 0, %v3744
    %v3746 = vrot.slane %v168, %v3745
    %v3748 = vadd.f32 %v3678, %v3746
    %v3749 = vadd.f32 %v3679, %v3746
    %v3750 = vadd.f32 %v3680, %v3746
    %v3751 = vadd.f32 %v3681, %v3746
    %v3752 = vadd.f32 %v3682, %v3746
    %v3753 = vadd.f32 %v3683, %v3746
    %v3754 = vadd.f32 %v3684, %v3746
    %v3755 = vadd.f32 %v3685, %v3746
    %v3756 = vadd.f32 %v3686, %v3746
    %v3757 = vadd.f32 %v3687, %v3746
    %v3758 = vadd.f32 %v3688, %v3746
    %v3759 = vadd.f32 %v3689, %v3746
    %v3760 = vadd.f32 %v3690, %v3746
    %v3761 = vadd.f32 %v3691, %v3746
    %v3762 = vadd.f32 %v3692, %v3746
    %v3763 = vadd.f32 %v3693, %v3746
    %v3764 = vadd.f32 %v3694, %v3746
    %v3765 = vadd.f32 %v3695, %v3746
    %v3766 = vadd.f32 %v3696, %v3746
    %v3767 = vadd.f32 %v3697, %v3746
    %v3768 = vadd.f32 %v3698, %v3746
    %v3769 = vadd.f32 %v3699, %v3746
    %v3770 = vadd.f32 %v3700, %v3746
    %v3771 = vadd.f32 %v3701, %v3746
    %v3772 = vadd.f32 %v3702, %v3746
    %v3773 = vadd.f32 %v3703, %v3746
    %v3774 = vadd.f32 %v3704, %v3746
    %v3775 = vadd.f32 %v3705, %v3746
    %v3776 = vadd.f32 %v3706, %v3746
    %v3777 = vadd.f32 %v3707, %v3746
    %v3778 = vadd.f32 %v3708, %v3746
    %v3779 = vadd.f32 %v3709, %v3746
    %v3780 = vadd.f32 %v3710, %v3746
    %v3781 = vadd.f32 %v3711, %v3746
    %v3782 = vadd.f32 %v3712, %v3746
    %v3783 = vadd.f32 %v3713, %v3746
    %v3784 = vadd.f32 %v3714, %v3746
    %v3785 = vadd.f32 %v3715, %v3746
    %v3786 = vadd.f32 %v3716, %v3746
    %v3787 = vadd.f32 %v3717, %v3746
    %v3788 = vadd.f32 %v3718, %v3746
    %v3789 = vadd.f32 %v3719, %v3746
    %v3790 = vadd.f32 %v3720, %v3746
    %v3791 = vadd.f32 %v3721, %v3746
    %v3792 = vadd.f32 %v3722, %v3746
    %v3793 = vadd.f32 %v3723, %v3746
    %v3794 = vadd.f32 %v3724, %v3746
    %v3795 = vadd.f32 %v3725, %v3746
    %v3796 = vadd.f32 %v3726, %v3746
    %v3797 = vadd.f32 %v3727, %v3746
    %v3798 = vadd.f32 %v3728, %v3746
    %v3799 = vadd.f32 %v3729, %v3746
    %v3800 = vadd.f32 %v3730, %v3746
    %v3801 = vadd.f32 %v3731, %v3746
    %v3802 = vadd.f32 %v3732, %v3746
    %v3803 = vadd.f32 %v3733, %v3746
    %v3804 = vadd.f32 %v3734, %v3746
    %v3805 = vadd.f32 %v3735, %v3746
    %v3806 = vadd.f32 %v3736, %v3746
    %v3807 = vadd.f32 %v3737, %v3746
    %v3808 = vadd.f32 %v3738, %v3746
    %v3809 = vadd.f32 %v3739, %v3746
    %v3810 = vadd.f32 %v3740, %v3746
    %v3811 = vadd.f32 %v3741, %v3746
    %v3812 = vmax.f32 %v3748, 0.0
    %v3813 = vmax.f32 %v3749, 0.0
    %v3814 = vmax.f32 %v3750, 0.0
    %v3815 = vmax.f32 %v3751, 0.0
    %v3816 = vmax.f32 %v3752, 0.0
    %v3817 = vmax.f32 %v3753, 0.0
    %v3818 = vmax.f32 %v3754, 0.0
    %v3819 = vmax.f32 %v3755, 0.0
    %v3820 = vmax.f32 %v3756, 0.0
    %v3821 = vmax.f32 %v3757, 0.0
    %v3822 = vmax.f32 %v3758, 0.0
    %v3823 = vmax.f32 %v3759, 0.0
    %v3824 = vmax.f32 %v3760, 0.0
    %v3825 = vmax.f32 %v3761, 0.0
    %v3826 = vmax.f32 %v3762, 0.0
    %v3827 = vmax.f32 %v3763, 0.0
    %v3828 = vmax.f32 %v3764, 0.0
    %v3829 = vmax.f32 %v3765, 0.0
    %v3830 = vmax.f32 %v3766, 0.0
    %v3831 = vmax.f32 %v3767, 0.0
    %v3832 = vmax.f32 %v3768, 0.0
    %v3833 = vmax.f32 %v3769, 0.0
    %v3834 = vmax.f32 %v3770, 0.0
    %v3835 = vmax.f32 %v3771, 0.0
    %v3836 = vmax.f32 %v3772, 0.0
    %v3837 = vmax.f32 %v3773, 0.0
    %v3838 = vmax.f32 %v3774, 0.0
    %v3839 = vmax.f32 %v3775, 0.0
    %v3840 = vmax.f32 %v3776, 0.0
    %v3841 = vmax.f32 %v3777, 0.0
    %v3842 = vmax.f32 %v3778, 0.0
    %v3843 = vmax.f32 %v3779, 0.0
    %v3844 = vmax.f32 %v3780, 0.0
    %v3845 = vmax.f32 %v3781, 0.0
    %v3846 = vmax.f32 %v3782, 0.0
    %v3847 = vmax.f32 %v3783, 0.0
    %v3848 = vmax.f32 %v3784, 0.0
    %v3849 = vmax.f32 %v3785, 0.0
    %v3850 = vmax.f32 %v3786, 0.0
    %v3851 = vmax.f32 %v3787, 0.0
    %v3852 = vmax.f32 %v3788, 0.0
    %v3853 = vmax.f32 %v3789, 0.0
    %v3854 = vmax.f32 %v3790, 0.0
    %v3855 = vmax.f32 %v3791, 0.0
    %v3856 = vmax.f32 %v3792, 0.0
    %v3857 = vmax.f32 %v3793, 0.0
    %v3858 = vmax.f32 %v3794, 0.0
    %v3859 = vmax.f32 %v3795, 0.0
    %v3860 = vmax.f32 %v3796, 0.0
    %v3861 = vmax.f32 %v3797, 0.0
    %v3862 = vmax.f32 %v3798, 0.0
    %v3863 = vmax.f32 %v3799, 0.0
    %v3864 = vmax.f32 %v3800, 0.0
    %v3865 = vmax.f32 %v3801, 0.0
    %v3866 = vmax.f32 %v3802, 0.0
    %v3867 = vmax.f32 %v3803, 0.0
    %v3868 = vmax.f32 %v3804, 0.0
    %v3869 = vmax.f32 %v3805, 0.0
    %v3870 = vmax.f32 %v3806, 0.0
    %v3871 = vmax.f32 %v3807, 0.0
    %v3872 = vmax.f32 %v3808, 0.0
    %v3873 = vmax.f32 %v3809, 0.0
    %v3874 = vmax.f32 %v3810, 0.0
    %v3875 = vmax.f32 %v3811, 0.0
    %v3876 = vpack.c.bf16 %v3813, %v3812
    %v3877 = vpack.c.bf16 %v3815, %v3814
    %v3878 = vpack.c.bf16 %v3817, %v3816
    %v3879 = vpack.c.bf16 %v3819, %v3818
    %v3880 = vpack.c.bf16 %v3821, %v3820
    %v3881 = vpack.c.bf16 %v3823, %v3822
    %v3882 = vpack.c.bf16 %v3825, %v3824
    %v3883 = vpack.c.bf16 %v3827, %v3826
    %v3884 = vpack.c.bf16 %v3829, %v3828
    %v3885 = vpack.c.bf16 %v3831, %v3830
    %v3886 = vpack.c.bf16 %v3833, %v3832
    %v3887 = vpack.c.bf16 %v3835, %v3834
    %v3888 = vpack.c.bf16 %v3837, %v3836
    %v3889 = vpack.c.bf16 %v3839, %v3838
    %v3890 = vpack.c.bf16 %v3841, %v3840
    %v3891 = vpack.c.bf16 %v3843, %v3842
    %v3892 = vpack.c.bf16 %v3845, %v3844
    %v3893 = vpack.c.bf16 %v3847, %v3846
    %v3894 = vpack.c.bf16 %v3849, %v3848
    %v3895 = vpack.c.bf16 %v3851, %v3850
    %v3896 = vpack.c.bf16 %v3853, %v3852
    %v3897 = vpack.c.bf16 %v3855, %v3854
    %v3898 = vpack.c.bf16 %v3857, %v3856
    %v3899 = vpack.c.bf16 %v3859, %v3858
    %v3900 = vpack.c.bf16 %v3861, %v3860
    %v3901 = vpack.c.bf16 %v3863, %v3862
    %v3902 = vpack.c.bf16 %v3865, %v3864
    %v3903 = vpack.c.bf16 %v3867, %v3866
    %v3904 = vpack.c.bf16 %v3869, %v3868
    %v3905 = vpack.c.bf16 %v3871, %v3870
    %v3906 = vpack.c.bf16 %v3873, %v3872
    %v3907 = vpack.c.bf16 %v3875, %v3874
    %v3940 = vunpack.c.l.b16 %v3876
    %v3941 = vunpack.c.h.b16 %v3876
    %v3942 = vunpack.c.l.b16 %v3877
    %v3943 = vunpack.c.h.b16 %v3877
    %v3944 = vunpack.c.l.b16 %v3878
    %v3945 = vunpack.c.h.b16 %v3878
    %v3946 = vunpack.c.l.b16 %v3879
    %v3947 = vunpack.c.h.b16 %v3879
    %v3948 = vunpack.c.l.b16 %v3880
    %v3949 = vunpack.c.h.b16 %v3880
    %v3950 = vunpack.c.l.b16 %v3881
    %v3951 = vunpack.c.h.b16 %v3881
    %v3952 = vunpack.c.l.b16 %v3882
    %v3953 = vunpack.c.h.b16 %v3882
    %v3954 = vunpack.c.l.b16 %v3883
    %v3955 = vunpack.c.h.b16 %v3883
    %v3956 = vunpack.c.l.b16 %v3884
    %v3957 = vunpack.c.h.b16 %v3884
    %v3958 = vunpack.c.l.b16 %v3885
    %v3959 = vunpack.c.h.b16 %v3885
    %v3960 = vunpack.c.l.b16 %v3886
    %v3961 = vunpack.c.h.b16 %v3886
    %v3962 = vunpack.c.l.b16 %v3887
    %v3963 = vunpack.c.h.b16 %v3887
    %v3964 = vunpack.c.l.b16 %v3888
    %v3965 = vunpack.c.h.b16 %v3888
    %v3966 = vunpack.c.l.b16 %v3889
    %v3967 = vunpack.c.h.b16 %v3889
    %v3968 = vunpack.c.l.b16 %v3890
    %v3969 = vunpack.c.h.b16 %v3890
    %v3970 = vunpack.c.l.b16 %v3891
    %v3971 = vunpack.c.h.b16 %v3891
    %v3972 = vunpack.c.l.b16 %v3892
    %v3973 = vunpack.c.h.b16 %v3892
    %v3974 = vunpack.c.l.b16 %v3893
    %v3975 = vunpack.c.h.b16 %v3893
    %v3976 = vunpack.c.l.b16 %v3894
    %v3977 = vunpack.c.h.b16 %v3894
    %v3978 = vunpack.c.l.b16 %v3895
    %v3979 = vunpack.c.h.b16 %v3895
    %v3980 = vunpack.c.l.b16 %v3896
    %v3981 = vunpack.c.h.b16 %v3896
    %v3982 = vunpack.c.l.b16 %v3897
    %v3983 = vunpack.c.h.b16 %v3897
    %v3984 = vunpack.c.l.b16 %v3898
    %v3985 = vunpack.c.h.b16 %v3898
    %v3986 = vunpack.c.l.b16 %v3899
    %v3987 = vunpack.c.h.b16 %v3899
    %v3988 = vunpack.c.l.b16 %v3900
    %v3989 = vunpack.c.h.b16 %v3900
    %v3990 = vunpack.c.l.b16 %v3901
    %v3991 = vunpack.c.h.b16 %v3901
    %v3992 = vunpack.c.l.b16 %v3902
    %v3993 = vunpack.c.h.b16 %v3902
    %v3994 = vunpack.c.l.b16 %v3903
    %v3995 = vunpack.c.h.b16 %v3903
    %v3996 = vunpack.c.l.b16 %v3904
    %v3997 = vunpack.c.h.b16 %v3904
    %v3998 = vunpack.c.l.b16 %v3905
    %v3999 = vunpack.c.h.b16 %v3905
    %v4000 = vunpack.c.l.b16 %v3906
    %v4001 = vunpack.c.h.b16 %v3906
    %v4002 = vunpack.c.l.b16 %v3907
    %v4003 = vunpack.c.h.b16 %v3907
    %v4004 = vpack.c.b16 %v3940, %v3940
    %v4005 = vpack.c.b16 %v3941, %v3941
    %v4006 = vpack.c.b16 %v3942, %v3942
    %v4007 = vpack.c.b16 %v3943, %v3943
    %v4008 = vpack.c.b16 %v3944, %v3944
    %v4009 = vpack.c.b16 %v3945, %v3945
    %v4010 = vpack.c.b16 %v3946, %v3946
    %v4011 = vpack.c.b16 %v3947, %v3947
    %v4012 = vpack.c.b16 %v3948, %v3948
    %v4013 = vpack.c.b16 %v3949, %v3949
    %v4014 = vpack.c.b16 %v3950, %v3950
    %v4015 = vpack.c.b16 %v3951, %v3951
    %v4016 = vpack.c.b16 %v3952, %v3952
    %v4017 = vpack.c.b16 %v3953, %v3953
    %v4018 = vpack.c.b16 %v3954, %v3954
    %v4019 = vpack.c.b16 %v3955, %v3955
    %v4020 = vpack.c.b16 %v3956, %v3956
    %v4021 = vpack.c.b16 %v3957, %v3957
    %v4022 = vpack.c.b16 %v3958, %v3958
    %v4023 = vpack.c.b16 %v3959, %v3959
    %v4024 = vpack.c.b16 %v3960, %v3960
    %v4025 = vpack.c.b16 %v3961, %v3961
    %v4026 = vpack.c.b16 %v3962, %v3962
    %v4027 = vpack.c.b16 %v3963, %v3963
    %v4028 = vpack.c.b16 %v3964, %v3964
    %v4029 = vpack.c.b16 %v3965, %v3965
    %v4030 = vpack.c.b16 %v3966, %v3966
    %v4031 = vpack.c.b16 %v3967, %v3967
    %v4032 = vpack.c.b16 %v3968, %v3968
    %v4033 = vpack.c.b16 %v3969, %v3969
    %v4034 = vpack.c.b16 %v3970, %v3970
    %v4035 = vpack.c.b16 %v3971, %v3971
    %v4036 = vpack.c.b16 %v3972, %v3972
    %v4037 = vpack.c.b16 %v3973, %v3973
    %v4038 = vpack.c.b16 %v3974, %v3974
    %v4039 = vpack.c.b16 %v3975, %v3975
    %v4040 = vpack.c.b16 %v3976, %v3976
    %v4041 = vpack.c.b16 %v3977, %v3977
    %v4042 = vpack.c.b16 %v3978, %v3978
    %v4043 = vpack.c.b16 %v3979, %v3979
    %v4044 = vpack.c.b16 %v3980, %v3980
    %v4045 = vpack.c.b16 %v3981, %v3981
    %v4046 = vpack.c.b16 %v3982, %v3982
    %v4047 = vpack.c.b16 %v3983, %v3983
    %v4048 = vpack.c.b16 %v3984, %v3984
    %v4049 = vpack.c.b16 %v3985, %v3985
    %v4050 = vpack.c.b16 %v3986, %v3986
    %v4051 = vpack.c.b16 %v3987, %v3987
    %v4052 = vpack.c.b16 %v3988, %v3988
    %v4053 = vpack.c.b16 %v3989, %v3989
    %v4054 = vpack.c.b16 %v3990, %v3990
    %v4055 = vpack.c.b16 %v3991, %v3991
    %v4056 = vpack.c.b16 %v3992, %v3992
    %v4057 = vpack.c.b16 %v3993, %v3993
    %v4058 = vpack.c.b16 %v3994, %v3994
    %v4059 = vpack.c.b16 %v3995, %v3995
    %v4060 = vpack.c.b16 %v3996, %v3996
    %v4061 = vpack.c.b16 %v3997, %v3997
    %v4062 = vpack.c.b16 %v3998, %v3998
    %v4063 = vpack.c.b16 %v3999, %v3999
    %v4064 = vpack.c.b16 %v4000, %v4000
    %v4065 = vpack.c.b16 %v4001, %v4001
    %v4066 = vpack.c.b16 %v4002, %v4002
    %v4067 = vpack.c.b16 %v4003, %v4003
    %4132 = vst [vmem:[#allocation8] sm:$0xf] %v4004
    %4133 = vst [vmem:[#allocation8 + $0x4] sm:$0xf] %v4005
    %4134 = vst [vmem:[#allocation8 + $0x8] sm:$0xf] %v4006
    %4135 = vst [vmem:[#allocation8 + $0xc] sm:$0xf] %v4007
    %4136 = vst [vmem:[#allocation8 + $0x10] sm:$0xf] %v4008
    %4137 = vst [vmem:[#allocation8 + $0x14] sm:$0xf] %v4009
    %4138 = vst [vmem:[#allocation8 + $0x18] sm:$0xf] %v4010
    %4139 = vst [vmem:[#allocation8 + $0x1c] sm:$0xf] %v4011
    %4140 = vst [vmem:[#allocation8 + $0x20] sm:$0xf] %v4012
    %4141 = vst [vmem:[#allocation8 + $0x24] sm:$0xf] %v4013
    %4142 = vst [vmem:[#allocation8 + $0x28] sm:$0xf] %v4014
    %4143 = vst [vmem:[#allocation8 + $0x2c] sm:$0xf] %v4015
    %4144 = vst [vmem:[#allocation8 + $0x30] sm:$0xf] %v4016
    %4145 = vst [vmem:[#allocation8 + $0x34] sm:$0xf] %v4017
    %4146 = vst [vmem:[#allocation8 + $0x38] sm:$0xf] %v4018
    %4147 = vst [vmem:[#allocation8 + $0x3c] sm:$0xf] %v4019
    %4148 = vst [vmem:[#allocation8 + $0x40] sm:$0xf] %v4020
    %4149 = vst [vmem:[#allocation8 + $0x44] sm:$0xf] %v4021
    %4150 = vst [vmem:[#allocation8 + $0x48] sm:$0xf] %v4022
    %4151 = vst [vmem:[#allocation8 + $0x4c] sm:$0xf] %v4023
    %4152 = vst [vmem:[#allocation8 + $0x50] sm:$0xf] %v4024
    %4153 = vst [vmem:[#allocation8 + $0x54] sm:$0xf] %v4025
    %4154 = vst [vmem:[#allocation8 + $0x58] sm:$0xf] %v4026
    %4155 = vst [vmem:[#allocation8 + $0x5c] sm:$0xf] %v4027
    %4156 = vst [vmem:[#allocation8 + $0x60] sm:$0xf] %v4028
    %4157 = vst [vmem:[#allocation8 + $0x64] sm:$0xf] %v4029
    %4158 = vst [vmem:[#allocation8 + $0x68] sm:$0xf] %v4030
    %4159 = vst [vmem:[#allocation8 + $0x6c] sm:$0xf] %v4031
    %4160 = vst [vmem:[#allocation8 + $0x70] sm:$0xf] %v4032
    %4161 = vst [vmem:[#allocation8 + $0x74] sm:$0xf] %v4033
    %4162 = vst [vmem:[#allocation8 + $0x78] sm:$0xf] %v4034
    %4163 = vst [vmem:[#allocation8 + $0x7c] sm:$0xf] %v4035
    %4164 = vst [vmem:[#allocation8 + $0x80] sm:$0xf] %v4036
    %4165 = vst [vmem:[#allocation8 + $0x84] sm:$0xf] %v4037
    %4166 = vst [vmem:[#allocation8 + $0x88] sm:$0xf] %v4038
    %4167 = vst [vmem:[#allocation8 + $0x8c] sm:$0xf] %v4039
    %4168 = vst [vmem:[#allocation8 + $0x90] sm:$0xf] %v4040
    %4169 = vst [vmem:[#allocation8 + $0x94] sm:$0xf] %v4041
    %4170 = vst [vmem:[#allocation8 + $0x98] sm:$0xf] %v4042
    %4171 = vst [vmem:[#allocation8 + $0x9c] sm:$0xf] %v4043
    %4172 = vst [vmem:[#allocation8 + $0xa0] sm:$0xf] %v4044
    %4173 = vst [vmem:[#allocation8 + $0xa4] sm:$0xf] %v4045
    %4174 = vst [vmem:[#allocation8 + $0xa8] sm:$0xf] %v4046
    %4175 = vst [vmem:[#allocation8 + $0xac] sm:$0xf] %v4047
    %4176 = vst [vmem:[#allocation8 + $0xb0] sm:$0xf] %v4048
    %4177 = vst [vmem:[#allocation8 + $0xb4] sm:$0xf] %v4049
    %4178 = vst [vmem:[#allocation8 + $0xb8] sm:$0xf] %v4050
    %4179 = vst [vmem:[#allocation8 + $0xbc] sm:$0xf] %v4051
    %4180 = vst [vmem:[#allocation8 + $0xc0] sm:$0xf] %v4052
    %4181 = vst [vmem:[#allocation8 + $0xc4] sm:$0xf] %v4053
    %4182 = vst [vmem:[#allocation8 + $0xc8] sm:$0xf] %v4054
    %4183 = vst [vmem:[#allocation8 + $0xcc] sm:$0xf] %v4055
    %4184 = vst [vmem:[#allocation8 + $0xd0] sm:$0xf] %v4056
    %4185 = vst [vmem:[#allocation8 + $0xd4] sm:$0xf] %v4057
    %4186 = vst [vmem:[#allocation8 + $0xd8] sm:$0xf] %v4058
    %4187 = vst [vmem:[#allocation8 + $0xdc] sm:$0xf] %v4059
    %4188 = vst [vmem:[#allocation8 + $0xe0] sm:$0xf] %v4060
    %4189 = vst [vmem:[#allocation8 + $0xe4] sm:$0xf] %v4061
    %4190 = vst [vmem:[#allocation8 + $0xe8] sm:$0xf] %v4062
    %4191 = vst [vmem:[#allocation8 + $0xec] sm:$0xf] %v4063
    %4192 = vst [vmem:[#allocation8 + $0xf0] sm:$0xf] %v4064
    %4193 = vst [vmem:[#allocation8 + $0xf4] sm:$0xf] %v4065
    %4194 = vst [vmem:[#allocation8 + $0xf8] sm:$0xf] %v4066
    %4195 = vst [vmem:[#allocation8 + $0xfc] sm:$0xf] %v4067
    // Predicated region
    $region42: #{tpu_custom_call.1} parent=1 // pred_check
      _
    $region43: #{tpu_custom_call.1} parent=1 // pred_check_branch
      %4197 = sbr.rel (0) target = $region45
    $region44: #{tpu_custom_call.1} parent=1 // pred_region
      %s4199 = ssub.s32 4096, 4096
      %4200 = vsyncadd [#allocation4], %s4199
      %s4201 = sshll.u32 [#allocation8], 4
      %s4202 = int_to_ptr.vmem [resolvable:$true] %s4201
      %4207 = dma.vmem_to_hbm [thread:$0]  %s4202, 4096, %s7, [#allocation4], 64, 64, 4
    $region45: #{tpu_custom_call.1} parent=1 // pred_fallthru
      _
    // Predicated region
    $region46: #{tpu_custom_call.1} parent=1 // pred_check
      _
    $region47: #{tpu_custom_call.1} parent=1 // pred_check_branch
      %4209 = sbr.rel (0) target = $region49
    $region48: #{tpu_custom_call.1} parent=1 // pred_region
      %4210 = dma.done [#allocation4], 4096
    $region49: #{tpu_custom_call.1} parent=1 // pred_fallthru
      _
    %4211 = vsyncpa [#allocation3], 1
    %4212 = vsyncpa [#allocation6], 1
    %4213 = vsyncpa [#allocation4], 1

</llo_original>
